<compile_context>
chip_gen: v5e
topology: v5e:2x2
jax: 0.10.0
libtpu: 0.0.40
codegen_flags: <defaults>
</compile_context>

<pallas_src>
import functools

import numpy as np
import jax
import jax.numpy as jnp
from jax import lax
from jax.experimental import pallas as pl
from jax.experimental.pallas import tpu as pltpu


# ----------------------------- Pallas kernel --------------------------------
def net_slstm_kernel(x_ref,
                     w_ih1_ref, w_hh1_ref, b1_ref, thr1_ref,
                     w_ih2t_ref, w_hh2_ref, b2_ref, thr2_ref,
                     gamma_ref, beta_ref,
                     fc_w_ref, fc_b_ref,
                     out_ref,
                     spk1_ref, xp1_ref, xp2_ref,
                     *, T, B, B_pad, H):
    f32 = jnp.float32
    bf16 = jnp.bfloat16

    thr1 = thr1_ref[0, 0]                         # scalar thresholds from SMEM
    thr2 = thr2_ref[0, 0]

    # Recurrent weights (bf16) stay resident for both loops.
    w_hh1 = w_hh1_ref[...]                        # (H, 4H) bf16
    w_hh2 = w_hh2_ref[...]                        # (H, 4H) bf16

    def heaviside(v):
        return (v > 0.0).astype(f32)

    def cell_step(xp_t, mem, syn, w_hh, thr):
        # xp_t already contains x_t @ W_ih + (b_ih + b_hh); only the recurrent
        # bf16 matmul (f32 accumulation) remains on the serial chain.
        reset = heaviside(mem - thr)              # from previous membrane
        gates = xp_t + jnp.dot(mem.astype(bf16), w_hh,
                               preferred_element_type=f32)          # (B_pad, 4H)
        ifo = jax.nn.sigmoid(gates[:, :3 * H])    # contiguous i, f, o block
        g = jnp.tanh(gates[:, 3 * H:])
        i = ifo[:, :H]
        f = ifo[:, H:2 * H]
        o = ifo[:, 2 * H:3 * H]
        c_new = f * syn + i * g
        h_new = o * jnp.tanh(c_new)
        mem_new = h_new - reset * thr             # subtract reset
        return mem_new, c_new                     # (mem, syn)

    zeros = jnp.zeros((B_pad, H), f32)

    # ---- hoisted layer-1 input projection: one (T*B_pad, C_in) @ (C_in, 4H) -
    xp1_ref[...] = (jnp.dot(x_ref[...], w_ih1_ref[...],
                            preferred_element_type=f32) + b1_ref[...])

    # ---- SLSTM layer 1 (statically unrolled); record spikes + running sum ---
    # Slices at multiples of B_pad=8 rows are sublane-tile-exact (free).
    mem = zeros
    syn = zeros
    spk_acc = zeros                               # running sum for BN mean
    for t in range(T):
        mem, syn = cell_step(xp1_ref[t * B_pad:(t + 1) * B_pad, :],
                             mem, syn, w_hh1, thr1)
        spk = heaviside(mem - thr1)
        spk1_ref[t * B_pad:(t + 1) * B_pad, :] = spk
        spk_acc = spk_acc + spk

    # ---- roughTemporalAccumulatedBN (training-mode, biased batch stats) -----
    # Spikes are {0,1}, so E[s^2] == E[s] and var == mean - mean^2 exactly.
    # Padded batch rows are excluded from the statistics via a row mask.
    row_mask = (lax.broadcasted_iota(jnp.int32, (B_pad, 1), 0) < B).astype(f32)
    inv_n = 1.0 / float(T * B)
    mean = jnp.sum(spk_acc * row_mask, axis=0, keepdims=True) * inv_n   # (1, H)
    var = mean - mean * mean
    scale = gamma_ref[...] * lax.rsqrt(var + 1e-5)                      # (1, H)
    shift = beta_ref[...] - mean * scale                                # (1, H)

    # ---- BN folded into layer-2 projection (no spk_norm materialization) ---
    # spk_norm @ W = spk @ (scale-rows * W) + shift @ W; with W stored
    # transposed (4H, H) the row scaling is a lane-broadcast multiply.
    w_ih2t = w_ih2t_ref[...]                                            # (4H, H)
    w2t_eff = w_ih2t * scale                                            # (4H, H)
    nt = (((1,), (1,)), ((), ()))                                       # NT dot
    b2_eff = (lax.dot_general(shift, w_ih2t, nt,
                              preferred_element_type=f32) + b2_ref[...])  # (1,4H)
    xp2_ref[...] = (lax.dot_general(spk1_ref[...], w2t_eff, nt,
                                    preferred_element_type=f32) + b2_eff)

    # ---- SLSTM layer 2 (statically unrolled); accumulate membrane ----------
    mem = zeros
    syn = zeros
    acc = zeros
    for t in range(T):
        mem, syn = cell_step(xp2_ref[t * B_pad:(t + 1) * B_pad, :],
                             mem, syn, w_hh2, thr2)
        acc = acc + mem

    final_mem = acc * (1.0 / T)                   # mean over time (1/T folded)
    out_ref[...] = (jnp.dot(final_mem, fc_w_ref[...],
                            preferred_element_type=f32) + fc_b_ref[...])


# ------------------------------- Wrapper -------------------------------------
def net_slstm_forward(x, p):
    T, B, C_in = x.shape
    H = p["w_hh1"].shape[0]
    C = p["fc_w"].shape[1]
    B_pad = max(8, ((B + 7) // 8) * 8)            # f32 sublane multiple

    # Zero-pad the batch so every per-step (B_pad, ·) window is tile-aligned;
    # padded rows are masked out of BN stats in-kernel and sliced off below.
    x_pad = jnp.zeros((T, B_pad, C_in), jnp.float32).at[:, :B, :].set(x)
    x_flat = x_pad.reshape(T * B_pad, C_in).astype(jnp.bfloat16)

    vmem = pl.BlockSpec(memory_space=pltpu.MemorySpace.VMEM)
    smem = pl.BlockSpec(memory_space=pltpu.MemorySpace.SMEM)

    kernel = functools.partial(net_slstm_kernel, T=T, B=B, B_pad=B_pad, H=H)
    out = pl.pallas_call(
        kernel,
        out_shape=jax.ShapeDtypeStruct((B_pad, C), jnp.float32),
        in_specs=[vmem,                                   # x (T*B_pad, C_in) bf16
                  vmem, vmem, vmem, smem,                 # w_ih1, w_hh1, b1, thr1
                  vmem, vmem, vmem, smem,                 # w_ih2^T, w_hh2, b2, thr2
                  vmem, vmem,                             # gamma, beta
                  vmem, vmem],                            # fc_w, fc_b
        out_specs=vmem,
        scratch_shapes=[pltpu.VMEM((T * B_pad, H), jnp.float32),       # spikes
                        pltpu.VMEM((T * B_pad, 4 * H), jnp.float32),   # xp1
                        pltpu.VMEM((T * B_pad, 4 * H), jnp.float32)],  # xp2
    )(x_flat,
      p["w_ih1"].astype(jnp.bfloat16), p["w_hh1"].astype(jnp.bfloat16),
      p["b1"], p["thr1"],
      jnp.transpose(p["w_ih2"]), p["w_hh2"].astype(jnp.bfloat16),
      p["b2"], p["thr2"],
      p["gamma"], p["beta"],
      p["fc_w"], p["fc_b"])
    return out[:B]


# ----------------------- Deterministic parameter init ------------------------
def init_params(key, input_size, hidden, num_classes):
    ks = jax.random.split(key, 10)
    bnd = 1.0 / np.sqrt(hidden)

    def u(k, shape, b):
        return jax.random.uniform(k, shape, jnp.float32, -b, b)

    # Fused LSTMCell weights, gates stacked along the last dim in (i, f, o, g)
    # order; bias = b_ih + b_hh folded (identical math to nn.LSTMCell).
    w_ih1 = u(ks[0], (input_size, 4 * hidden), bnd)
    w_hh1 = u(ks[1], (hidden, 4 * hidden), bnd)
    b1 = u(ks[2], (1, 4 * hidden), bnd) + u(ks[3], (1, 4 * hidden), bnd)
    w_ih2 = u(ks[4], (hidden, 4 * hidden), bnd)
    w_hh2 = u(ks[5], (hidden, 4 * hidden), bnd)
    b2 = u(ks[6], (1, 4 * hidden), bnd) + u(ks[7], (1, 4 * hidden), bnd)
    # Learnable scalar thresholds (snntorch default 1.0); 0.25 here so the
    # spiking / subtract-reset path is actually exercised at toy scales.
    thr1 = jnp.full((1, 1), 0.25, jnp.float32)
    thr2 = jnp.full((1, 1), 0.25, jnp.float32)
    # BatchNorm1d affine params (PyTorch default: weight=1, bias=0).
    gamma = jnp.ones((1, hidden), jnp.float32)
    beta = jnp.zeros((1, hidden), jnp.float32)
    # Linear(hidden, num_classes), stored pre-transposed as (H, C).
    fc_w = u(ks[8], (hidden, num_classes), bnd)
    fc_b = u(ks[9], (1, num_classes), bnd)
    return dict(w_ih1=w_ih1, w_hh1=w_hh1, b1=b1, thr1=thr1,
                w_ih2=w_ih2, w_hh2=w_hh2, b2=b2, thr2=thr2,
                gamma=gamma, beta=beta, fc_w=fc_w, fc_b=fc_b)


# ------------------------- Pure-JAX reference (check) ------------------------
# Mirrors the kernel's declared precision: bf16 operands / f32 accumulation on
# the matmuls that the kernel runs in bf16 (x@W_ih1, mem@W_hh1, mem@W_hh2);
# layer-2 input projection and all elementwise math in f32.
def reference_forward(x, p):
    T, B, _ = x.shape
    H = p["w_hh1"].shape[0]
    f32, bf16 = jnp.float32, jnp.bfloat16

    def hv(v):
        return (v > 0.0).astype(f32)

    def slstm_layer(inp, wih, whh, b, thr, cast_input):
        syn = mem = jnp.zeros((B, H), f32)
        spks, mems = [], []
        for t in range(T):
            xt = inp[t].astype(bf16) if cast_input else inp[t]
            reset = hv(mem - thr)
            gates = (jnp.dot(xt, wih, preferred_element_type=f32)
                     + jnp.dot(mem.astype(bf16), whh, preferred_element_type=f32)
                     + b)
            i = jax.nn.sigmoid(gates[:, :H])
            f = jax.nn.sigmoid(gates[:, H:2 * H])
            o = jax.nn.sigmoid(gates[:, 2 * H:3 * H])
            g = jnp.tanh(gates[:, 3 * H:])
            c = f * syn + i * g
            h = o * jnp.tanh(c)
            syn = c
            mem = h - reset * thr
            spks.append(hv(mem - thr))
            mems.append(mem)
        return jnp.stack(spks), jnp.stack(mems)

    thr1 = p["thr1"][0, 0]
    thr2 = p["thr2"][0, 0]
    spk1, _ = slstm_layer(x, p["w_ih1"].astype(bf16), p["w_hh1"].astype(bf16),
                          p["b1"], thr1, cast_input=True)              # (T, B, H)
    flat = spk1.reshape(T * B, H)
    mean = flat.mean(0)
    var = ((flat - mean) ** 2).mean(0)                                 # biased
    norm = (spk1 - mean) / jnp.sqrt(var + 1e-5) * p["gamma"][0] + p["beta"][0]
    _, mem2 = slstm_layer(norm, p["w_ih2"], p["w_hh2"].astype(bf16),
                          p["b2"], thr2, cast_input=False)
    final_mem = mem2.mean(0)
    return final_mem @ p["fc_w"] + p["fc_b"]


if __name__ == "__main__":
    # Small shapes consistent with the module: time-major sequence, 14 input
    # channels, module-default hidden size 128 (4H = 512 keeps all gate slices
    # lane-aligned), 8 classes.
    T, B, C_IN, HIDDEN, N_CLASSES = 8, 2, 14, 128, 8

    key = jax.random.PRNGKey(0)
    pkey, xkey = jax.random.split(key)
    params = init_params(pkey, C_IN, HIDDEN, N_CLASSES)
    x = 2.0 * jax.random.normal(xkey, (T, B, C_IN), jnp.float32)

    out = net_slstm_forward(x, params)
    out = jax.block_until_ready(out)
    assert out.shape == (B, N_CLASSES)

    ref = reference_forward(x, params)
    np.testing.assert_allclose(np.asarray(out), np.asarray(ref),
                               rtol=1e-2, atol=1e-2)
    print("KERNEL_OK")
</pallas_src>

<mosaic_0001>
module attributes {stable_mosaic.version = 11 : i64} {
  func.func @net_slstm_kernel(%arg0: memref<64x14xbf16, #tpu.memory_space<vmem>>, %arg1: memref<14x512xbf16, #tpu.memory_space<vmem>>, %arg2: memref<128x512xbf16, #tpu.memory_space<vmem>>, %arg3: memref<1x512xf32, #tpu.memory_space<vmem>>, %arg4: memref<1x1xf32, #tpu.memory_space<smem>>, %arg5: memref<512x128xf32, #tpu.memory_space<vmem>>, %arg6: memref<128x512xbf16, #tpu.memory_space<vmem>>, %arg7: memref<1x512xf32, #tpu.memory_space<vmem>>, %arg8: memref<1x1xf32, #tpu.memory_space<smem>>, %arg9: memref<1x128xf32, #tpu.memory_space<vmem>>, %arg10: memref<1x128xf32, #tpu.memory_space<vmem>>, %arg11: memref<128x8xf32, #tpu.memory_space<vmem>>, %arg12: memref<1x8xf32, #tpu.memory_space<vmem>>, %arg13: memref<8x8xf32, #tpu.memory_space<vmem>>, %arg14: memref<64x128xf32, #tpu.memory_space<vmem>>, %arg15: memref<64x512xf32, #tpu.memory_space<vmem>>, %arg16: memref<64x512xf32, #tpu.memory_space<vmem>>) attributes {dimension_semantics = [], scalar_prefetch = 0 : i64, scratch_operands = 3 : i64, tpu.core_type = #tpu.core_type<tc>} {
    %c0 = arith.constant 0 : index
    %c0_0 = arith.constant 0 : index
    %0 = memref.load %arg4[%c0, %c0_0] : memref<1x1xf32, #tpu.memory_space<smem>>
    %c0_1 = arith.constant 0 : index
    %c0_2 = arith.constant 0 : index
    %1 = memref.load %arg8[%c0_1, %c0_2] : memref<1x1xf32, #tpu.memory_space<smem>>
    %c0_3 = arith.constant 0 : index
    %c0_4 = arith.constant 0 : index
    %2 = vector.load %arg2[%c0_3, %c0_4] : memref<128x512xbf16, #tpu.memory_space<vmem>>, vector<128x512xbf16>
    %c0_5 = arith.constant 0 : index
    %c0_6 = arith.constant 0 : index
    %3 = vector.load %arg6[%c0_5, %c0_6] : memref<128x512xbf16, #tpu.memory_space<vmem>>, vector<128x512xbf16>
    %cst = arith.constant 0.000000e+00 : f32
    %4 = vector.broadcast %cst : f32 to vector<8x128xf32>
    %c0_7 = arith.constant 0 : index
    %c0_8 = arith.constant 0 : index
    %5 = vector.load %arg0[%c0_7, %c0_8] : memref<64x14xbf16, #tpu.memory_space<vmem>>, vector<64x14xbf16>
    %c0_9 = arith.constant 0 : index
    %c0_10 = arith.constant 0 : index
    %6 = vector.load %arg1[%c0_9, %c0_10] : memref<14x512xbf16, #tpu.memory_space<vmem>>, vector<14x512xbf16>
    %cst_11 = arith.constant dense<0.000000e+00> : vector<64x512xf32>
    %7 = tpu.matmul %5, %6, %cst_11 {dimension_numbers = #tpu.dot_dimension_numbers<[1], [0], [0], [1], [0, 0, 1, 1], [], []>} : vector<64x14xbf16>, vector<14x512xbf16>, vector<64x512xf32> -> vector<64x512xf32>
    %c0_12 = arith.constant 0 : index
    %c0_13 = arith.constant 0 : index
    %8 = vector.load %arg3[%c0_12, %c0_13] : memref<1x512xf32, #tpu.memory_space<vmem>>, vector<1x512xf32>
    %9 = vector.broadcast %8 : vector<1x512xf32> to vector<64x512xf32>
    %10 = arith.addf %7, %9 : vector<64x512xf32>
    %c0_14 = arith.constant 0 : index
    %c0_15 = arith.constant 0 : index
    %11 = vector.load %arg15[%c0_14, %c0_15] : memref<64x512xf32, #tpu.memory_space<vmem>>, vector<64x512xf32>
    tpu.vector_store %arg15[%c0_14, %c0_15], %10 {strides = array<i32>} : memref<64x512xf32, #tpu.memory_space<vmem>>, vector<64x512xf32>,
    %c0_16 = arith.constant 0 : index
    %c0_17 = arith.constant 0 : index
    %12 = vector.load %arg15[%c0_16, %c0_17] : memref<64x512xf32, #tpu.memory_space<vmem>>, vector<8x512xf32>
    %13 = vector.broadcast %0 : f32 to vector<8x128xf32>
    %14 = arith.subf %4, %13 : vector<8x128xf32>
    %cst_18 = arith.constant 0.000000e+00 : f32
    %15 = vector.broadcast %cst_18 : f32 to vector<8x128xf32>
    %16 = arith.cmpf ogt, %14, %15 : vector<8x128xf32>
    %17 = arith.extui %16 : vector<8x128xi1> to vector<8x128xi32>
    %18 = arith.sitofp %17 : vector<8x128xi32> to vector<8x128xf32>
    %19 = arith.truncf %4 : vector<8x128xf32> to vector<8x128xbf16>
    %cst_19 = arith.constant dense<0.000000e+00> : vector<8x512xf32>
    %20 = tpu.matmul %19, %2, %cst_19 {dimension_numbers = #tpu.dot_dimension_numbers<[1], [0], [0], [1], [0, 0, 1, 1], [], []>} : vector<8x128xbf16>, vector<128x512xbf16>, vector<8x512xf32> -> vector<8x512xf32>
    %21 = arith.addf %12, %20 : vector<8x512xf32>
    %22 = vector.extract_strided_slice %21 {offsets = [0, 0], sizes = [8, 384], strides = [1, 1]} : vector<8x512xf32> to vector<8x384xf32>
    %23 = arith.negf %22 : vector<8x384xf32>
    %24 = math.exp %23 : vector<8x384xf32>
    %cst_20 = arith.constant 1.000000e+00 : f32
    %25 = vector.broadcast %cst_20 : f32 to vector<8x384xf32>
    %26 = arith.addf %25, %24 : vector<8x384xf32>
    %27 = arith.divf %25, %26 : vector<8x384xf32>
    %28 = vector.extract_strided_slice %21 {offsets = [0, 384], sizes = [8, 128], strides = [1, 1]} : vector<8x512xf32> to vector<8x128xf32>
    %29 = math.tanh %28 : vector<8x128xf32>
    %30 = vector.extract_strided_slice %27 {offsets = [0, 0], sizes = [8, 128], strides = [1, 1]} : vector<8x384xf32> to vector<8x128xf32>
    %31 = vector.extract_strided_slice %27 {offsets = [0, 128], sizes = [8, 128], strides = [1, 1]} : vector<8x384xf32> to vector<8x128xf32>
    %32 = vector.extract_strided_slice %27 {offsets = [0, 256], sizes = [8, 128], strides = [1, 1]} : vector<8x384xf32> to vector<8x128xf32>
    %33 = arith.mulf %31, %4 : vector<8x128xf32>
    %34 = arith.mulf %30, %29 : vector<8x128xf32>
    %35 = arith.addf %33, %34 : vector<8x128xf32>
    %36 = math.tanh %35 : vector<8x128xf32>
    %37 = arith.mulf %32, %36 : vector<8x128xf32>
    %38 = vector.broadcast %0 : f32 to vector<8x128xf32>
    %39 = arith.mulf %18, %38 : vector<8x128xf32>
    %40 = arith.subf %37, %39 : vector<8x128xf32>
    %41 = vector.broadcast %0 : f32 to vector<8x128xf32>
    %42 = arith.subf %40, %41 : vector<8x128xf32>
    %cst_21 = arith.constant 0.000000e+00 : f32
    %43 = vector.broadcast %cst_21 : f32 to vector<8x128xf32>
    %44 = arith.cmpf ogt, %42, %43 : vector<8x128xf32>
    %45 = arith.extui %44 : vector<8x128xi1> to vector<8x128xi32>
    %46 = arith.sitofp %45 : vector<8x128xi32> to vector<8x128xf32>
    %c0_22 = arith.constant 0 : index
    %c0_23 = arith.constant 0 : index
    %47 = vector.load %arg14[%c0_22, %c0_23] : memref<64x128xf32, #tpu.memory_space<vmem>>, vector<8x128xf32>
    tpu.vector_store %arg14[%c0_22, %c0_23], %46 {strides = array<i32>} : memref<64x128xf32, #tpu.memory_space<vmem>>, vector<8x128xf32>,
    %48 = arith.addf %4, %46 : vector<8x128xf32>
    %c8 = arith.constant 8 : index
    %c0_24 = arith.constant 0 : index
    %49 = vector.load %arg15[%c8, %c0_24] : memref<64x512xf32, #tpu.memory_space<vmem>>, vector<8x512xf32>
    %50 = vector.broadcast %0 : f32 to vector<8x128xf32>
    %51 = arith.subf %40, %50 : vector<8x128xf32>
    %cst_25 = arith.constant 0.000000e+00 : f32
    %52 = vector.broadcast %cst_25 : f32 to vector<8x128xf32>
    %53 = arith.cmpf ogt, %51, %52 : vector<8x128xf32>
    %54 = arith.extui %53 : vector<8x128xi1> to vector<8x128xi32>
    %55 = arith.sitofp %54 : vector<8x128xi32> to vector<8x128xf32>
    %56 = arith.truncf %40 : vector<8x128xf32> to vector<8x128xbf16>
    %cst_26 = arith.constant dense<0.000000e+00> : vector<8x512xf32>
    %57 = tpu.matmul %56, %2, %cst_26 {dimension_numbers = #tpu.dot_dimension_numbers<[1], [0], [0], [1], [0, 0, 1, 1], [], []>} : vector<8x128xbf16>, vector<128x512xbf16>, vector<8x512xf32> -> vector<8x512xf32>
    %58 = arith.addf %49, %57 : vector<8x512xf32>
    %59 = vector.extract_strided_slice %58 {offsets = [0, 0], sizes = [8, 384], strides = [1, 1]} : vector<8x512xf32> to vector<8x384xf32>
    %60 = arith.negf %59 : vector<8x384xf32>
    %61 = math.exp %60 : vector<8x384xf32>
    %cst_27 = arith.constant 1.000000e+00 : f32
    %62 = vector.broadcast %cst_27 : f32 to vector<8x384xf32>
    %63 = arith.addf %62, %61 : vector<8x384xf32>
    %64 = arith.divf %62, %63 : vector<8x384xf32>
    %65 = vector.extract_strided_slice %58 {offsets = [0, 384], sizes = [8, 128], strides = [1, 1]} : vector<8x512xf32> to vector<8x128xf32>
    %66 = math.tanh %65 : vector<8x128xf32>
    %67 = vector.extract_strided_slice %64 {offsets = [0, 0], sizes = [8, 128], strides = [1, 1]} : vector<8x384xf32> to vector<8x128xf32>
    %68 = vector.extract_strided_slice %64 {offsets = [0, 128], sizes = [8, 128], strides = [1, 1]} : vector<8x384xf32> to vector<8x128xf32>
    %69 = vector.extract_strided_slice %64 {offsets = [0, 256], sizes = [8, 128], strides = [1, 1]} : vector<8x384xf32> to vector<8x128xf32>
    %70 = arith.mulf %68, %35 : vector<8x128xf32>
    %71 = arith.mulf %67, %66 : vector<8x128xf32>
    %72 = arith.addf %70, %71 : vector<8x128xf32>
    %73 = math.tanh %72 : vector<8x128xf32>
    %74 = arith.mulf %69, %73 : vector<8x128xf32>
    %75 = vector.broadcast %0 : f32 to vector<8x128xf32>
    %76 = arith.mulf %55, %75 : vector<8x128xf32>
    %77 = arith.subf %74, %76 : vector<8x128xf32>
    %78 = vector.broadcast %0 : f32 to vector<8x128xf32>
    %79 = arith.subf %77, %78 : vector<8x128xf32>
    %cst_28 = arith.constant 0.000000e+00 : f32
    %80 = vector.broadcast %cst_28 : f32 to vector<8x128xf32>
    %81 = arith.cmpf ogt, %79, %80 : vector<8x128xf32>
    %82 = arith.extui %81 : vector<8x128xi1> to vector<8x128xi32>
    %83 = arith.sitofp %82 : vector<8x128xi32> to vector<8x128xf32>
    %c8_29 = arith.constant 8 : index
    %c0_30 = arith.constant 0 : index
    %84 = vector.load %arg14[%c8_29, %c0_30] : memref<64x128xf32, #tpu.memory_space<vmem>>, vector<8x128xf32>
    tpu.vector_store %arg14[%c8_29, %c0_30], %83 {strides = array<i32>} : memref<64x128xf32, #tpu.memory_space<vmem>>, vector<8x128xf32>,
    %85 = arith.addf %48, %83 : vector<8x128xf32>
    %c16 = arith.constant 16 : index
    %c0_31 = arith.constant 0 : index
    %86 = vector.load %arg15[%c16, %c0_31] : memref<64x512xf32, #tpu.memory_space<vmem>>, vector<8x512xf32>
    %87 = vector.broadcast %0 : f32 to vector<8x128xf32>
    %88 = arith.subf %77, %87 : vector<8x128xf32>
    %cst_32 = arith.constant 0.000000e+00 : f32
    %89 = vector.broadcast %cst_32 : f32 to vector<8x128xf32>
    %90 = arith.cmpf ogt, %88, %89 : vector<8x128xf32>
    %91 = arith.extui %90 : vector<8x128xi1> to vector<8x128xi32>
    %92 = arith.sitofp %91 : vector<8x128xi32> to vector<8x128xf32>
    %93 = arith.truncf %77 : vector<8x128xf32> to vector<8x128xbf16>
    %cst_33 = arith.constant dense<0.000000e+00> : vector<8x512xf32>
    %94 = tpu.matmul %93, %2, %cst_33 {dimension_numbers = #tpu.dot_dimension_numbers<[1], [0], [0], [1], [0, 0, 1, 1], [], []>} : vector<8x128xbf16>, vector<128x512xbf16>, vector<8x512xf32> -> vector<8x512xf32>
    %95 = arith.addf %86, %94 : vector<8x512xf32>
    %96 = vector.extract_strided_slice %95 {offsets = [0, 0], sizes = [8, 384], strides = [1, 1]} : vector<8x512xf32> to vector<8x384xf32>
    %97 = arith.negf %96 : vector<8x384xf32>
    %98 = math.exp %97 : vector<8x384xf32>
    %cst_34 = arith.constant 1.000000e+00 : f32
    %99 = vector.broadcast %cst_34 : f32 to vector<8x384xf32>
    %100 = arith.addf %99, %98 : vector<8x384xf32>
    %101 = arith.divf %99, %100 : vector<8x384xf32>
    %102 = vector.extract_strided_slice %95 {offsets = [0, 384], sizes = [8, 128], strides = [1, 1]} : vector<8x512xf32> to vector<8x128xf32>
    %103 = math.tanh %102 : vector<8x128xf32>
    %104 = vector.extract_strided_slice %101 {offsets = [0, 0], sizes = [8, 128], strides = [1, 1]} : vector<8x384xf32> to vector<8x128xf32>
    %105 = vector.extract_strided_slice %101 {offsets = [0, 128], sizes = [8, 128], strides = [1, 1]} : vector<8x384xf32> to vector<8x128xf32>
    %106 = vector.extract_strided_slice %101 {offsets = [0, 256], sizes = [8, 128], strides = [1, 1]} : vector<8x384xf32> to vector<8x128xf32>
    %107 = arith.mulf %105, %72 : vector<8x128xf32>
    %108 = arith.mulf %104, %103 : vector<8x128xf32>
    %109 = arith.addf %107, %108 : vector<8x128xf32>
    %110 = math.tanh %109 : vector<8x128xf32>
    %111 = arith.mulf %106, %110 : vector<8x128xf32>
    %112 = vector.broadcast %0 : f32 to vector<8x128xf32>
    %113 = arith.mulf %92, %112 : vector<8x128xf32>
    %114 = arith.subf %111, %113 : vector<8x128xf32>
    %115 = vector.broadcast %0 : f32 to vector<8x128xf32>
    %116 = arith.subf %114, %115 : vector<8x128xf32>
    %cst_35 = arith.constant 0.000000e+00 : f32
    %117 = vector.broadcast %cst_35 : f32 to vector<8x128xf32>
    %118 = arith.cmpf ogt, %116, %117 : vector<8x128xf32>
    %119 = arith.extui %118 : vector<8x128xi1> to vector<8x128xi32>
    %120 = arith.sitofp %119 : vector<8x128xi32> to vector<8x128xf32>
    %c16_36 = arith.constant 16 : index
    %c0_37 = arith.constant 0 : index
    %121 = vector.load %arg14[%c16_36, %c0_37] : memref<64x128xf32, #tpu.memory_space<vmem>>, vector<8x128xf32>
    tpu.vector_store %arg14[%c16_36, %c0_37], %120 {strides = array<i32>} : memref<64x128xf32, #tpu.memory_space<vmem>>, vector<8x128xf32>,
    %122 = arith.addf %85, %120 : vector<8x128xf32>
    %c24 = arith.constant 24 : index
    %c0_38 = arith.constant 0 : index
    %123 = vector.load %arg15[%c24, %c0_38] : memref<64x512xf32, #tpu.memory_space<vmem>>, vector<8x512xf32>
    %124 = vector.broadcast %0 : f32 to vector<8x128xf32>
    %125 = arith.subf %114, %124 : vector<8x128xf32>
    %cst_39 = arith.constant 0.000000e+00 : f32
    %126 = vector.broadcast %cst_39 : f32 to vector<8x128xf32>
    %127 = arith.cmpf ogt, %125, %126 : vector<8x128xf32>
    %128 = arith.extui %127 : vector<8x128xi1> to vector<8x128xi32>
    %129 = arith.sitofp %128 : vector<8x128xi32> to vector<8x128xf32>
    %130 = arith.truncf %114 : vector<8x128xf32> to vector<8x128xbf16>
    %cst_40 = arith.constant dense<0.000000e+00> : vector<8x512xf32>
    %131 = tpu.matmul %130, %2, %cst_40 {dimension_numbers = #tpu.dot_dimension_numbers<[1], [0], [0], [1], [0, 0, 1, 1], [], []>} : vector<8x128xbf16>, vector<128x512xbf16>, vector<8x512xf32> -> vector<8x512xf32>
    %132 = arith.addf %123, %131 : vector<8x512xf32>
    %133 = vector.extract_strided_slice %132 {offsets = [0, 0], sizes = [8, 384], strides = [1, 1]} : vector<8x512xf32> to vector<8x384xf32>
    %134 = arith.negf %133 : vector<8x384xf32>
    %135 = math.exp %134 : vector<8x384xf32>
    %cst_41 = arith.constant 1.000000e+00 : f32
    %136 = vector.broadcast %cst_41 : f32 to vector<8x384xf32>
    %137 = arith.addf %136, %135 : vector<8x384xf32>
    %138 = arith.divf %136, %137 : vector<8x384xf32>
    %139 = vector.extract_strided_slice %132 {offsets = [0, 384], sizes = [8, 128], strides = [1, 1]} : vector<8x512xf32> to vector<8x128xf32>
    %140 = math.tanh %139 : vector<8x128xf32>
    %141 = vector.extract_strided_slice %138 {offsets = [0, 0], sizes = [8, 128], strides = [1, 1]} : vector<8x384xf32> to vector<8x128xf32>
    %142 = vector.extract_strided_slice %138 {offsets = [0, 128], sizes = [8, 128], strides = [1, 1]} : vector<8x384xf32> to vector<8x128xf32>
    %143 = vector.extract_strided_slice %138 {offsets = [0, 256], sizes = [8, 128], strides = [1, 1]} : vector<8x384xf32> to vector<8x128xf32>
    %144 = arith.mulf %142, %109 : vector<8x128xf32>
    %145 = arith.mulf %141, %140 : vector<8x128xf32>
    %146 = arith.addf %144, %145 : vector<8x128xf32>
    %147 = math.tanh %146 : vector<8x128xf32>
    %148 = arith.mulf %143, %147 : vector<8x128xf32>
    %149 = vector.broadcast %0 : f32 to vector<8x128xf32>
    %150 = arith.mulf %129, %149 : vector<8x128xf32>
    %151 = arith.subf %148, %150 : vector<8x128xf32>
    %152 = vector.broadcast %0 : f32 to vector<8x128xf32>
    %153 = arith.subf %151, %152 : vector<8x128xf32>
    %cst_42 = arith.constant 0.000000e+00 : f32
    %154 = vector.broadcast %cst_42 : f32 to vector<8x128xf32>
    %155 = arith.cmpf ogt, %153, %154 : vector<8x128xf32>
    %156 = arith.extui %155 : vector<8x128xi1> to vector<8x128xi32>
    %157 = arith.sitofp %156 : vector<8x128xi32> to vector<8x128xf32>
    %c24_43 = arith.constant 24 : index
    %c0_44 = arith.constant 0 : index
    %158 = vector.load %arg14[%c24_43, %c0_44] : memref<64x128xf32, #tpu.memory_space<vmem>>, vector<8x128xf32>
    tpu.vector_store %arg14[%c24_43, %c0_44], %157 {strides = array<i32>} : memref<64x128xf32, #tpu.memory_space<vmem>>, vector<8x128xf32>,
    %159 = arith.addf %122, %157 : vector<8x128xf32>
    %c32 = arith.constant 32 : index
    %c0_45 = arith.constant 0 : index
    %160 = vector.load %arg15[%c32, %c0_45] : memref<64x512xf32, #tpu.memory_space<vmem>>, vector<8x512xf32>
    %161 = vector.broadcast %0 : f32 to vector<8x128xf32>
    %162 = arith.subf %151, %161 : vector<8x128xf32>
    %cst_46 = arith.constant 0.000000e+00 : f32
    %163 = vector.broadcast %cst_46 : f32 to vector<8x128xf32>
    %164 = arith.cmpf ogt, %162, %163 : vector<8x128xf32>
    %165 = arith.extui %164 : vector<8x128xi1> to vector<8x128xi32>
    %166 = arith.sitofp %165 : vector<8x128xi32> to vector<8x128xf32>
    %167 = arith.truncf %151 : vector<8x128xf32> to vector<8x128xbf16>
    %cst_47 = arith.constant dense<0.000000e+00> : vector<8x512xf32>
    %168 = tpu.matmul %167, %2, %cst_47 {dimension_numbers = #tpu.dot_dimension_numbers<[1], [0], [0], [1], [0, 0, 1, 1], [], []>} : vector<8x128xbf16>, vector<128x512xbf16>, vector<8x512xf32> -> vector<8x512xf32>
    %169 = arith.addf %160, %168 : vector<8x512xf32>
    %170 = vector.extract_strided_slice %169 {offsets = [0, 0], sizes = [8, 384], strides = [1, 1]} : vector<8x512xf32> to vector<8x384xf32>
    %171 = arith.negf %170 : vector<8x384xf32>
    %172 = math.exp %171 : vector<8x384xf32>
    %cst_48 = arith.constant 1.000000e+00 : f32
    %173 = vector.broadcast %cst_48 : f32 to vector<8x384xf32>
    %174 = arith.addf %173, %172 : vector<8x384xf32>
    %175 = arith.divf %173, %174 : vector<8x384xf32>
    %176 = vector.extract_strided_slice %169 {offsets = [0, 384], sizes = [8, 128], strides = [1, 1]} : vector<8x512xf32> to vector<8x128xf32>
    %177 = math.tanh %176 : vector<8x128xf32>
    %178 = vector.extract_strided_slice %175 {offsets = [0, 0], sizes = [8, 128], strides = [1, 1]} : vector<8x384xf32> to vector<8x128xf32>
    %179 = vector.extract_strided_slice %175 {offsets = [0, 128], sizes = [8, 128], strides = [1, 1]} : vector<8x384xf32> to vector<8x128xf32>
    %180 = vector.extract_strided_slice %175 {offsets = [0, 256], sizes = [8, 128], strides = [1, 1]} : vector<8x384xf32> to vector<8x128xf32>
    %181 = arith.mulf %179, %146 : vector<8x128xf32>
    %182 = arith.mulf %178, %177 : vector<8x128xf32>
    %183 = arith.addf %181, %182 : vector<8x128xf32>
    %184 = math.tanh %183 : vector<8x128xf32>
    %185 = arith.mulf %180, %184 : vector<8x128xf32>
    %186 = vector.broadcast %0 : f32 to vector<8x128xf32>
    %187 = arith.mulf %166, %186 : vector<8x128xf32>
    %188 = arith.subf %185, %187 : vector<8x128xf32>
    %189 = vector.broadcast %0 : f32 to vector<8x128xf32>
    %190 = arith.subf %188, %189 : vector<8x128xf32>
    %cst_49 = arith.constant 0.000000e+00 : f32
    %191 = vector.broadcast %cst_49 : f32 to vector<8x128xf32>
    %192 = arith.cmpf ogt, %190, %191 : vector<8x128xf32>
    %193 = arith.extui %192 : vector<8x128xi1> to vector<8x128xi32>
    %194 = arith.sitofp %193 : vector<8x128xi32> to vector<8x128xf32>
    %c32_50 = arith.constant 32 : index
    %c0_51 = arith.constant 0 : index
    %195 = vector.load %arg14[%c32_50, %c0_51] : memref<64x128xf32, #tpu.memory_space<vmem>>, vector<8x128xf32>
    tpu.vector_store %arg14[%c32_50, %c0_51], %194 {strides = array<i32>} : memref<64x128xf32, #tpu.memory_space<vmem>>, vector<8x128xf32>,
    %196 = arith.addf %159, %194 : vector<8x128xf32>
    %c40 = arith.constant 40 : index
    %c0_52 = arith.constant 0 : index
    %197 = vector.load %arg15[%c40, %c0_52] : memref<64x512xf32, #tpu.memory_space<vmem>>, vector<8x512xf32>
    %198 = vector.broadcast %0 : f32 to vector<8x128xf32>
    %199 = arith.subf %188, %198 : vector<8x128xf32>
    %cst_53 = arith.constant 0.000000e+00 : f32
    %200 = vector.broadcast %cst_53 : f32 to vector<8x128xf32>
    %201 = arith.cmpf ogt, %199, %200 : vector<8x128xf32>
    %202 = arith.extui %201 : vector<8x128xi1> to vector<8x128xi32>
    %203 = arith.sitofp %202 : vector<8x128xi32> to vector<8x128xf32>
    %204 = arith.truncf %188 : vector<8x128xf32> to vector<8x128xbf16>
    %cst_54 = arith.constant dense<0.000000e+00> : vector<8x512xf32>
    %205 = tpu.matmul %204, %2, %cst_54 {dimension_numbers = #tpu.dot_dimension_numbers<[1], [0], [0], [1], [0, 0, 1, 1], [], []>} : vector<8x128xbf16>, vector<128x512xbf16>, vector<8x512xf32> -> vector<8x512xf32>
    %206 = arith.addf %197, %205 : vector<8x512xf32>
    %207 = vector.extract_strided_slice %206 {offsets = [0, 0], sizes = [8, 384], strides = [1, 1]} : vector<8x512xf32> to vector<8x384xf32>
    %208 = arith.negf %207 : vector<8x384xf32>
    %209 = math.exp %208 : vector<8x384xf32>
    %cst_55 = arith.constant 1.000000e+00 : f32
    %210 = vector.broadcast %cst_55 : f32 to vector<8x384xf32>
    %211 = arith.addf %210, %209 : vector<8x384xf32>
    %212 = arith.divf %210, %211 : vector<8x384xf32>
    %213 = vector.extract_strided_slice %206 {offsets = [0, 384], sizes = [8, 128], strides = [1, 1]} : vector<8x512xf32> to vector<8x128xf32>
    %214 = math.tanh %213 : vector<8x128xf32>
    %215 = vector.extract_strided_slice %212 {offsets = [0, 0], sizes = [8, 128], strides = [1, 1]} : vector<8x384xf32> to vector<8x128xf32>
    %216 = vector.extract_strided_slice %212 {offsets = [0, 128], sizes = [8, 128], strides = [1, 1]} : vector<8x384xf32> to vector<8x128xf32>
    %217 = vector.extract_strided_slice %212 {offsets = [0, 256], sizes = [8, 128], strides = [1, 1]} : vector<8x384xf32> to vector<8x128xf32>
    %218 = arith.mulf %216, %183 : vector<8x128xf32>
    %219 = arith.mulf %215, %214 : vector<8x128xf32>
    %220 = arith.addf %218, %219 : vector<8x128xf32>
    %221 = math.tanh %220 : vector<8x128xf32>
    %222 = arith.mulf %217, %221 : vector<8x128xf32>
    %223 = vector.broadcast %0 : f32 to vector<8x128xf32>
    %224 = arith.mulf %203, %223 : vector<8x128xf32>
    %225 = arith.subf %222, %224 : vector<8x128xf32>
    %226 = vector.broadcast %0 : f32 to vector<8x128xf32>
    %227 = arith.subf %225, %226 : vector<8x128xf32>
    %cst_56 = arith.constant 0.000000e+00 : f32
    %228 = vector.broadcast %cst_56 : f32 to vector<8x128xf32>
    %229 = arith.cmpf ogt, %227, %228 : vector<8x128xf32>
    %230 = arith.extui %229 : vector<8x128xi1> to vector<8x128xi32>
    %231 = arith.sitofp %230 : vector<8x128xi32> to vector<8x128xf32>
    %c40_57 = arith.constant 40 : index
    %c0_58 = arith.constant 0 : index
    %232 = vector.load %arg14[%c40_57, %c0_58] : memref<64x128xf32, #tpu.memory_space<vmem>>, vector<8x128xf32>
    tpu.vector_store %arg14[%c40_57, %c0_58], %231 {strides = array<i32>} : memref<64x128xf32, #tpu.memory_space<vmem>>, vector<8x128xf32>,
    %233 = arith.addf %196, %231 : vector<8x128xf32>
    %c48 = arith.constant 48 : index
    %c0_59 = arith.constant 0 : index
    %234 = vector.load %arg15[%c48, %c0_59] : memref<64x512xf32, #tpu.memory_space<vmem>>, vector<8x512xf32>
    %235 = vector.broadcast %0 : f32 to vector<8x128xf32>
    %236 = arith.subf %225, %235 : vector<8x128xf32>
    %cst_60 = arith.constant 0.000000e+00 : f32
    %237 = vector.broadcast %cst_60 : f32 to vector<8x128xf32>
    %238 = arith.cmpf ogt, %236, %237 : vector<8x128xf32>
    %239 = arith.extui %238 : vector<8x128xi1> to vector<8x128xi32>
    %240 = arith.sitofp %239 : vector<8x128xi32> to vector<8x128xf32>
    %241 = arith.truncf %225 : vector<8x128xf32> to vector<8x128xbf16>
    %cst_61 = arith.constant dense<0.000000e+00> : vector<8x512xf32>
    %242 = tpu.matmul %241, %2, %cst_61 {dimension_numbers = #tpu.dot_dimension_numbers<[1], [0], [0], [1], [0, 0, 1, 1], [], []>} : vector<8x128xbf16>, vector<128x512xbf16>, vector<8x512xf32> -> vector<8x512xf32>
    %243 = arith.addf %234, %242 : vector<8x512xf32>
    %244 = vector.extract_strided_slice %243 {offsets = [0, 0], sizes = [8, 384], strides = [1, 1]} : vector<8x512xf32> to vector<8x384xf32>
    %245 = arith.negf %244 : vector<8x384xf32>
    %246 = math.exp %245 : vector<8x384xf32>
    %cst_62 = arith.constant 1.000000e+00 : f32
    %247 = vector.broadcast %cst_62 : f32 to vector<8x384xf32>
    %248 = arith.addf %247, %246 : vector<8x384xf32>
    %249 = arith.divf %247, %248 : vector<8x384xf32>
    %250 = vector.extract_strided_slice %243 {offsets = [0, 384], sizes = [8, 128], strides = [1, 1]} : vector<8x512xf32> to vector<8x128xf32>
    %251 = math.tanh %250 : vector<8x128xf32>
    %252 = vector.extract_strided_slice %249 {offsets = [0, 0], sizes = [8, 128], strides = [1, 1]} : vector<8x384xf32> to vector<8x128xf32>
    %253 = vector.extract_strided_slice %249 {offsets = [0, 128], sizes = [8, 128], strides = [1, 1]} : vector<8x384xf32> to vector<8x128xf32>
    %254 = vector.extract_strided_slice %249 {offsets = [0, 256], sizes = [8, 128], strides = [1, 1]} : vector<8x384xf32> to vector<8x128xf32>
    %255 = arith.mulf %253, %220 : vector<8x128xf32>
    %256 = arith.mulf %252, %251 : vector<8x128xf32>
    %257 = arith.addf %255, %256 : vector<8x128xf32>
    %258 = math.tanh %257 : vector<8x128xf32>
    %259 = arith.mulf %254, %258 : vector<8x128xf32>
    %260 = vector.broadcast %0 : f32 to vector<8x128xf32>
    %261 = arith.mulf %240, %260 : vector<8x128xf32>
    %262 = arith.subf %259, %261 : vector<8x128xf32>
    %263 = vector.broadcast %0 : f32 to vector<8x128xf32>
    %264 = arith.subf %262, %263 : vector<8x128xf32>
    %cst_63 = arith.constant 0.000000e+00 : f32
    %265 = vector.broadcast %cst_63 : f32 to vector<8x128xf32>
    %266 = arith.cmpf ogt, %264, %265 : vector<8x128xf32>
    %267 = arith.extui %266 : vector<8x128xi1> to vector<8x128xi32>
    %268 = arith.sitofp %267 : vector<8x128xi32> to vector<8x128xf32>
    %c48_64 = arith.constant 48 : index
    %c0_65 = arith.constant 0 : index
    %269 = vector.load %arg14[%c48_64, %c0_65] : memref<64x128xf32, #tpu.memory_space<vmem>>, vector<8x128xf32>
    tpu.vector_store %arg14[%c48_64, %c0_65], %268 {strides = array<i32>} : memref<64x128xf32, #tpu.memory_space<vmem>>, vector<8x128xf32>,
    %270 = arith.addf %233, %268 : vector<8x128xf32>
    %c56 = arith.constant 56 : index
    %c0_66 = arith.constant 0 : index
    %271 = vector.load %arg15[%c56, %c0_66] : memref<64x512xf32, #tpu.memory_space<vmem>>, vector<8x512xf32>
    %272 = vector.broadcast %0 : f32 to vector<8x128xf32>
    %273 = arith.subf %262, %272 : vector<8x128xf32>
    %cst_67 = arith.constant 0.000000e+00 : f32
    %274 = vector.broadcast %cst_67 : f32 to vector<8x128xf32>
    %275 = arith.cmpf ogt, %273, %274 : vector<8x128xf32>
    %276 = arith.extui %275 : vector<8x128xi1> to vector<8x128xi32>
    %277 = arith.sitofp %276 : vector<8x128xi32> to vector<8x128xf32>
    %278 = arith.truncf %262 : vector<8x128xf32> to vector<8x128xbf16>
    %cst_68 = arith.constant dense<0.000000e+00> : vector<8x512xf32>
    %279 = tpu.matmul %278, %2, %cst_68 {dimension_numbers = #tpu.dot_dimension_numbers<[1], [0], [0], [1], [0, 0, 1, 1], [], []>} : vector<8x128xbf16>, vector<128x512xbf16>, vector<8x512xf32> -> vector<8x512xf32>
    %280 = arith.addf %271, %279 : vector<8x512xf32>
    %281 = vector.extract_strided_slice %280 {offsets = [0, 0], sizes = [8, 384], strides = [1, 1]} : vector<8x512xf32> to vector<8x384xf32>
    %282 = arith.negf %281 : vector<8x384xf32>
    %283 = math.exp %282 : vector<8x384xf32>
    %cst_69 = arith.constant 1.000000e+00 : f32
    %284 = vector.broadcast %cst_69 : f32 to vector<8x384xf32>
    %285 = arith.addf %284, %283 : vector<8x384xf32>
    %286 = arith.divf %284, %285 : vector<8x384xf32>
    %287 = vector.extract_strided_slice %280 {offsets = [0, 384], sizes = [8, 128], strides = [1, 1]} : vector<8x512xf32> to vector<8x128xf32>
    %288 = math.tanh %287 : vector<8x128xf32>
    %289 = vector.extract_strided_slice %286 {offsets = [0, 0], sizes = [8, 128], strides = [1, 1]} : vector<8x384xf32> to vector<8x128xf32>
    %290 = vector.extract_strided_slice %286 {offsets = [0, 128], sizes = [8, 128], strides = [1, 1]} : vector<8x384xf32> to vector<8x128xf32>
    %291 = vector.extract_strided_slice %286 {offsets = [0, 256], sizes = [8, 128], strides = [1, 1]} : vector<8x384xf32> to vector<8x128xf32>
    %292 = arith.mulf %290, %257 : vector<8x128xf32>
    %293 = arith.mulf %289, %288 : vector<8x128xf32>
    %294 = arith.addf %292, %293 : vector<8x128xf32>
    %295 = math.tanh %294 : vector<8x128xf32>
    %296 = arith.mulf %291, %295 : vector<8x128xf32>
    %297 = vector.broadcast %0 : f32 to vector<8x128xf32>
    %298 = arith.mulf %277, %297 : vector<8x128xf32>
    %299 = arith.subf %296, %298 : vector<8x128xf32>
    %300 = vector.broadcast %0 : f32 to vector<8x128xf32>
    %301 = arith.subf %299, %300 : vector<8x128xf32>
    %cst_70 = arith.constant 0.000000e+00 : f32
    %302 = vector.broadcast %cst_70 : f32 to vector<8x128xf32>
    %303 = arith.cmpf ogt, %301, %302 : vector<8x128xf32>
    %304 = arith.extui %303 : vector<8x128xi1> to vector<8x128xi32>
    %305 = arith.sitofp %304 : vector<8x128xi32> to vector<8x128xf32>
    %c56_71 = arith.constant 56 : index
    %c0_72 = arith.constant 0 : index
    %306 = vector.load %arg14[%c56_71, %c0_72] : memref<64x128xf32, #tpu.memory_space<vmem>>, vector<8x128xf32>
    tpu.vector_store %arg14[%c56_71, %c0_72], %305 {strides = array<i32>} : memref<64x128xf32, #tpu.memory_space<vmem>>, vector<8x128xf32>,
    %307 = arith.addf %270, %305 : vector<8x128xf32>
    %308 = tpu.iota {dimensions = array<i32: 0>} : vector<8x1xi32>
    %c2_i32 = arith.constant 2 : i32
    %309 = vector.broadcast %c2_i32 : i32 to vector<8x1xi32>
    %310 = arith.cmpi slt, %308, %309 : vector<8x1xi32>
    %311 = arith.extui %310 : vector<8x1xi1> to vector<8x1xi32>
    %312 = arith.sitofp %311 : vector<8x1xi32> to vector<8x1xf32>
    %313 = vector.broadcast %312 : vector<8x1xf32> to vector<8x128xf32>
    %314 = arith.mulf %307, %313 : vector<8x128xf32>
    %cst_73 = arith.constant dense<0.000000e+00> : vector<128xf32>
    %315 = vector.multi_reduction <add>, %314, %cst_73 [0] : vector<8x128xf32> to vector<128xf32>
    %316 = vector.shape_cast %315 : vector<128xf32> to vector<1x128xf32>
    %cst_74 = arith.constant 6.250000e-02 : f32
    %317 = vector.broadcast %cst_74 : f32 to vector<1x128xf32>
    %318 = arith.mulf %316, %317 : vector<1x128xf32>
    %319 = arith.mulf %318, %318 : vector<1x128xf32>
    %320 = arith.subf %318, %319 : vector<1x128xf32>
    %c0_75 = arith.constant 0 : index
    %c0_76 = arith.constant 0 : index
    %321 = vector.load %arg9[%c0_75, %c0_76] : memref<1x128xf32, #tpu.memory_space<vmem>>, vector<1x128xf32>
    %cst_77 = arith.constant 9.99999974E-6 : f32
    %322 = vector.broadcast %cst_77 : f32 to vector<1x128xf32>
    %323 = arith.addf %320, %322 : vector<1x128xf32>
    %324 = math.rsqrt %323 : vector<1x128xf32>
    %325 = arith.mulf %321, %324 : vector<1x128xf32>
    %c0_78 = arith.constant 0 : index
    %c0_79 = arith.constant 0 : index
    %326 = vector.load %arg10[%c0_78, %c0_79] : memref<1x128xf32, #tpu.memory_space<vmem>>, vector<1x128xf32>
    %327 = arith.mulf %318, %325 : vector<1x128xf32>
    %328 = arith.subf %326, %327 : vector<1x128xf32>
    %c0_80 = arith.constant 0 : index
    %c0_81 = arith.constant 0 : index
    %329 = vector.load %arg5[%c0_80, %c0_81] : memref<512x128xf32, #tpu.memory_space<vmem>>, vector<512x128xf32>
    %330 = vector.broadcast %325 : vector<1x128xf32> to vector<512x128xf32>
    %331 = arith.mulf %329, %330 : vector<512x128xf32>
    %cst_82 = arith.constant dense<0.000000e+00> : vector<1x512xf32>
    %332 = tpu.matmul %328, %329, %cst_82 {dimension_numbers = #tpu.dot_dimension_numbers<[1], [1], [0], [0], [0, 0, 1, 0], [], []>} : vector<1x128xf32>, vector<512x128xf32>, vector<1x512xf32> -> vector<1x512xf32>
    %c0_83 = arith.constant 0 : index
    %c0_84 = arith.constant 0 : index
    %333 = vector.load %arg7[%c0_83, %c0_84] : memref<1x512xf32, #tpu.memory_space<vmem>>, vector<1x512xf32>
    %334 = arith.addf %332, %333 : vector<1x512xf32>
    %c0_85 = arith.constant 0 : index
    %c0_86 = arith.constant 0 : index
    %335 = vector.load %arg14[%c0_85, %c0_86] : memref<64x128xf32, #tpu.memory_space<vmem>>, vector<64x128xf32>
    %cst_87 = arith.constant dense<0.000000e+00> : vector<64x512xf32>
    %336 = tpu.matmul %335, %331, %cst_87 {dimension_numbers = #tpu.dot_dimension_numbers<[1], [1], [0], [0], [0, 0, 1, 0], [], []>} : vector<64x128xf32>, vector<512x128xf32>, vector<64x512xf32> -> vector<64x512xf32>
    %337 = vector.broadcast %334 : vector<1x512xf32> to vector<64x512xf32>
    %338 = arith.addf %336, %337 : vector<64x512xf32>
    %c0_88 = arith.constant 0 : index
    %c0_89 = arith.constant 0 : index
    %339 = vector.load %arg16[%c0_88, %c0_89] : memref<64x512xf32, #tpu.memory_space<vmem>>, vector<64x512xf32>
    tpu.vector_store %arg16[%c0_88, %c0_89], %338 {strides = array<i32>} : memref<64x512xf32, #tpu.memory_space<vmem>>, vector<64x512xf32>,
    %c0_90 = arith.constant 0 : index
    %c0_91 = arith.constant 0 : index
    %340 = vector.load %arg16[%c0_90, %c0_91] : memref<64x512xf32, #tpu.memory_space<vmem>>, vector<8x512xf32>
    %341 = vector.broadcast %1 : f32 to vector<8x128xf32>
    %342 = arith.subf %4, %341 : vector<8x128xf32>
    %cst_92 = arith.constant 0.000000e+00 : f32
    %343 = vector.broadcast %cst_92 : f32 to vector<8x128xf32>
    %344 = arith.cmpf ogt, %342, %343 : vector<8x128xf32>
    %345 = arith.extui %344 : vector<8x128xi1> to vector<8x128xi32>
    %346 = arith.sitofp %345 : vector<8x128xi32> to vector<8x128xf32>
    %347 = arith.truncf %4 : vector<8x128xf32> to vector<8x128xbf16>
    %cst_93 = arith.constant dense<0.000000e+00> : vector<8x512xf32>
    %348 = tpu.matmul %347, %3, %cst_93 {dimension_numbers = #tpu.dot_dimension_numbers<[1], [0], [0], [1], [0, 0, 1, 1], [], []>} : vector<8x128xbf16>, vector<128x512xbf16>, vector<8x512xf32> -> vector<8x512xf32>
    %349 = arith.addf %340, %348 : vector<8x512xf32>
    %350 = vector.extract_strided_slice %349 {offsets = [0, 0], sizes = [8, 384], strides = [1, 1]} : vector<8x512xf32> to vector<8x384xf32>
    %351 = arith.negf %350 : vector<8x384xf32>
    %352 = math.exp %351 : vector<8x384xf32>
    %cst_94 = arith.constant 1.000000e+00 : f32
    %353 = vector.broadcast %cst_94 : f32 to vector<8x384xf32>
    %354 = arith.addf %353, %352 : vector<8x384xf32>
    %355 = arith.divf %353, %354 : vector<8x384xf32>
    %356 = vector.extract_strided_slice %349 {offsets = [0, 384], sizes = [8, 128], strides = [1, 1]} : vector<8x512xf32> to vector<8x128xf32>
    %357 = math.tanh %356 : vector<8x128xf32>
    %358 = vector.extract_strided_slice %355 {offsets = [0, 0], sizes = [8, 128], strides = [1, 1]} : vector<8x384xf32> to vector<8x128xf32>
    %359 = vector.extract_strided_slice %355 {offsets = [0, 128], sizes = [8, 128], strides = [1, 1]} : vector<8x384xf32> to vector<8x128xf32>
    %360 = vector.extract_strided_slice %355 {offsets = [0, 256], sizes = [8, 128], strides = [1, 1]} : vector<8x384xf32> to vector<8x128xf32>
    %361 = arith.mulf %359, %4 : vector<8x128xf32>
    %362 = arith.mulf %358, %357 : vector<8x128xf32>
    %363 = arith.addf %361, %362 : vector<8x128xf32>
    %364 = math.tanh %363 : vector<8x128xf32>
    %365 = arith.mulf %360, %364 : vector<8x128xf32>
    %366 = vector.broadcast %1 : f32 to vector<8x128xf32>
    %367 = arith.mulf %346, %366 : vector<8x128xf32>
    %368 = arith.subf %365, %367 : vector<8x128xf32>
    %369 = arith.addf %4, %368 : vector<8x128xf32>
    %c8_95 = arith.constant 8 : index
    %c0_96 = arith.constant 0 : index
    %370 = vector.load %arg16[%c8_95, %c0_96] : memref<64x512xf32, #tpu.memory_space<vmem>>, vector<8x512xf32>
    %371 = vector.broadcast %1 : f32 to vector<8x128xf32>
    %372 = arith.subf %368, %371 : vector<8x128xf32>
    %cst_97 = arith.constant 0.000000e+00 : f32
    %373 = vector.broadcast %cst_97 : f32 to vector<8x128xf32>
    %374 = arith.cmpf ogt, %372, %373 : vector<8x128xf32>
    %375 = arith.extui %374 : vector<8x128xi1> to vector<8x128xi32>
    %376 = arith.sitofp %375 : vector<8x128xi32> to vector<8x128xf32>
    %377 = arith.truncf %368 : vector<8x128xf32> to vector<8x128xbf16>
    %cst_98 = arith.constant dense<0.000000e+00> : vector<8x512xf32>
    %378 = tpu.matmul %377, %3, %cst_98 {dimension_numbers = #tpu.dot_dimension_numbers<[1], [0], [0], [1], [0, 0, 1, 1], [], []>} : vector<8x128xbf16>, vector<128x512xbf16>, vector<8x512xf32> -> vector<8x512xf32>
    %379 = arith.addf %370, %378 : vector<8x512xf32>
    %380 = vector.extract_strided_slice %379 {offsets = [0, 0], sizes = [8, 384], strides = [1, 1]} : vector<8x512xf32> to vector<8x384xf32>
    %381 = arith.negf %380 : vector<8x384xf32>
    %382 = math.exp %381 : vector<8x384xf32>
    %cst_99 = arith.constant 1.000000e+00 : f32
    %383 = vector.broadcast %cst_99 : f32 to vector<8x384xf32>
    %384 = arith.addf %383, %382 : vector<8x384xf32>
    %385 = arith.divf %383, %384 : vector<8x384xf32>
    %386 = vector.extract_strided_slice %379 {offsets = [0, 384], sizes = [8, 128], strides = [1, 1]} : vector<8x512xf32> to vector<8x128xf32>
    %387 = math.tanh %386 : vector<8x128xf32>
    %388 = vector.extract_strided_slice %385 {offsets = [0, 0], sizes = [8, 128], strides = [1, 1]} : vector<8x384xf32> to vector<8x128xf32>
    %389 = vector.extract_strided_slice %385 {offsets = [0, 128], sizes = [8, 128], strides = [1, 1]} : vector<8x384xf32> to vector<8x128xf32>
    %390 = vector.extract_strided_slice %385 {offsets = [0, 256], sizes = [8, 128], strides = [1, 1]} : vector<8x384xf32> to vector<8x128xf32>
    %391 = arith.mulf %389, %363 : vector<8x128xf32>
    %392 = arith.mulf %388, %387 : vector<8x128xf32>
    %393 = arith.addf %391, %392 : vector<8x128xf32>
    %394 = math.tanh %393 : vector<8x128xf32>
    %395 = arith.mulf %390, %394 : vector<8x128xf32>
    %396 = vector.broadcast %1 : f32 to vector<8x128xf32>
    %397 = arith.mulf %376, %396 : vector<8x128xf32>
    %398 = arith.subf %395, %397 : vector<8x128xf32>
    %399 = arith.addf %369, %398 : vector<8x128xf32>
    %c16_100 = arith.constant 16 : index
    %c0_101 = arith.constant 0 : index
    %400 = vector.load %arg16[%c16_100, %c0_101] : memref<64x512xf32, #tpu.memory_space<vmem>>, vector<8x512xf32>
    %401 = vector.broadcast %1 : f32 to vector<8x128xf32>
    %402 = arith.subf %398, %401 : vector<8x128xf32>
    %cst_102 = arith.constant 0.000000e+00 : f32
    %403 = vector.broadcast %cst_102 : f32 to vector<8x128xf32>
    %404 = arith.cmpf ogt, %402, %403 : vector<8x128xf32>
    %405 = arith.extui %404 : vector<8x128xi1> to vector<8x128xi32>
    %406 = arith.sitofp %405 : vector<8x128xi32> to vector<8x128xf32>
    %407 = arith.truncf %398 : vector<8x128xf32> to vector<8x128xbf16>
    %cst_103 = arith.constant dense<0.000000e+00> : vector<8x512xf32>
    %408 = tpu.matmul %407, %3, %cst_103 {dimension_numbers = #tpu.dot_dimension_numbers<[1], [0], [0], [1], [0, 0, 1, 1], [], []>} : vector<8x128xbf16>, vector<128x512xbf16>, vector<8x512xf32> -> vector<8x512xf32>
    %409 = arith.addf %400, %408 : vector<8x512xf32>
    %410 = vector.extract_strided_slice %409 {offsets = [0, 0], sizes = [8, 384], strides = [1, 1]} : vector<8x512xf32> to vector<8x384xf32>
    %411 = arith.negf %410 : vector<8x384xf32>
    %412 = math.exp %411 : vector<8x384xf32>
    %cst_104 = arith.constant 1.000000e+00 : f32
    %413 = vector.broadcast %cst_104 : f32 to vector<8x384xf32>
    %414 = arith.addf %413, %412 : vector<8x384xf32>
    %415 = arith.divf %413, %414 : vector<8x384xf32>
    %416 = vector.extract_strided_slice %409 {offsets = [0, 384], sizes = [8, 128], strides = [1, 1]} : vector<8x512xf32> to vector<8x128xf32>
    %417 = math.tanh %416 : vector<8x128xf32>
    %418 = vector.extract_strided_slice %415 {offsets = [0, 0], sizes = [8, 128], strides = [1, 1]} : vector<8x384xf32> to vector<8x128xf32>
    %419 = vector.extract_strided_slice %415 {offsets = [0, 128], sizes = [8, 128], strides = [1, 1]} : vector<8x384xf32> to vector<8x128xf32>
    %420 = vector.extract_strided_slice %415 {offsets = [0, 256], sizes = [8, 128], strides = [1, 1]} : vector<8x384xf32> to vector<8x128xf32>
    %421 = arith.mulf %419, %393 : vector<8x128xf32>
    %422 = arith.mulf %418, %417 : vector<8x128xf32>
    %423 = arith.addf %421, %422 : vector<8x128xf32>
    %424 = math.tanh %423 : vector<8x128xf32>
    %425 = arith.mulf %420, %424 : vector<8x128xf32>
    %426 = vector.broadcast %1 : f32 to vector<8x128xf32>
    %427 = arith.mulf %406, %426 : vector<8x128xf32>
    %428 = arith.subf %425, %427 : vector<8x128xf32>
    %429 = arith.addf %399, %428 : vector<8x128xf32>
    %c24_105 = arith.constant 24 : index
    %c0_106 = arith.constant 0 : index
    %430 = vector.load %arg16[%c24_105, %c0_106] : memref<64x512xf32, #tpu.memory_space<vmem>>, vector<8x512xf32>
    %431 = vector.broadcast %1 : f32 to vector<8x128xf32>
    %432 = arith.subf %428, %431 : vector<8x128xf32>
    %cst_107 = arith.constant 0.000000e+00 : f32
    %433 = vector.broadcast %cst_107 : f32 to vector<8x128xf32>
    %434 = arith.cmpf ogt, %432, %433 : vector<8x128xf32>
    %435 = arith.extui %434 : vector<8x128xi1> to vector<8x128xi32>
    %436 = arith.sitofp %435 : vector<8x128xi32> to vector<8x128xf32>
    %437 = arith.truncf %428 : vector<8x128xf32> to vector<8x128xbf16>
    %cst_108 = arith.constant dense<0.000000e+00> : vector<8x512xf32>
    %438 = tpu.matmul %437, %3, %cst_108 {dimension_numbers = #tpu.dot_dimension_numbers<[1], [0], [0], [1], [0, 0, 1, 1], [], []>} : vector<8x128xbf16>, vector<128x512xbf16>, vector<8x512xf32> -> vector<8x512xf32>
    %439 = arith.addf %430, %438 : vector<8x512xf32>
    %440 = vector.extract_strided_slice %439 {offsets = [0, 0], sizes = [8, 384], strides = [1, 1]} : vector<8x512xf32> to vector<8x384xf32>
    %441 = arith.negf %440 : vector<8x384xf32>
    %442 = math.exp %441 : vector<8x384xf32>
    %cst_109 = arith.constant 1.000000e+00 : f32
    %443 = vector.broadcast %cst_109 : f32 to vector<8x384xf32>
    %444 = arith.addf %443, %442 : vector<8x384xf32>
    %445 = arith.divf %443, %444 : vector<8x384xf32>
    %446 = vector.extract_strided_slice %439 {offsets = [0, 384], sizes = [8, 128], strides = [1, 1]} : vector<8x512xf32> to vector<8x128xf32>
    %447 = math.tanh %446 : vector<8x128xf32>
    %448 = vector.extract_strided_slice %445 {offsets = [0, 0], sizes = [8, 128], strides = [1, 1]} : vector<8x384xf32> to vector<8x128xf32>
    %449 = vector.extract_strided_slice %445 {offsets = [0, 128], sizes = [8, 128], strides = [1, 1]} : vector<8x384xf32> to vector<8x128xf32>
    %450 = vector.extract_strided_slice %445 {offsets = [0, 256], sizes = [8, 128], strides = [1, 1]} : vector<8x384xf32> to vector<8x128xf32>
    %451 = arith.mulf %449, %423 : vector<8x128xf32>
    %452 = arith.mulf %448, %447 : vector<8x128xf32>
    %453 = arith.addf %451, %452 : vector<8x128xf32>
    %454 = math.tanh %453 : vector<8x128xf32>
    %455 = arith.mulf %450, %454 : vector<8x128xf32>
    %456 = vector.broadcast %1 : f32 to vector<8x128xf32>
    %457 = arith.mulf %436, %456 : vector<8x128xf32>
    %458 = arith.subf %455, %457 : vector<8x128xf32>
    %459 = arith.addf %429, %458 : vector<8x128xf32>
    %c32_110 = arith.constant 32 : index
    %c0_111 = arith.constant 0 : index
    %460 = vector.load %arg16[%c32_110, %c0_111] : memref<64x512xf32, #tpu.memory_space<vmem>>, vector<8x512xf32>
    %461 = vector.broadcast %1 : f32 to vector<8x128xf32>
    %462 = arith.subf %458, %461 : vector<8x128xf32>
    %cst_112 = arith.constant 0.000000e+00 : f32
    %463 = vector.broadcast %cst_112 : f32 to vector<8x128xf32>
    %464 = arith.cmpf ogt, %462, %463 : vector<8x128xf32>
    %465 = arith.extui %464 : vector<8x128xi1> to vector<8x128xi32>
    %466 = arith.sitofp %465 : vector<8x128xi32> to vector<8x128xf32>
    %467 = arith.truncf %458 : vector<8x128xf32> to vector<8x128xbf16>
    %cst_113 = arith.constant dense<0.000000e+00> : vector<8x512xf32>
    %468 = tpu.matmul %467, %3, %cst_113 {dimension_numbers = #tpu.dot_dimension_numbers<[1], [0], [0], [1], [0, 0, 1, 1], [], []>} : vector<8x128xbf16>, vector<128x512xbf16>, vector<8x512xf32> -> vector<8x512xf32>
    %469 = arith.addf %460, %468 : vector<8x512xf32>
    %470 = vector.extract_strided_slice %469 {offsets = [0, 0], sizes = [8, 384], strides = [1, 1]} : vector<8x512xf32> to vector<8x384xf32>
    %471 = arith.negf %470 : vector<8x384xf32>
    %472 = math.exp %471 : vector<8x384xf32>
    %cst_114 = arith.constant 1.000000e+00 : f32
    %473 = vector.broadcast %cst_114 : f32 to vector<8x384xf32>
    %474 = arith.addf %473, %472 : vector<8x384xf32>
    %475 = arith.divf %473, %474 : vector<8x384xf32>
    %476 = vector.extract_strided_slice %469 {offsets = [0, 384], sizes = [8, 128], strides = [1, 1]} : vector<8x512xf32> to vector<8x128xf32>
    %477 = math.tanh %476 : vector<8x128xf32>
    %478 = vector.extract_strided_slice %475 {offsets = [0, 0], sizes = [8, 128], strides = [1, 1]} : vector<8x384xf32> to vector<8x128xf32>
    %479 = vector.extract_strided_slice %475 {offsets = [0, 128], sizes = [8, 128], strides = [1, 1]} : vector<8x384xf32> to vector<8x128xf32>
    %480 = vector.extract_strided_slice %475 {offsets = [0, 256], sizes = [8, 128], strides = [1, 1]} : vector<8x384xf32> to vector<8x128xf32>
    %481 = arith.mulf %479, %453 : vector<8x128xf32>
    %482 = arith.mulf %478, %477 : vector<8x128xf32>
    %483 = arith.addf %481, %482 : vector<8x128xf32>
    %484 = math.tanh %483 : vector<8x128xf32>
    %485 = arith.mulf %480, %484 : vector<8x128xf32>
    %486 = vector.broadcast %1 : f32 to vector<8x128xf32>
    %487 = arith.mulf %466, %486 : vector<8x128xf32>
    %488 = arith.subf %485, %487 : vector<8x128xf32>
    %489 = arith.addf %459, %488 : vector<8x128xf32>
    %c40_115 = arith.constant 40 : index
    %c0_116 = arith.constant 0 : index
    %490 = vector.load %arg16[%c40_115, %c0_116] : memref<64x512xf32, #tpu.memory_space<vmem>>, vector<8x512xf32>
    %491 = vector.broadcast %1 : f32 to vector<8x128xf32>
    %492 = arith.subf %488, %491 : vector<8x128xf32>
    %cst_117 = arith.constant 0.000000e+00 : f32
    %493 = vector.broadcast %cst_117 : f32 to vector<8x128xf32>
    %494 = arith.cmpf ogt, %492, %493 : vector<8x128xf32>
    %495 = arith.extui %494 : vector<8x128xi1> to vector<8x128xi32>
    %496 = arith.sitofp %495 : vector<8x128xi32> to vector<8x128xf32>
    %497 = arith.truncf %488 : vector<8x128xf32> to vector<8x128xbf16>
    %cst_118 = arith.constant dense<0.000000e+00> : vector<8x512xf32>
    %498 = tpu.matmul %497, %3, %cst_118 {dimension_numbers = #tpu.dot_dimension_numbers<[1], [0], [0], [1], [0, 0, 1, 1], [], []>} : vector<8x128xbf16>, vector<128x512xbf16>, vector<8x512xf32> -> vector<8x512xf32>
    %499 = arith.addf %490, %498 : vector<8x512xf32>
    %500 = vector.extract_strided_slice %499 {offsets = [0, 0], sizes = [8, 384], strides = [1, 1]} : vector<8x512xf32> to vector<8x384xf32>
    %501 = arith.negf %500 : vector<8x384xf32>
    %502 = math.exp %501 : vector<8x384xf32>
    %cst_119 = arith.constant 1.000000e+00 : f32
    %503 = vector.broadcast %cst_119 : f32 to vector<8x384xf32>
    %504 = arith.addf %503, %502 : vector<8x384xf32>
    %505 = arith.divf %503, %504 : vector<8x384xf32>
    %506 = vector.extract_strided_slice %499 {offsets = [0, 384], sizes = [8, 128], strides = [1, 1]} : vector<8x512xf32> to vector<8x128xf32>
    %507 = math.tanh %506 : vector<8x128xf32>
    %508 = vector.extract_strided_slice %505 {offsets = [0, 0], sizes = [8, 128], strides = [1, 1]} : vector<8x384xf32> to vector<8x128xf32>
    %509 = vector.extract_strided_slice %505 {offsets = [0, 128], sizes = [8, 128], strides = [1, 1]} : vector<8x384xf32> to vector<8x128xf32>
    %510 = vector.extract_strided_slice %505 {offsets = [0, 256], sizes = [8, 128], strides = [1, 1]} : vector<8x384xf32> to vector<8x128xf32>
    %511 = arith.mulf %509, %483 : vector<8x128xf32>
    %512 = arith.mulf %508, %507 : vector<8x128xf32>
    %513 = arith.addf %511, %512 : vector<8x128xf32>
    %514 = math.tanh %513 : vector<8x128xf32>
    %515 = arith.mulf %510, %514 : vector<8x128xf32>
    %516 = vector.broadcast %1 : f32 to vector<8x128xf32>
    %517 = arith.mulf %496, %516 : vector<8x128xf32>
    %518 = arith.subf %515, %517 : vector<8x128xf32>
    %519 = arith.addf %489, %518 : vector<8x128xf32>
    %c48_120 = arith.constant 48 : index
    %c0_121 = arith.constant 0 : index
    %520 = vector.load %arg16[%c48_120, %c0_121] : memref<64x512xf32, #tpu.memory_space<vmem>>, vector<8x512xf32>
    %521 = vector.broadcast %1 : f32 to vector<8x128xf32>
    %522 = arith.subf %518, %521 : vector<8x128xf32>
    %cst_122 = arith.constant 0.000000e+00 : f32
    %523 = vector.broadcast %cst_122 : f32 to vector<8x128xf32>
    %524 = arith.cmpf ogt, %522, %523 : vector<8x128xf32>
    %525 = arith.extui %524 : vector<8x128xi1> to vector<8x128xi32>
    %526 = arith.sitofp %525 : vector<8x128xi32> to vector<8x128xf32>
    %527 = arith.truncf %518 : vector<8x128xf32> to vector<8x128xbf16>
    %cst_123 = arith.constant dense<0.000000e+00> : vector<8x512xf32>
    %528 = tpu.matmul %527, %3, %cst_123 {dimension_numbers = #tpu.dot_dimension_numbers<[1], [0], [0], [1], [0, 0, 1, 1], [], []>} : vector<8x128xbf16>, vector<128x512xbf16>, vector<8x512xf32> -> vector<8x512xf32>
    %529 = arith.addf %520, %528 : vector<8x512xf32>
    %530 = vector.extract_strided_slice %529 {offsets = [0, 0], sizes = [8, 384], strides = [1, 1]} : vector<8x512xf32> to vector<8x384xf32>
    %531 = arith.negf %530 : vector<8x384xf32>
    %532 = math.exp %531 : vector<8x384xf32>
    %cst_124 = arith.constant 1.000000e+00 : f32
    %533 = vector.broadcast %cst_124 : f32 to vector<8x384xf32>
    %534 = arith.addf %533, %532 : vector<8x384xf32>
    %535 = arith.divf %533, %534 : vector<8x384xf32>
    %536 = vector.extract_strided_slice %529 {offsets = [0, 384], sizes = [8, 128], strides = [1, 1]} : vector<8x512xf32> to vector<8x128xf32>
    %537 = math.tanh %536 : vector<8x128xf32>
    %538 = vector.extract_strided_slice %535 {offsets = [0, 0], sizes = [8, 128], strides = [1, 1]} : vector<8x384xf32> to vector<8x128xf32>
    %539 = vector.extract_strided_slice %535 {offsets = [0, 128], sizes = [8, 128], strides = [1, 1]} : vector<8x384xf32> to vector<8x128xf32>
    %540 = vector.extract_strided_slice %535 {offsets = [0, 256], sizes = [8, 128], strides = [1, 1]} : vector<8x384xf32> to vector<8x128xf32>
    %541 = arith.mulf %539, %513 : vector<8x128xf32>
    %542 = arith.mulf %538, %537 : vector<8x128xf32>
    %543 = arith.addf %541, %542 : vector<8x128xf32>
    %544 = math.tanh %543 : vector<8x128xf32>
    %545 = arith.mulf %540, %544 : vector<8x128xf32>
    %546 = vector.broadcast %1 : f32 to vector<8x128xf32>
    %547 = arith.mulf %526, %546 : vector<8x128xf32>
    %548 = arith.subf %545, %547 : vector<8x128xf32>
    %549 = arith.addf %519, %548 : vector<8x128xf32>
    %c56_125 = arith.constant 56 : index
    %c0_126 = arith.constant 0 : index
    %550 = vector.load %arg16[%c56_125, %c0_126] : memref<64x512xf32, #tpu.memory_space<vmem>>, vector<8x512xf32>
    %551 = vector.broadcast %1 : f32 to vector<8x128xf32>
    %552 = arith.subf %548, %551 : vector<8x128xf32>
    %cst_127 = arith.constant 0.000000e+00 : f32
    %553 = vector.broadcast %cst_127 : f32 to vector<8x128xf32>
    %554 = arith.cmpf ogt, %552, %553 : vector<8x128xf32>
    %555 = arith.extui %554 : vector<8x128xi1> to vector<8x128xi32>
    %556 = arith.sitofp %555 : vector<8x128xi32> to vector<8x128xf32>
    %557 = arith.truncf %548 : vector<8x128xf32> to vector<8x128xbf16>
    %cst_128 = arith.constant dense<0.000000e+00> : vector<8x512xf32>
    %558 = tpu.matmul %557, %3, %cst_128 {dimension_numbers = #tpu.dot_dimension_numbers<[1], [0], [0], [1], [0, 0, 1, 1], [], []>} : vector<8x128xbf16>, vector<128x512xbf16>, vector<8x512xf32> -> vector<8x512xf32>
    %559 = arith.addf %550, %558 : vector<8x512xf32>
    %560 = vector.extract_strided_slice %559 {offsets = [0, 0], sizes = [8, 384], strides = [1, 1]} : vector<8x512xf32> to vector<8x384xf32>
    %561 = arith.negf %560 : vector<8x384xf32>
    %562 = math.exp %561 : vector<8x384xf32>
    %cst_129 = arith.constant 1.000000e+00 : f32
    %563 = vector.broadcast %cst_129 : f32 to vector<8x384xf32>
    %564 = arith.addf %563, %562 : vector<8x384xf32>
    %565 = arith.divf %563, %564 : vector<8x384xf32>
    %566 = vector.extract_strided_slice %559 {offsets = [0, 384], sizes = [8, 128], strides = [1, 1]} : vector<8x512xf32> to vector<8x128xf32>
    %567 = math.tanh %566 : vector<8x128xf32>
    %568 = vector.extract_strided_slice %565 {offsets = [0, 0], sizes = [8, 128], strides = [1, 1]} : vector<8x384xf32> to vector<8x128xf32>
    %569 = vector.extract_strided_slice %565 {offsets = [0, 128], sizes = [8, 128], strides = [1, 1]} : vector<8x384xf32> to vector<8x128xf32>
    %570 = vector.extract_strided_slice %565 {offsets = [0, 256], sizes = [8, 128], strides = [1, 1]} : vector<8x384xf32> to vector<8x128xf32>
    %571 = arith.mulf %569, %543 : vector<8x128xf32>
    %572 = arith.mulf %568, %567 : vector<8x128xf32>
    %573 = arith.addf %571, %572 : vector<8x128xf32>
    %574 = math.tanh %573 : vector<8x128xf32>
    %575 = arith.mulf %570, %574 : vector<8x128xf32>
    %576 = vector.broadcast %1 : f32 to vector<8x128xf32>
    %577 = arith.mulf %556, %576 : vector<8x128xf32>
    %578 = arith.subf %575, %577 : vector<8x128xf32>
    %579 = arith.addf %549, %578 : vector<8x128xf32>
    %cst_130 = arith.constant 1.250000e-01 : f32
    %580 = vector.broadcast %cst_130 : f32 to vector<8x128xf32>
    %581 = arith.mulf %579, %580 : vector<8x128xf32>
    %c0_131 = arith.constant 0 : index
    %c0_132 = arith.constant 0 : index
    %582 = vector.load %arg11[%c0_131, %c0_132] : memref<128x8xf32, #tpu.memory_space<vmem>>, vector<128x8xf32>
    %cst_133 = arith.constant dense<0.000000e+00> : vector<8x8xf32>
    %583 = tpu.matmul %581, %582, %cst_133 {dimension_numbers = #tpu.dot_dimension_numbers<[1], [0], [0], [1], [0, 0, 1, 1], [], []>} : vector<8x128xf32>, vector<128x8xf32>, vector<8x8xf32> -> vector<8x8xf32>
    %c0_134 = arith.constant 0 : index
    %c0_135 = arith.constant 0 : index
    %584 = vector.load %arg12[%c0_134, %c0_135] : memref<1x8xf32, #tpu.memory_space<vmem>>, vector<1x8xf32>
    %585 = vector.broadcast %584 : vector<1x8xf32> to vector<8x8xf32>
    %586 = arith.addf %583, %585 : vector<8x8xf32>
    %c0_136 = arith.constant 0 : index
    %c0_137 = arith.constant 0 : index
    %587 = vector.load %arg13[%c0_136, %c0_137] : memref<8x8xf32, #tpu.memory_space<vmem>>, vector<8x8xf32>
    tpu.vector_store %arg13[%c0_136, %c0_137], %586 {strides = array<i32>} : memref<8x8xf32, #tpu.memory_space<vmem>>, vector<8x8xf32>,
    return
  }
}

</mosaic_0001>

<llo_original>
// kernel: tpu_custom_call.1
$region0: #{tpu_custom_call.1}
  #allocation0 [shape = 'u32[]', space=smem, size = 0x4, offset = 0x4, fixed_abs, tag = 'smem constant byte address 0x4 - core index']
  #allocation1 [shape = 'u32[72,128]{1,0:T(1,128)}', space=vmem, size = 0x9000, scoped, tag = 'internal scratch']
  #allocation2 [shape = 'f32[64,128]{1,0:T(8,128)}', space=vmem, size = 0x8000, scoped, tag = 'scratch operand']
  #allocation3 [shape = 'f32[64,512]{1,0:T(8,128)}', space=vmem, size = 0x20000, scoped, tag = 'scratch operand']
  #allocation4 [shape = 'f32[64,512]{1,0:T(8,128)}', space=vmem, size = 0x20000, scoped, tag = 'scratch operand']
  #allocation5 [shape = 'f32[1,1]{1,0:T(1,128)S(6)}', space=smem, size = 0x200, scoped, tag = 'scoped memory for tpu_custom_call.1']
  #allocation6 [shape = 'f32[1,1]{1,0:T(1,128)S(6)}', space=smem, size = 0x200, scoped, tag = 'scoped memory for tpu_custom_call.1']
  %s0 = inlined_call_operand.vmem [shape: bf16[64,14], index: 0, kind: input, shape index: {}]
  %s1 = inlined_call_operand.vmem [shape: bf16[14,512], index: 1, kind: input, shape index: {}]
  %s2 = inlined_call_operand.hbm [shape: bf16[128,512], index: 2, kind: input, shape index: {}]
  %s3 = inlined_call_operand.vmem [shape: f32[1,512], index: 3, kind: input, shape index: {}]
  %s4 = inlined_call_operand.<no memory space> [shape: f32[1,1], index: 4, kind: input, shape index: {}]
  %s5 = inlined_call_operand.hbm [shape: f32[512,128], index: 5, kind: input, shape index: {}]
  %s6 = inlined_call_operand.hbm [shape: bf16[128,512], index: 6, kind: input, shape index: {}]
  %s7 = inlined_call_operand.vmem [shape: f32[1,512], index: 7, kind: input, shape index: {}]
  %s8 = inlined_call_operand.<no memory space> [shape: f32[1,1], index: 8, kind: input, shape index: {}]
  %s9 = inlined_call_operand.vmem [shape: f32[1,128], index: 9, kind: input, shape index: {}]
  %s10 = inlined_call_operand.vmem [shape: f32[1,128], index: 10, kind: input, shape index: {}]
  %s11 = inlined_call_operand.vmem [shape: f32[128,8], index: 11, kind: input, shape index: {}]
  %s12 = inlined_call_operand.vmem [shape: f32[1,8], index: 12, kind: input, shape index: {}]
  %s13 = inlined_call_operand.hbm [shape: f32[8,8], index: 13, kind: output, shape index: {}]
  %s14 = sld [smem:[#allocation0]]
  $region74: #{tpu_custom_call.1} parent=0
    _
  %s16 = ssub.s32 1, %s14
  %s17 = scalar_select 0, %s16, %s14
  %18 = sst [smem:[#allocation5]] %s4
  %19 = sst [smem:[#allocation6]] %s8
  $region1: #{tpu_custom_call.1} parent=0
    #allocation7 [shape = 'u8[131072]{0}', space=vmem, size = 0x20000, scoped, tag = 'input window, operand 2, single buffered']
    #allocation8 [shape = 's32[1]{0}', space=sflag, size = 0x4, scoped, tag = 'scoped memory for tpu_custom_call.1']
    #allocation9 [shape = 's32[1]{0}', space=sflag, size = 0x4, scoped, tag = 'scoped memory for tpu_custom_call.1']
    #allocation10 [shape = 'u8[262144]{0}', space=vmem, size = 0x40000, scoped, tag = 'input window, operand 5, single buffered']
    #allocation11 [shape = 's32[1]{0}', space=sflag, size = 0x4, scoped, tag = 'scoped memory for tpu_custom_call.1']
    #allocation12 [shape = 'u8[131072]{0}', space=vmem, size = 0x20000, scoped, tag = 'input window, operand 6, single buffered']
    #allocation13 [shape = 'u8[4096]{0}', space=vmem, size = 0x1000, scoped, tag = 'output window, operand 0, single buffered']
    %20 = vsyncpa [#allocation8], 0
    %21 = vsyncpa [#allocation11], 0
    %22 = vsyncpa [#allocation9], 0
    // Predicated region
    $region2: #{tpu_custom_call.1} parent=1 // pred_check
      _
    $region3: #{tpu_custom_call.1} parent=1 // pred_check_branch
      %24 = sbr.rel (0) target = $region5
    $region4: #{tpu_custom_call.1} parent=1 // pred_region
      _
    $region5: #{tpu_custom_call.1} parent=1 // pred_fallthru
      _
    // Predicated region
    $region6: #{tpu_custom_call.1} parent=1 // pred_check
      _
    $region7: #{tpu_custom_call.1} parent=1 // pred_check_branch
      %26 = sbr.rel (0) target = $region9
    $region8: #{tpu_custom_call.1} parent=1 // pred_region
      _
    $region9: #{tpu_custom_call.1} parent=1 // pred_fallthru
      _
    // Predicated region
    $region10: #{tpu_custom_call.1} parent=1 // pred_check
      _
    $region11: #{tpu_custom_call.1} parent=1 // pred_check_branch
      %28 = sbr.rel (0) target = $region13
    $region12: #{tpu_custom_call.1} parent=1 // pred_region
      %30 = vsyncadd [#allocation8], 0
      %s31 = sshll.u32 %s2, 4
      %s32 = int_to_ptr.hbm [resolvable:$true] %s31
      %s33 = sshll.u32 [#allocation7], 4
      %s34 = int_to_ptr.vmem [resolvable:$true] %s33
      %39 = dma.hbm_to_vmem [thread:$0]  %s32, 4096, %s34, [#allocation8], 256, 256, 16
    $region13: #{tpu_custom_call.1} parent=1 // pred_fallthru
      _
    // Predicated region
    $region14: #{tpu_custom_call.1} parent=1 // pred_check
      _
    $region15: #{tpu_custom_call.1} parent=1 // pred_check_branch
      %41 = sbr.rel (0) target = $region17
    $region16: #{tpu_custom_call.1} parent=1 // pred_region
      _
    $region17: #{tpu_custom_call.1} parent=1 // pred_fallthru
      _
    // Predicated region
    $region18: #{tpu_custom_call.1} parent=1 // pred_check
      _
    $region19: #{tpu_custom_call.1} parent=1 // pred_check_branch
      %43 = sbr.rel (0) target = $region21
    $region20: #{tpu_custom_call.1} parent=1 // pred_region
      _
    $region21: #{tpu_custom_call.1} parent=1 // pred_fallthru
      _
    // Predicated region
    $region22: #{tpu_custom_call.1} parent=1 // pred_check
      _
    $region23: #{tpu_custom_call.1} parent=1 // pred_check_branch
      %45 = sbr.rel (0) target = $region25
    $region24: #{tpu_custom_call.1} parent=1 // pred_region
      %47 = vsyncadd [#allocation11], 0
      %s48 = sshll.u32 %s5, 4
      %s49 = int_to_ptr.hbm [resolvable:$true] %s48
      %s50 = sshll.u32 [#allocation10], 4
      %s51 = int_to_ptr.vmem [resolvable:$true] %s50
      %56 = dma.hbm_to_vmem [thread:$0]  %s49, 8192, %s51, [#allocation11], 128, 128, 8
    $region25: #{tpu_custom_call.1} parent=1 // pred_fallthru
      _
    // Predicated region
    $region26: #{tpu_custom_call.1} parent=1 // pred_check
      _
    $region27: #{tpu_custom_call.1} parent=1 // pred_check_branch
      %58 = sbr.rel (0) target = $region29
    $region28: #{tpu_custom_call.1} parent=1 // pred_region
      %60 = vsyncadd [#allocation11], 0
      %s61 = sshll.u32 %s6, 4
      %s62 = int_to_ptr.hbm [resolvable:$true] %s61
      %s63 = sshll.u32 [#allocation12], 4
      %s64 = int_to_ptr.vmem [resolvable:$true] %s63
      %69 = dma.hbm_to_vmem [thread:$0]  %s62, 4096, %s64, [#allocation11], 256, 256, 16
    $region29: #{tpu_custom_call.1} parent=1 // pred_fallthru
      _
    // Predicated region
    $region30: #{tpu_custom_call.1} parent=1 // pred_check
      _
    $region31: #{tpu_custom_call.1} parent=1 // pred_check_branch
      %71 = sbr.rel (0) target = $region33
    $region32: #{tpu_custom_call.1} parent=1 // pred_region
      _
    $region33: #{tpu_custom_call.1} parent=1 // pred_fallthru
      _
    // Predicated region
    $region34: #{tpu_custom_call.1} parent=1 // pred_check
      _
    $region35: #{tpu_custom_call.1} parent=1 // pred_check_branch
      %73 = sbr.rel (0) target = $region37
    $region36: #{tpu_custom_call.1} parent=1 // pred_region
      _
    $region37: #{tpu_custom_call.1} parent=1 // pred_fallthru
      _
    // Predicated region
    $region38: #{tpu_custom_call.1} parent=1 // pred_check
      _
    $region39: #{tpu_custom_call.1} parent=1 // pred_check_branch
      %75 = sbr.rel (0) target = $region41
    $region40: #{tpu_custom_call.1} parent=1 // pred_region
      _
    $region41: #{tpu_custom_call.1} parent=1 // pred_fallthru
      _
    // Predicated region
    $region42: #{tpu_custom_call.1} parent=1 // pred_check
      _
    $region43: #{tpu_custom_call.1} parent=1 // pred_check_branch
      %77 = sbr.rel (0) target = $region45
    $region44: #{tpu_custom_call.1} parent=1 // pred_region
      _
    $region45: #{tpu_custom_call.1} parent=1 // pred_fallthru
      _
    // Predicated region
    $region46: #{tpu_custom_call.1} parent=1 // pred_check
      _
    $region47: #{tpu_custom_call.1} parent=1 // pred_check_branch
      %79 = sbr.rel (0) target = $region49
    $region48: #{tpu_custom_call.1} parent=1 // pred_region
      _
    $region49: #{tpu_custom_call.1} parent=1 // pred_fallthru
      _
    // Predicated region
    $region50: #{tpu_custom_call.1} parent=1 // pred_check
      _
    $region51: #{tpu_custom_call.1} parent=1 // pred_check_branch
      %81 = sbr.rel (0) target = $region53
    $region52: #{tpu_custom_call.1} parent=1 // pred_region
      _
    $region53: #{tpu_custom_call.1} parent=1 // pred_fallthru
      _
    // Predicated region
    $region54: #{tpu_custom_call.1} parent=1 // pred_check
      _
    $region55: #{tpu_custom_call.1} parent=1 // pred_check_branch
      %83 = sbr.rel (0) target = $region57
    $region56: #{tpu_custom_call.1} parent=1 // pred_region
      %85 = dma.done [#allocation8], 4096
    $region57: #{tpu_custom_call.1} parent=1 // pred_fallthru
      _
    // Predicated region
    $region58: #{tpu_custom_call.1} parent=1 // pred_check
      _
    $region59: #{tpu_custom_call.1} parent=1 // pred_check_branch
      %87 = sbr.rel (0) target = $region61
    $region60: #{tpu_custom_call.1} parent=1 // pred_region
      %89 = dma.done [#allocation11], 8192
    $region61: #{tpu_custom_call.1} parent=1 // pred_fallthru
      _
    // Predicated region
    $region62: #{tpu_custom_call.1} parent=1 // pred_check
      _
    $region63: #{tpu_custom_call.1} parent=1 // pred_check_branch
      %91 = sbr.rel (0) target = $region65
    $region64: #{tpu_custom_call.1} parent=1 // pred_region
      %93 = dma.done [#allocation11], 4096
    $region65: #{tpu_custom_call.1} parent=1 // pred_fallthru
      _
    %s95 = sld [smem:[#allocation5]]
    %s96 = sld [smem:[#allocation6]]
    %v97 = vld [vmem:[#allocation7] sm:$0xff]
    %v98 = vld [vmem:[#allocation7 + $0x8] sm:$0xff]
    %v99 = vld [vmem:[#allocation7 + $0x10] sm:$0xff]
    %v100 = vld [vmem:[#allocation7 + $0x18] sm:$0xff]
    %v101 = vld [vmem:[#allocation7 + $0x20] sm:$0xff]
    %v102 = vld [vmem:[#allocation7 + $0x28] sm:$0xff]
    %v103 = vld [vmem:[#allocation7 + $0x30] sm:$0xff]
    %v104 = vld [vmem:[#allocation7 + $0x38] sm:$0xff]
    %v105 = vld [vmem:[#allocation7 + $0x40] sm:$0xff]
    %v106 = vld [vmem:[#allocation7 + $0x48] sm:$0xff]
    %v107 = vld [vmem:[#allocation7 + $0x50] sm:$0xff]
    %v108 = vld [vmem:[#allocation7 + $0x58] sm:$0xff]
    %v109 = vld [vmem:[#allocation7 + $0x60] sm:$0xff]
    %v110 = vld [vmem:[#allocation7 + $0x68] sm:$0xff]
    %v111 = vld [vmem:[#allocation7 + $0x70] sm:$0xff]
    %v112 = vld [vmem:[#allocation7 + $0x78] sm:$0xff]
    %v113 = vld [vmem:[#allocation7 + $0x80] sm:$0xff]
    %v114 = vld [vmem:[#allocation7 + $0x88] sm:$0xff]
    %v115 = vld [vmem:[#allocation7 + $0x90] sm:$0xff]
    %v116 = vld [vmem:[#allocation7 + $0x98] sm:$0xff]
    %v117 = vld [vmem:[#allocation7 + $0xa0] sm:$0xff]
    %v118 = vld [vmem:[#allocation7 + $0xa8] sm:$0xff]
    %v119 = vld [vmem:[#allocation7 + $0xb0] sm:$0xff]
    %v120 = vld [vmem:[#allocation7 + $0xb8] sm:$0xff]
    %v121 = vld [vmem:[#allocation7 + $0xc0] sm:$0xff]
    %v122 = vld [vmem:[#allocation7 + $0xc8] sm:$0xff]
    %v123 = vld [vmem:[#allocation7 + $0xd0] sm:$0xff]
    %v124 = vld [vmem:[#allocation7 + $0xd8] sm:$0xff]
    %v125 = vld [vmem:[#allocation7 + $0xe0] sm:$0xff]
    %v126 = vld [vmem:[#allocation7 + $0xe8] sm:$0xff]
    %v127 = vld [vmem:[#allocation7 + $0xf0] sm:$0xff]
    %v128 = vld [vmem:[#allocation7 + $0xf8] sm:$0xff]
    %v129 = vld [vmem:[#allocation12] sm:$0xff]
    %v130 = vld [vmem:[#allocation12 + $0x8] sm:$0xff]
    %v131 = vld [vmem:[#allocation12 + $0x10] sm:$0xff]
    %v132 = vld [vmem:[#allocation12 + $0x18] sm:$0xff]
    %v133 = vld [vmem:[#allocation12 + $0x20] sm:$0xff]
    %v134 = vld [vmem:[#allocation12 + $0x28] sm:$0xff]
    %v135 = vld [vmem:[#allocation12 + $0x30] sm:$0xff]
    %v136 = vld [vmem:[#allocation12 + $0x38] sm:$0xff]
    %v137 = vld [vmem:[#allocation12 + $0x40] sm:$0xff]
    %v138 = vld [vmem:[#allocation12 + $0x48] sm:$0xff]
    %v139 = vld [vmem:[#allocation12 + $0x50] sm:$0xff]
    %v140 = vld [vmem:[#allocation12 + $0x58] sm:$0xff]
    %v141 = vld [vmem:[#allocation12 + $0x60] sm:$0xff]
    %v142 = vld [vmem:[#allocation12 + $0x68] sm:$0xff]
    %v143 = vld [vmem:[#allocation12 + $0x70] sm:$0xff]
    %v144 = vld [vmem:[#allocation12 + $0x78] sm:$0xff]
    %v145 = vld [vmem:[#allocation12 + $0x80] sm:$0xff]
    %v146 = vld [vmem:[#allocation12 + $0x88] sm:$0xff]
    %v147 = vld [vmem:[#allocation12 + $0x90] sm:$0xff]
    %v148 = vld [vmem:[#allocation12 + $0x98] sm:$0xff]
    %v149 = vld [vmem:[#allocation12 + $0xa0] sm:$0xff]
    %v150 = vld [vmem:[#allocation12 + $0xa8] sm:$0xff]
    %v151 = vld [vmem:[#allocation12 + $0xb0] sm:$0xff]
    %v152 = vld [vmem:[#allocation12 + $0xb8] sm:$0xff]
    %v153 = vld [vmem:[#allocation12 + $0xc0] sm:$0xff]
    %v154 = vld [vmem:[#allocation12 + $0xc8] sm:$0xff]
    %v155 = vld [vmem:[#allocation12 + $0xd0] sm:$0xff]
    %v156 = vld [vmem:[#allocation12 + $0xd8] sm:$0xff]
    %v157 = vld [vmem:[#allocation12 + $0xe0] sm:$0xff]
    %v158 = vld [vmem:[#allocation12 + $0xe8] sm:$0xff]
    %v159 = vld [vmem:[#allocation12 + $0xf0] sm:$0xff]
    %v160 = vld [vmem:[#allocation12 + $0xf8] sm:$0xff]
    %v161 = vld [vmem:[%s0] sm:$0xf]
    %v162 = vld [vmem:[%s0 + $0x4] sm:$0xf]
    %v163 = vld [vmem:[%s0 + $0x8] sm:$0xf]
    %v164 = vld [vmem:[%s0 + $0xc] sm:$0xf]
    %v165 = vld [vmem:[%s0 + $0x10] sm:$0xf]
    %v166 = vld [vmem:[%s0 + $0x14] sm:$0xf]
    %v167 = vld [vmem:[%s0 + $0x18] sm:$0xf]
    %v168 = vld [vmem:[%s0 + $0x1c] sm:$0xf]
    %v169 = vld [vmem:[%s1] sm:$0xff]
    %v170 = vld [vmem:[%s1 + $0x8] sm:$0xff]
    %v171 = vld [vmem:[%s1 + $0x10] sm:$0x77]
    %v172 = vld [vmem:[%s1 + $0x18] sm:$0x77]
    %v173 = vld [vmem:[%s3] sm:$0xf]
    %v175 = vperm.slane %v173, 0
    %v176 = vperm.slane %v173, 1
    %v177 = vperm.slane %v173, 2
    %v178 = vperm.slane %v173, 3
    %v191 = vunpack.c.l.b16 %v161
    %v192 = vunpack.c.l.b16 %v162
    %v193 = vunpack.c.l.b16 %v163
    %v194 = vunpack.c.l.b16 %v164
    %v195 = vunpack.c.l.b16 %v165
    %v196 = vunpack.c.l.b16 %v166
    %v197 = vunpack.c.l.b16 %v167
    %v198 = vunpack.c.l.b16 %v168
    %v199 = vpack.c.b16 %v192, %v191
    %v200 = vpack.c.b16 %v194, %v193
    %v201 = vpack.c.b16 %v196, %v195
    %v202 = vpack.c.b16 %v198, %v197
    %v207 = vunpack.c.l.b16 %v169
    %v208 = vunpack.c.h.b16 %v169
    %v209 = vunpack.c.l.b16 %v170
    %v210 = vunpack.c.h.b16 %v170
    %v211 = vunpack.c.l.b16 %v171
    %v212 = vunpack.c.h.b16 %v171
    %v213 = vunpack.c.l.b16 %v172
    %v214 = vunpack.c.h.b16 %v172
    %v215 = vpack.c.b16 %v211, %v207
    %v216 = vpack.c.b16 %v212, %v208
    %v217 = vpack.c.b16 %v213, %v209
    %v218 = vpack.c.b16 %v214, %v210
    %vm219 = vcmask 113664
    %v221 = vsel %vm219, %v199, 0
    %v224 = vsel %vm219, %v200, 0
    %v227 = vsel %vm219, %v201, 0
    %v230 = vsel %vm219, %v202, 0
    %vm232 = vcmask 1046528
    %v234 = vsel %vm232, %v215, 0
    %v237 = vsel %vm232, %v216, 0
    %v240 = vsel %vm232, %v217, 0
    %v243 = vsel %vm232, %v218, 0
    %245 = vmatpush.bf16.msra.mxu0 0
    %246 = vmatpush.bf16.msra.mxu0 0
    %247 = vmatpush.bf16.msra.mxu0 0
    %248 = vmatpush.bf16.msra.mxu0 0
    %249 = vmatpush.bf16.msra.mxu0 0
    %250 = vmatpush.bf16.msra.mxu0 0
    %251 = vmatpush.bf16.msra.mxu0 0
    %252 = vmatpush.bf16.msra.mxu0 %v234
    %253 = vmatmul.bf16.gmra.mxu0 %v221
    %v254 = vpop.f32.mrf.mxu0
    %v255 = vadd.f32 %v175, %v254
    %v256 = vpop.f32.mrf.mxu0
    %v257 = vadd.f32 %v175, %v256
    %258 = vmatmul.bf16.gmra.mxu0 %v224
    %v259 = vpop.f32.mrf.mxu0
    %v260 = vadd.f32 %v175, %v259
    %v261 = vpop.f32.mrf.mxu0
    %v262 = vadd.f32 %v175, %v261
    %263 = vmatmul.bf16.gmra.mxu0 %v227
    %v264 = vpop.f32.mrf.mxu0
    %v265 = vadd.f32 %v175, %v264
    %v266 = vpop.f32.mrf.mxu0
    %v267 = vadd.f32 %v175, %v266
    %268 = vmatmul.bf16.gmra.mxu0 %v230
    %v269 = vpop.f32.mrf.mxu0
    %v270 = vadd.f32 %v175, %v269
    %v271 = vpop.f32.mrf.mxu0
    %v272 = vadd.f32 %v175, %v271
    %273 = vdwg.mxu0
    %274 = vmatpush.bf16.msra.mxu0 0
    %275 = vmatpush.bf16.msra.mxu0 0
    %276 = vmatpush.bf16.msra.mxu0 0
    %277 = vmatpush.bf16.msra.mxu0 0
    %278 = vmatpush.bf16.msra.mxu0 0
    %279 = vmatpush.bf16.msra.mxu0 0
    %280 = vmatpush.bf16.msra.mxu0 0
    %281 = vmatpush.bf16.msra.mxu0 %v237
    %282 = vmatmul.bf16.gmra.mxu0 %v221
    %v283 = vpop.f32.mrf.mxu0
    %v284 = vadd.f32 %v176, %v283
    %v285 = vpop.f32.mrf.mxu0
    %v286 = vadd.f32 %v176, %v285
    %287 = vmatmul.bf16.gmra.mxu0 %v224
    %v288 = vpop.f32.mrf.mxu0
    %v289 = vadd.f32 %v176, %v288
    %v290 = vpop.f32.mrf.mxu0
    %v291 = vadd.f32 %v176, %v290
    %292 = vmatmul.bf16.gmra.mxu0 %v227
    %v293 = vpop.f32.mrf.mxu0
    %v294 = vadd.f32 %v176, %v293
    %v295 = vpop.f32.mrf.mxu0
    %v296 = vadd.f32 %v176, %v295
    %297 = vmatmul.bf16.gmra.mxu0 %v230
    %v298 = vpop.f32.mrf.mxu0
    %v299 = vadd.f32 %v176, %v298
    %v300 = vpop.f32.mrf.mxu0
    %v301 = vadd.f32 %v176, %v300
    %302 = vdwg.mxu0
    %303 = vmatpush.bf16.msra.mxu0 0
    %304 = vmatpush.bf16.msra.mxu0 0
    %305 = vmatpush.bf16.msra.mxu0 0
    %306 = vmatpush.bf16.msra.mxu0 0
    %307 = vmatpush.bf16.msra.mxu0 0
    %308 = vmatpush.bf16.msra.mxu0 0
    %309 = vmatpush.bf16.msra.mxu0 0
    %310 = vmatpush.bf16.msra.mxu0 %v240
    %311 = vmatmul.bf16.gmra.mxu0 %v221
    %v312 = vpop.f32.mrf.mxu0
    %v313 = vadd.f32 %v177, %v312
    %v314 = vpop.f32.mrf.mxu0
    %v315 = vadd.f32 %v177, %v314
    %316 = vmatmul.bf16.gmra.mxu0 %v224
    %v317 = vpop.f32.mrf.mxu0
    %v318 = vadd.f32 %v177, %v317
    %v319 = vpop.f32.mrf.mxu0
    %v320 = vadd.f32 %v177, %v319
    %321 = vmatmul.bf16.gmra.mxu0 %v227
    %v322 = vpop.f32.mrf.mxu0
    %v323 = vadd.f32 %v177, %v322
    %v324 = vpop.f32.mrf.mxu0
    %v325 = vadd.f32 %v177, %v324
    %326 = vmatmul.bf16.gmra.mxu0 %v230
    %v327 = vpop.f32.mrf.mxu0
    %v328 = vadd.f32 %v177, %v327
    %v329 = vpop.f32.mrf.mxu0
    %v330 = vadd.f32 %v177, %v329
    %331 = vdwg.mxu0
    %332 = vmatpush.bf16.msra.mxu0 0
    %333 = vmatpush.bf16.msra.mxu0 0
    %334 = vmatpush.bf16.msra.mxu0 0
    %335 = vmatpush.bf16.msra.mxu0 0
    %336 = vmatpush.bf16.msra.mxu0 0
    %337 = vmatpush.bf16.msra.mxu0 0
    %338 = vmatpush.bf16.msra.mxu0 0
    %339 = vmatpush.bf16.msra.mxu0 %v243
    %340 = vmatmul.bf16.gmra.mxu0 %v221
    %v341 = vpop.f32.mrf.mxu0
    %v342 = vadd.f32 %v178, %v341
    %v343 = vpop.f32.mrf.mxu0
    %v344 = vadd.f32 %v178, %v343
    %345 = vmatmul.bf16.gmra.mxu0 %v224
    %v346 = vpop.f32.mrf.mxu0
    %v347 = vadd.f32 %v178, %v346
    %v348 = vpop.f32.mrf.mxu0
    %v349 = vadd.f32 %v178, %v348
    %350 = vmatmul.bf16.gmra.mxu0 %v227
    %v351 = vpop.f32.mrf.mxu0
    %v352 = vadd.f32 %v178, %v351
    %v353 = vpop.f32.mrf.mxu0
    %v354 = vadd.f32 %v178, %v353
    %355 = vmatmul.bf16.gmra.mxu0 %v230
    %v356 = vpop.f32.mrf.mxu0
    %v357 = vadd.f32 %v178, %v356
    %v358 = vpop.f32.mrf.mxu0
    %v359 = vadd.f32 %v178, %v358
    %360 = vdwg.mxu0
    %361 = vst [vmem:[#allocation3] sm:$0xff] %v255
    %362 = vst [vmem:[#allocation3 + $0x8] sm:$0xff] %v284
    %363 = vst [vmem:[#allocation3 + $0x10] sm:$0xff] %v313
    %364 = vst [vmem:[#allocation3 + $0x18] sm:$0xff] %v342
    %365 = vst [vmem:[#allocation3 + $0x20] sm:$0xff] %v257
    %366 = vst [vmem:[#allocation3 + $0x28] sm:$0xff] %v286
    %367 = vst [vmem:[#allocation3 + $0x30] sm:$0xff] %v315
    %368 = vst [vmem:[#allocation3 + $0x38] sm:$0xff] %v344
    %369 = vst [vmem:[#allocation3 + $0x40] sm:$0xff] %v260
    %370 = vst [vmem:[#allocation3 + $0x48] sm:$0xff] %v289
    %371 = vst [vmem:[#allocation3 + $0x50] sm:$0xff] %v318
    %372 = vst [vmem:[#allocation3 + $0x58] sm:$0xff] %v347
    %373 = vst [vmem:[#allocation3 + $0x60] sm:$0xff] %v262
    %374 = vst [vmem:[#allocation3 + $0x68] sm:$0xff] %v291
    %375 = vst [vmem:[#allocation3 + $0x70] sm:$0xff] %v320
    %376 = vst [vmem:[#allocation3 + $0x78] sm:$0xff] %v349
    %377 = vst [vmem:[#allocation3 + $0x80] sm:$0xff] %v265
    %378 = vst [vmem:[#allocation3 + $0x88] sm:$0xff] %v294
    %379 = vst [vmem:[#allocation3 + $0x90] sm:$0xff] %v323
    %380 = vst [vmem:[#allocation3 + $0x98] sm:$0xff] %v352
    %381 = vst [vmem:[#allocation3 + $0xa0] sm:$0xff] %v267
    %382 = vst [vmem:[#allocation3 + $0xa8] sm:$0xff] %v296
    %383 = vst [vmem:[#allocation3 + $0xb0] sm:$0xff] %v325
    %384 = vst [vmem:[#allocation3 + $0xb8] sm:$0xff] %v354
    %385 = vst [vmem:[#allocation3 + $0xc0] sm:$0xff] %v270
    %386 = vst [vmem:[#allocation3 + $0xc8] sm:$0xff] %v299
    %387 = vst [vmem:[#allocation3 + $0xd0] sm:$0xff] %v328
    %388 = vst [vmem:[#allocation3 + $0xd8] sm:$0xff] %v357
    %389 = vst [vmem:[#allocation3 + $0xe0] sm:$0xff] %v272
    %390 = vst [vmem:[#allocation3 + $0xe8] sm:$0xff] %v301
    %391 = vst [vmem:[#allocation3 + $0xf0] sm:$0xff] %v330
    %392 = vst [vmem:[#allocation3 + $0xf8] sm:$0xff] %v359
    %v393 = vld [vmem:[#allocation3] sm:$0xff]
    %v394 = vld [vmem:[#allocation3 + $0x8] sm:$0xff]
    %v395 = vld [vmem:[#allocation3 + $0x10] sm:$0xff]
    %v396 = vld [vmem:[#allocation3 + $0x18] sm:$0xff]
    %v397 = vstv %s95
    %v398 = vsub.f32 0.0, %v397
    %vm399 = vcmp.gt.f32.partialorder %v398, 0.0
    %v400 = vsel %vm399, 1, 0
    %v401 = vcvt.s32.f32 %v400
    %v434 = vunpack.c.l.b16 %v97
    %v435 = vunpack.c.h.b16 %v97
    %v436 = vunpack.c.l.b16 %v98
    %v437 = vunpack.c.h.b16 %v98
    %v438 = vunpack.c.l.b16 %v99
    %v439 = vunpack.c.h.b16 %v99
    %v440 = vunpack.c.l.b16 %v100
    %v441 = vunpack.c.h.b16 %v100
    %v442 = vunpack.c.l.b16 %v101
    %v443 = vunpack.c.h.b16 %v101
    %v444 = vunpack.c.l.b16 %v102
    %v445 = vunpack.c.h.b16 %v102
    %v446 = vunpack.c.l.b16 %v103
    %v447 = vunpack.c.h.b16 %v103
    %v448 = vunpack.c.l.b16 %v104
    %v449 = vunpack.c.h.b16 %v104
    %v450 = vunpack.c.l.b16 %v105
    %v451 = vunpack.c.h.b16 %v105
    %v452 = vunpack.c.l.b16 %v106
    %v453 = vunpack.c.h.b16 %v106
    %v454 = vunpack.c.l.b16 %v107
    %v455 = vunpack.c.h.b16 %v107
    %v456 = vunpack.c.l.b16 %v108
    %v457 = vunpack.c.h.b16 %v108
    %v458 = vunpack.c.l.b16 %v109
    %v459 = vunpack.c.h.b16 %v109
    %v460 = vunpack.c.l.b16 %v110
    %v461 = vunpack.c.h.b16 %v110
    %v462 = vunpack.c.l.b16 %v111
    %v463 = vunpack.c.h.b16 %v111
    %v464 = vunpack.c.l.b16 %v112
    %v465 = vunpack.c.h.b16 %v112
    %v466 = vunpack.c.l.b16 %v113
    %v467 = vunpack.c.h.b16 %v113
    %v468 = vunpack.c.l.b16 %v114
    %v469 = vunpack.c.h.b16 %v114
    %v470 = vunpack.c.l.b16 %v115
    %v471 = vunpack.c.h.b16 %v115
    %v472 = vunpack.c.l.b16 %v116
    %v473 = vunpack.c.h.b16 %v116
    %v474 = vunpack.c.l.b16 %v117
    %v475 = vunpack.c.h.b16 %v117
    %v476 = vunpack.c.l.b16 %v118
    %v477 = vunpack.c.h.b16 %v118
    %v478 = vunpack.c.l.b16 %v119
    %v479 = vunpack.c.h.b16 %v119
    %v480 = vunpack.c.l.b16 %v120
    %v481 = vunpack.c.h.b16 %v120
    %v482 = vunpack.c.l.b16 %v121
    %v483 = vunpack.c.h.b16 %v121
    %v484 = vunpack.c.l.b16 %v122
    %v485 = vunpack.c.h.b16 %v122
    %v486 = vunpack.c.l.b16 %v123
    %v487 = vunpack.c.h.b16 %v123
    %v488 = vunpack.c.l.b16 %v124
    %v489 = vunpack.c.h.b16 %v124
    %v490 = vunpack.c.l.b16 %v125
    %v491 = vunpack.c.h.b16 %v125
    %v492 = vunpack.c.l.b16 %v126
    %v493 = vunpack.c.h.b16 %v126
    %v494 = vunpack.c.l.b16 %v127
    %v495 = vunpack.c.h.b16 %v127
    %v496 = vunpack.c.l.b16 %v128
    %v497 = vunpack.c.h.b16 %v128
    %v498 = vpack.c.b16 %v438, %v434
    %v499 = vpack.c.b16 %v439, %v435
    %v500 = vpack.c.b16 %v440, %v436
    %v501 = vpack.c.b16 %v441, %v437
    %v502 = vpack.c.b16 %v446, %v442
    %v503 = vpack.c.b16 %v447, %v443
    %v504 = vpack.c.b16 %v448, %v444
    %v505 = vpack.c.b16 %v449, %v445
    %v506 = vpack.c.b16 %v454, %v450
    %v507 = vpack.c.b16 %v455, %v451
    %v508 = vpack.c.b16 %v456, %v452
    %v509 = vpack.c.b16 %v457, %v453
    %v510 = vpack.c.b16 %v462, %v458
    %v511 = vpack.c.b16 %v463, %v459
    %v512 = vpack.c.b16 %v464, %v460
    %v513 = vpack.c.b16 %v465, %v461
    %v514 = vpack.c.b16 %v470, %v466
    %v515 = vpack.c.b16 %v471, %v467
    %v516 = vpack.c.b16 %v472, %v468
    %v517 = vpack.c.b16 %v473, %v469
    %v518 = vpack.c.b16 %v478, %v474
    %v519 = vpack.c.b16 %v479, %v475
    %v520 = vpack.c.b16 %v480, %v476
    %v521 = vpack.c.b16 %v481, %v477
    %v522 = vpack.c.b16 %v486, %v482
    %v523 = vpack.c.b16 %v487, %v483
    %v524 = vpack.c.b16 %v488, %v484
    %v525 = vpack.c.b16 %v489, %v485
    %v526 = vpack.c.b16 %v494, %v490
    %v527 = vpack.c.b16 %v495, %v491
    %v528 = vpack.c.b16 %v496, %v492
    %v529 = vpack.c.b16 %v497, %v493
    %562 = vmatpush.bf16.msra.mxu0 %v526
    %563 = vmatpush.bf16.msra.mxu0 %v522
    %564 = vmatpush.bf16.msra.mxu0 %v518
    %565 = vmatpush.bf16.msra.mxu0 %v514
    %566 = vmatpush.bf16.msra.mxu0 %v510
    %567 = vmatpush.bf16.msra.mxu0 %v506
    %568 = vmatpush.bf16.msra.mxu0 %v502
    %569 = vmatpush.bf16.msra.mxu0 %v498
    %570 = vmatmul.bf16.gmra.mxu0 0
    %v571 = vpop.f32.mrf.mxu0
    %v572 = vadd.f32 0.0, %v571
    %v573 = vpop.f32.mrf.mxu0
    %574 = vdwg.mxu0
    %575 = vmatpush.bf16.msra.mxu0 %v527
    %576 = vmatpush.bf16.msra.mxu0 %v523
    %577 = vmatpush.bf16.msra.mxu0 %v519
    %578 = vmatpush.bf16.msra.mxu0 %v515
    %579 = vmatpush.bf16.msra.mxu0 %v511
    %580 = vmatpush.bf16.msra.mxu0 %v507
    %581 = vmatpush.bf16.msra.mxu0 %v503
    %582 = vmatpush.bf16.msra.mxu0 %v499
    %583 = vmatmul.bf16.gmra.mxu0 0
    %v584 = vpop.f32.mrf.mxu0
    %v585 = vadd.f32 0.0, %v584
    %v586 = vpop.f32.mrf.mxu0
    %587 = vdwg.mxu0
    %588 = vmatpush.bf16.msra.mxu0 %v528
    %589 = vmatpush.bf16.msra.mxu0 %v524
    %590 = vmatpush.bf16.msra.mxu0 %v520
    %591 = vmatpush.bf16.msra.mxu0 %v516
    %592 = vmatpush.bf16.msra.mxu0 %v512
    %593 = vmatpush.bf16.msra.mxu0 %v508
    %594 = vmatpush.bf16.msra.mxu0 %v504
    %595 = vmatpush.bf16.msra.mxu0 %v500
    %596 = vmatmul.bf16.gmra.mxu0 0
    %v597 = vpop.f32.mrf.mxu0
    %v598 = vadd.f32 0.0, %v597
    %v599 = vpop.f32.mrf.mxu0
    %600 = vdwg.mxu0
    %601 = vmatpush.bf16.msra.mxu0 %v529
    %602 = vmatpush.bf16.msra.mxu0 %v525
    %603 = vmatpush.bf16.msra.mxu0 %v521
    %604 = vmatpush.bf16.msra.mxu0 %v517
    %605 = vmatpush.bf16.msra.mxu0 %v513
    %606 = vmatpush.bf16.msra.mxu0 %v509
    %607 = vmatpush.bf16.msra.mxu0 %v505
    %608 = vmatpush.bf16.msra.mxu0 %v501
    %609 = vmatmul.bf16.gmra.mxu0 0
    %v610 = vpop.f32.mrf.mxu0
    %v611 = vadd.f32 0.0, %v610
    %v612 = vpop.f32.mrf.mxu0
    %613 = vdwg.mxu0
    %v614 = vadd.f32 %v393, %v572
    %v615 = vadd.f32 %v394, %v585
    %v616 = vadd.f32 %v395, %v598
    %v617 = vadd.f32 %v396, %v611
    %v618 = vxor.u32 %v614, 2147483648
    %v619 = vxor.u32 %v615, 2147483648
    %v620 = vxor.u32 %v616, 2147483648
    %v621 = vmul.f32 %v618, 1.442695
    %v622 = vpow.pop %v621
    %v623 = vmul.f32 %v619, 1.442695
    %v624 = vpow.pop %v623
    %v625 = vmul.f32 %v620, 1.442695
    %v626 = vpow.pop %v625
    %v627 = vadd.f32 %v622, 1.0
    %v628 = vadd.f32 %v624, 1.0
    %v629 = vadd.f32 %v626, 1.0
    %v630 = vrcp.pop %v627
    %v631 = vmul.f32 %v627, %v630
    %v632 = vsub.f32 1.0, %v631
    %v633 = vmul.f32 %v630, %v632
    %v634 = vadd.f32 %v630, %v633
    %vm635 = vweird.f32 %v627
    %vm636 = vweird.f32 %v630
    %vm637 = vmor %vm635, %vm636
    %v638 = vsel %vm637, %v630, %v634
    %v639 = vand.u32 2147483647, %v627
    %vm640 = vcmp.eq.f32.partialorder %v639, 8.507059e+37
    %v641 = vand.u32 %v627, 2147483648
    %v642 = vor.u32 1.1754944e-38, %v641
    %v643 = vsel %vm640, %v642, %v638
    %v644 = vmul.f32 1.0, %v643
    %v645 = vrcp.pop %v628
    %v646 = vmul.f32 %v628, %v645
    %v647 = vsub.f32 1.0, %v646
    %v648 = vmul.f32 %v645, %v647
    %v649 = vadd.f32 %v645, %v648
    %vm650 = vweird.f32 %v628
    %vm651 = vweird.f32 %v645
    %vm652 = vmor %vm650, %vm651
    %v653 = vsel %vm652, %v645, %v649
    %v654 = vand.u32 2147483647, %v628
    %vm655 = vcmp.eq.f32.partialorder %v654, 8.507059e+37
    %v656 = vand.u32 %v628, 2147483648
    %v657 = vor.u32 1.1754944e-38, %v656
    %v658 = vsel %vm655, %v657, %v653
    %v659 = vmul.f32 1.0, %v658
    %v660 = vrcp.pop %v629
    %v661 = vmul.f32 %v629, %v660
    %v662 = vsub.f32 1.0, %v661
    %v663 = vmul.f32 %v660, %v662
    %v664 = vadd.f32 %v660, %v663
    %vm665 = vweird.f32 %v629
    %vm666 = vweird.f32 %v660
    %vm667 = vmor %vm665, %vm666
    %v668 = vsel %vm667, %v660, %v664
    %v669 = vand.u32 2147483647, %v629
    %vm670 = vcmp.eq.f32.partialorder %v669, 8.507059e+37
    %v671 = vand.u32 %v629, 2147483648
    %v672 = vor.u32 1.1754944e-38, %v671
    %v673 = vsel %vm670, %v672, %v668
    %v674 = vmul.f32 1.0, %v673
    %v675 = vtanh.pop %v617
    %v676 = vmul.f32 %v659, 0.0
    %v677 = vmul.f32 %v644, %v675
    %v678 = vadd.f32 %v676, %v677
    %v679 = vtanh.pop %v678
    %v680 = vmul.f32 %v674, %v679
    %v681 = vmul.f32 %v401, %v397
    %v682 = vsub.f32 %v680, %v681
    %v683 = vsub.f32 %v682, %v397
    %vm684 = vcmp.gt.f32.partialorder %v683, 0.0
    %v685 = vsel %vm684, 1, 0
    %v686 = vcvt.s32.f32 %v685
    %687 = vst [vmem:[#allocation2] sm:$0xff] %v686
    %v688 = vadd.f32 %v686, 0.0
    %v689 = vld [vmem:[#allocation3 + $0x20] sm:$0xff]
    %v690 = vld [vmem:[#allocation3 + $0x28] sm:$0xff]
    %v691 = vld [vmem:[#allocation3 + $0x30] sm:$0xff]
    %v692 = vld [vmem:[#allocation3 + $0x38] sm:$0xff]
    %v693 = vpack.c.bf16 %v682, %v682
    %694 = vmatpush.bf16.msra.mxu0 %v526
    %695 = vmatpush.bf16.msra.mxu0 %v522
    %696 = vmatpush.bf16.msra.mxu0 %v518
    %697 = vmatpush.bf16.msra.mxu0 %v514
    %698 = vmatpush.bf16.msra.mxu0 %v510
    %699 = vmatpush.bf16.msra.mxu0 %v506
    %700 = vmatpush.bf16.msra.mxu0 %v502
    %701 = vmatpush.bf16.msra.mxu0 %v498
    %702 = vmatmul.bf16.gmra.mxu0 %v693
    %v703 = vpop.f32.mrf.mxu0
    %v704 = vadd.f32 0.0, %v703
    %v705 = vpop.f32.mrf.mxu0
    %706 = vdwg.mxu0
    %707 = vmatpush.bf16.msra.mxu0 %v527
    %708 = vmatpush.bf16.msra.mxu0 %v523
    %709 = vmatpush.bf16.msra.mxu0 %v519
    %710 = vmatpush.bf16.msra.mxu0 %v515
    %711 = vmatpush.bf16.msra.mxu0 %v511
    %712 = vmatpush.bf16.msra.mxu0 %v507
    %713 = vmatpush.bf16.msra.mxu0 %v503
    %714 = vmatpush.bf16.msra.mxu0 %v499
    %715 = vmatmul.bf16.gmra.mxu0 %v693
    %v716 = vpop.f32.mrf.mxu0
    %v717 = vadd.f32 0.0, %v716
    %v718 = vpop.f32.mrf.mxu0
    %719 = vdwg.mxu0
    %720 = vmatpush.bf16.msra.mxu0 %v528
    %721 = vmatpush.bf16.msra.mxu0 %v524
    %722 = vmatpush.bf16.msra.mxu0 %v520
    %723 = vmatpush.bf16.msra.mxu0 %v516
    %724 = vmatpush.bf16.msra.mxu0 %v512
    %725 = vmatpush.bf16.msra.mxu0 %v508
    %726 = vmatpush.bf16.msra.mxu0 %v504
    %727 = vmatpush.bf16.msra.mxu0 %v500
    %728 = vmatmul.bf16.gmra.mxu0 %v693
    %v729 = vpop.f32.mrf.mxu0
    %v730 = vadd.f32 0.0, %v729
    %v731 = vpop.f32.mrf.mxu0
    %732 = vdwg.mxu0
    %733 = vmatpush.bf16.msra.mxu0 %v529
    %734 = vmatpush.bf16.msra.mxu0 %v525
    %735 = vmatpush.bf16.msra.mxu0 %v521
    %736 = vmatpush.bf16.msra.mxu0 %v517
    %737 = vmatpush.bf16.msra.mxu0 %v513
    %738 = vmatpush.bf16.msra.mxu0 %v509
    %739 = vmatpush.bf16.msra.mxu0 %v505
    %740 = vmatpush.bf16.msra.mxu0 %v501
    %741 = vmatmul.bf16.gmra.mxu0 %v693
    %v742 = vpop.f32.mrf.mxu0
    %v743 = vadd.f32 0.0, %v742
    %v744 = vpop.f32.mrf.mxu0
    %745 = vdwg.mxu0
    %v746 = vadd.f32 %v689, %v704
    %v747 = vadd.f32 %v690, %v717
    %v748 = vadd.f32 %v691, %v730
    %v749 = vadd.f32 %v692, %v743
    %v750 = vxor.u32 %v746, 2147483648
    %v751 = vxor.u32 %v747, 2147483648
    %v752 = vxor.u32 %v748, 2147483648
    %v753 = vmul.f32 %v750, 1.442695
    %v754 = vpow.pop %v753
    %v755 = vmul.f32 %v751, 1.442695
    %v756 = vpow.pop %v755
    %v757 = vmul.f32 %v752, 1.442695
    %v758 = vpow.pop %v757
    %v759 = vadd.f32 %v754, 1.0
    %v760 = vadd.f32 %v756, 1.0
    %v761 = vadd.f32 %v758, 1.0
    %v762 = vrcp.pop %v759
    %v763 = vmul.f32 %v759, %v762
    %v764 = vsub.f32 1.0, %v763
    %v765 = vmul.f32 %v762, %v764
    %v766 = vadd.f32 %v762, %v765
    %vm767 = vweird.f32 %v759
    %vm768 = vweird.f32 %v762
    %vm769 = vmor %vm767, %vm768
    %v770 = vsel %vm769, %v762, %v766
    %v771 = vand.u32 2147483647, %v759
    %vm772 = vcmp.eq.f32.partialorder %v771, 8.507059e+37
    %v773 = vand.u32 %v759, 2147483648
    %v774 = vor.u32 1.1754944e-38, %v773
    %v775 = vsel %vm772, %v774, %v770
    %v776 = vmul.f32 1.0, %v775
    %v777 = vrcp.pop %v760
    %v778 = vmul.f32 %v760, %v777
    %v779 = vsub.f32 1.0, %v778
    %v780 = vmul.f32 %v777, %v779
    %v781 = vadd.f32 %v777, %v780
    %vm782 = vweird.f32 %v760
    %vm783 = vweird.f32 %v777
    %vm784 = vmor %vm782, %vm783
    %v785 = vsel %vm784, %v777, %v781
    %v786 = vand.u32 2147483647, %v760
    %vm787 = vcmp.eq.f32.partialorder %v786, 8.507059e+37
    %v788 = vand.u32 %v760, 2147483648
    %v789 = vor.u32 1.1754944e-38, %v788
    %v790 = vsel %vm787, %v789, %v785
    %v791 = vmul.f32 1.0, %v790
    %v792 = vrcp.pop %v761
    %v793 = vmul.f32 %v761, %v792
    %v794 = vsub.f32 1.0, %v793
    %v795 = vmul.f32 %v792, %v794
    %v796 = vadd.f32 %v792, %v795
    %vm797 = vweird.f32 %v761
    %vm798 = vweird.f32 %v792
    %vm799 = vmor %vm797, %vm798
    %v800 = vsel %vm799, %v792, %v796
    %v801 = vand.u32 2147483647, %v761
    %vm802 = vcmp.eq.f32.partialorder %v801, 8.507059e+37
    %v803 = vand.u32 %v761, 2147483648
    %v804 = vor.u32 1.1754944e-38, %v803
    %v805 = vsel %vm802, %v804, %v800
    %v806 = vmul.f32 1.0, %v805
    %v807 = vtanh.pop %v749
    %v808 = vmul.f32 %v791, %v678
    %v809 = vmul.f32 %v776, %v807
    %v810 = vadd.f32 %v808, %v809
    %v811 = vtanh.pop %v810
    %v812 = vmul.f32 %v806, %v811
    %v813 = vmul.f32 %v686, %v397
    %v814 = vsub.f32 %v812, %v813
    %v815 = vsub.f32 %v814, %v397
    %vm816 = vcmp.gt.f32.partialorder %v815, 0.0
    %v817 = vsel %vm816, 1, 0
    %v818 = vcvt.s32.f32 %v817
    %819 = vst [vmem:[#allocation2 + $0x8] sm:$0xff] %v818
    %v820 = vadd.f32 %v688, %v818
    %v821 = vld [vmem:[#allocation3 + $0x40] sm:$0xff]
    %v822 = vld [vmem:[#allocation3 + $0x48] sm:$0xff]
    %v823 = vld [vmem:[#allocation3 + $0x50] sm:$0xff]
    %v824 = vld [vmem:[#allocation3 + $0x58] sm:$0xff]
    %v825 = vpack.c.bf16 %v814, %v814
    %826 = vmatpush.bf16.msra.mxu0 %v526
    %827 = vmatpush.bf16.msra.mxu0 %v522
    %828 = vmatpush.bf16.msra.mxu0 %v518
    %829 = vmatpush.bf16.msra.mxu0 %v514
    %830 = vmatpush.bf16.msra.mxu0 %v510
    %831 = vmatpush.bf16.msra.mxu0 %v506
    %832 = vmatpush.bf16.msra.mxu0 %v502
    %833 = vmatpush.bf16.msra.mxu0 %v498
    %834 = vmatmul.bf16.gmra.mxu0 %v825
    %v835 = vpop.f32.mrf.mxu0
    %v836 = vadd.f32 0.0, %v835
    %v837 = vpop.f32.mrf.mxu0
    %838 = vdwg.mxu0
    %839 = vmatpush.bf16.msra.mxu0 %v527
    %840 = vmatpush.bf16.msra.mxu0 %v523
    %841 = vmatpush.bf16.msra.mxu0 %v519
    %842 = vmatpush.bf16.msra.mxu0 %v515
    %843 = vmatpush.bf16.msra.mxu0 %v511
    %844 = vmatpush.bf16.msra.mxu0 %v507
    %845 = vmatpush.bf16.msra.mxu0 %v503
    %846 = vmatpush.bf16.msra.mxu0 %v499
    %847 = vmatmul.bf16.gmra.mxu0 %v825
    %v848 = vpop.f32.mrf.mxu0
    %v849 = vadd.f32 0.0, %v848
    %v850 = vpop.f32.mrf.mxu0
    %851 = vdwg.mxu0
    %852 = vmatpush.bf16.msra.mxu0 %v528
    %853 = vmatpush.bf16.msra.mxu0 %v524
    %854 = vmatpush.bf16.msra.mxu0 %v520
    %855 = vmatpush.bf16.msra.mxu0 %v516
    %856 = vmatpush.bf16.msra.mxu0 %v512
    %857 = vmatpush.bf16.msra.mxu0 %v508
    %858 = vmatpush.bf16.msra.mxu0 %v504
    %859 = vmatpush.bf16.msra.mxu0 %v500
    %860 = vmatmul.bf16.gmra.mxu0 %v825
    %v861 = vpop.f32.mrf.mxu0
    %v862 = vadd.f32 0.0, %v861
    %v863 = vpop.f32.mrf.mxu0
    %864 = vdwg.mxu0
    %865 = vmatpush.bf16.msra.mxu0 %v529
    %866 = vmatpush.bf16.msra.mxu0 %v525
    %867 = vmatpush.bf16.msra.mxu0 %v521
    %868 = vmatpush.bf16.msra.mxu0 %v517
    %869 = vmatpush.bf16.msra.mxu0 %v513
    %870 = vmatpush.bf16.msra.mxu0 %v509
    %871 = vmatpush.bf16.msra.mxu0 %v505
    %872 = vmatpush.bf16.msra.mxu0 %v501
    %873 = vmatmul.bf16.gmra.mxu0 %v825
    %v874 = vpop.f32.mrf.mxu0
    %v875 = vadd.f32 0.0, %v874
    %v876 = vpop.f32.mrf.mxu0
    %877 = vdwg.mxu0
    %v878 = vadd.f32 %v821, %v836
    %v879 = vadd.f32 %v822, %v849
    %v880 = vadd.f32 %v823, %v862
    %v881 = vadd.f32 %v824, %v875
    %v882 = vxor.u32 %v878, 2147483648
    %v883 = vxor.u32 %v879, 2147483648
    %v884 = vxor.u32 %v880, 2147483648
    %v885 = vmul.f32 %v882, 1.442695
    %v886 = vpow.pop %v885
    %v887 = vmul.f32 %v883, 1.442695
    %v888 = vpow.pop %v887
    %v889 = vmul.f32 %v884, 1.442695
    %v890 = vpow.pop %v889
    %v891 = vadd.f32 %v886, 1.0
    %v892 = vadd.f32 %v888, 1.0
    %v893 = vadd.f32 %v890, 1.0
    %v894 = vrcp.pop %v891
    %v895 = vmul.f32 %v891, %v894
    %v896 = vsub.f32 1.0, %v895
    %v897 = vmul.f32 %v894, %v896
    %v898 = vadd.f32 %v894, %v897
    %vm899 = vweird.f32 %v891
    %vm900 = vweird.f32 %v894
    %vm901 = vmor %vm899, %vm900
    %v902 = vsel %vm901, %v894, %v898
    %v903 = vand.u32 2147483647, %v891
    %vm904 = vcmp.eq.f32.partialorder %v903, 8.507059e+37
    %v905 = vand.u32 %v891, 2147483648
    %v906 = vor.u32 1.1754944e-38, %v905
    %v907 = vsel %vm904, %v906, %v902
    %v908 = vmul.f32 1.0, %v907
    %v909 = vrcp.pop %v892
    %v910 = vmul.f32 %v892, %v909
    %v911 = vsub.f32 1.0, %v910
    %v912 = vmul.f32 %v909, %v911
    %v913 = vadd.f32 %v909, %v912
    %vm914 = vweird.f32 %v892
    %vm915 = vweird.f32 %v909
    %vm916 = vmor %vm914, %vm915
    %v917 = vsel %vm916, %v909, %v913
    %v918 = vand.u32 2147483647, %v892
    %vm919 = vcmp.eq.f32.partialorder %v918, 8.507059e+37
    %v920 = vand.u32 %v892, 2147483648
    %v921 = vor.u32 1.1754944e-38, %v920
    %v922 = vsel %vm919, %v921, %v917
    %v923 = vmul.f32 1.0, %v922
    %v924 = vrcp.pop %v893
    %v925 = vmul.f32 %v893, %v924
    %v926 = vsub.f32 1.0, %v925
    %v927 = vmul.f32 %v924, %v926
    %v928 = vadd.f32 %v924, %v927
    %vm929 = vweird.f32 %v893
    %vm930 = vweird.f32 %v924
    %vm931 = vmor %vm929, %vm930
    %v932 = vsel %vm931, %v924, %v928
    %v933 = vand.u32 2147483647, %v893
    %vm934 = vcmp.eq.f32.partialorder %v933, 8.507059e+37
    %v935 = vand.u32 %v893, 2147483648
    %v936 = vor.u32 1.1754944e-38, %v935
    %v937 = vsel %vm934, %v936, %v932
    %v938 = vmul.f32 1.0, %v937
    %v939 = vtanh.pop %v881
    %v940 = vmul.f32 %v923, %v810
    %v941 = vmul.f32 %v908, %v939
    %v942 = vadd.f32 %v940, %v941
    %v943 = vtanh.pop %v942
    %v944 = vmul.f32 %v938, %v943
    %v945 = vmul.f32 %v818, %v397
    %v946 = vsub.f32 %v944, %v945
    %v947 = vsub.f32 %v946, %v397
    %vm948 = vcmp.gt.f32.partialorder %v947, 0.0
    %v949 = vsel %vm948, 1, 0
    %v950 = vcvt.s32.f32 %v949
    %951 = vst [vmem:[#allocation2 + $0x10] sm:$0xff] %v950
    %v952 = vadd.f32 %v820, %v950
    %v953 = vld [vmem:[#allocation3 + $0x60] sm:$0xff]
    %v954 = vld [vmem:[#allocation3 + $0x68] sm:$0xff]
    %v955 = vld [vmem:[#allocation3 + $0x70] sm:$0xff]
    %v956 = vld [vmem:[#allocation3 + $0x78] sm:$0xff]
    %v957 = vpack.c.bf16 %v946, %v946
    %958 = vmatpush.bf16.msra.mxu0 %v526
    %959 = vmatpush.bf16.msra.mxu0 %v522
    %960 = vmatpush.bf16.msra.mxu0 %v518
    %961 = vmatpush.bf16.msra.mxu0 %v514
    %962 = vmatpush.bf16.msra.mxu0 %v510
    %963 = vmatpush.bf16.msra.mxu0 %v506
    %964 = vmatpush.bf16.msra.mxu0 %v502
    %965 = vmatpush.bf16.msra.mxu0 %v498
    %966 = vmatmul.bf16.gmra.mxu0 %v957
    %v967 = vpop.f32.mrf.mxu0
    %v968 = vadd.f32 0.0, %v967
    %v969 = vpop.f32.mrf.mxu0
    %970 = vdwg.mxu0
    %971 = vmatpush.bf16.msra.mxu0 %v527
    %972 = vmatpush.bf16.msra.mxu0 %v523
    %973 = vmatpush.bf16.msra.mxu0 %v519
    %974 = vmatpush.bf16.msra.mxu0 %v515
    %975 = vmatpush.bf16.msra.mxu0 %v511
    %976 = vmatpush.bf16.msra.mxu0 %v507
    %977 = vmatpush.bf16.msra.mxu0 %v503
    %978 = vmatpush.bf16.msra.mxu0 %v499
    %979 = vmatmul.bf16.gmra.mxu0 %v957
    %v980 = vpop.f32.mrf.mxu0
    %v981 = vadd.f32 0.0, %v980
    %v982 = vpop.f32.mrf.mxu0
    %983 = vdwg.mxu0
    %984 = vmatpush.bf16.msra.mxu0 %v528
    %985 = vmatpush.bf16.msra.mxu0 %v524
    %986 = vmatpush.bf16.msra.mxu0 %v520
    %987 = vmatpush.bf16.msra.mxu0 %v516
    %988 = vmatpush.bf16.msra.mxu0 %v512
    %989 = vmatpush.bf16.msra.mxu0 %v508
    %990 = vmatpush.bf16.msra.mxu0 %v504
    %991 = vmatpush.bf16.msra.mxu0 %v500
    %992 = vmatmul.bf16.gmra.mxu0 %v957
    %v993 = vpop.f32.mrf.mxu0
    %v994 = vadd.f32 0.0, %v993
    %v995 = vpop.f32.mrf.mxu0
    %996 = vdwg.mxu0
    %997 = vmatpush.bf16.msra.mxu0 %v529
    %998 = vmatpush.bf16.msra.mxu0 %v525
    %999 = vmatpush.bf16.msra.mxu0 %v521
    %1000 = vmatpush.bf16.msra.mxu0 %v517
    %1001 = vmatpush.bf16.msra.mxu0 %v513
    %1002 = vmatpush.bf16.msra.mxu0 %v509
    %1003 = vmatpush.bf16.msra.mxu0 %v505
    %1004 = vmatpush.bf16.msra.mxu0 %v501
    %1005 = vmatmul.bf16.gmra.mxu0 %v957
    %v1006 = vpop.f32.mrf.mxu0
    %v1007 = vadd.f32 0.0, %v1006
    %v1008 = vpop.f32.mrf.mxu0
    %1009 = vdwg.mxu0
    %v1010 = vadd.f32 %v953, %v968
    %v1011 = vadd.f32 %v954, %v981
    %v1012 = vadd.f32 %v955, %v994
    %v1013 = vadd.f32 %v956, %v1007
    %v1014 = vxor.u32 %v1010, 2147483648
    %v1015 = vxor.u32 %v1011, 2147483648
    %v1016 = vxor.u32 %v1012, 2147483648
    %v1017 = vmul.f32 %v1014, 1.442695
    %v1018 = vpow.pop %v1017
    %v1019 = vmul.f32 %v1015, 1.442695
    %v1020 = vpow.pop %v1019
    %v1021 = vmul.f32 %v1016, 1.442695
    %v1022 = vpow.pop %v1021
    %v1023 = vadd.f32 %v1018, 1.0
    %v1024 = vadd.f32 %v1020, 1.0
    %v1025 = vadd.f32 %v1022, 1.0
    %v1026 = vrcp.pop %v1023
    %v1027 = vmul.f32 %v1023, %v1026
    %v1028 = vsub.f32 1.0, %v1027
    %v1029 = vmul.f32 %v1026, %v1028
    %v1030 = vadd.f32 %v1026, %v1029
    %vm1031 = vweird.f32 %v1023
    %vm1032 = vweird.f32 %v1026
    %vm1033 = vmor %vm1031, %vm1032
    %v1034 = vsel %vm1033, %v1026, %v1030
    %v1035 = vand.u32 2147483647, %v1023
    %vm1036 = vcmp.eq.f32.partialorder %v1035, 8.507059e+37
    %v1037 = vand.u32 %v1023, 2147483648
    %v1038 = vor.u32 1.1754944e-38, %v1037
    %v1039 = vsel %vm1036, %v1038, %v1034
    %v1040 = vmul.f32 1.0, %v1039
    %v1041 = vrcp.pop %v1024
    %v1042 = vmul.f32 %v1024, %v1041
    %v1043 = vsub.f32 1.0, %v1042
    %v1044 = vmul.f32 %v1041, %v1043
    %v1045 = vadd.f32 %v1041, %v1044
    %vm1046 = vweird.f32 %v1024
    %vm1047 = vweird.f32 %v1041
    %vm1048 = vmor %vm1046, %vm1047
    %v1049 = vsel %vm1048, %v1041, %v1045
    %v1050 = vand.u32 2147483647, %v1024
    %vm1051 = vcmp.eq.f32.partialorder %v1050, 8.507059e+37
    %v1052 = vand.u32 %v1024, 2147483648
    %v1053 = vor.u32 1.1754944e-38, %v1052
    %v1054 = vsel %vm1051, %v1053, %v1049
    %v1055 = vmul.f32 1.0, %v1054
    %v1056 = vrcp.pop %v1025
    %v1057 = vmul.f32 %v1025, %v1056
    %v1058 = vsub.f32 1.0, %v1057
    %v1059 = vmul.f32 %v1056, %v1058
    %v1060 = vadd.f32 %v1056, %v1059
    %vm1061 = vweird.f32 %v1025
    %vm1062 = vweird.f32 %v1056
    %vm1063 = vmor %vm1061, %vm1062
    %v1064 = vsel %vm1063, %v1056, %v1060
    %v1065 = vand.u32 2147483647, %v1025
    %vm1066 = vcmp.eq.f32.partialorder %v1065, 8.507059e+37
    %v1067 = vand.u32 %v1025, 2147483648
    %v1068 = vor.u32 1.1754944e-38, %v1067
    %v1069 = vsel %vm1066, %v1068, %v1064
    %v1070 = vmul.f32 1.0, %v1069
    %v1071 = vtanh.pop %v1013
    %v1072 = vmul.f32 %v1055, %v942
    %v1073 = vmul.f32 %v1040, %v1071
    %v1074 = vadd.f32 %v1072, %v1073
    %v1075 = vtanh.pop %v1074
    %v1076 = vmul.f32 %v1070, %v1075
    %v1077 = vmul.f32 %v950, %v397
    %v1078 = vsub.f32 %v1076, %v1077
    %v1079 = vsub.f32 %v1078, %v397
    %vm1080 = vcmp.gt.f32.partialorder %v1079, 0.0
    %v1081 = vsel %vm1080, 1, 0
    %v1082 = vcvt.s32.f32 %v1081
    %1083 = vst [vmem:[#allocation2 + $0x18] sm:$0xff] %v1082
    %v1084 = vadd.f32 %v952, %v1082
    %v1085 = vld [vmem:[#allocation3 + $0x80] sm:$0xff]
    %v1086 = vld [vmem:[#allocation3 + $0x88] sm:$0xff]
    %v1087 = vld [vmem:[#allocation3 + $0x90] sm:$0xff]
    %v1088 = vld [vmem:[#allocation3 + $0x98] sm:$0xff]
    %v1089 = vpack.c.bf16 %v1078, %v1078
    %1090 = vmatpush.bf16.msra.mxu0 %v526
    %1091 = vmatpush.bf16.msra.mxu0 %v522
    %1092 = vmatpush.bf16.msra.mxu0 %v518
    %1093 = vmatpush.bf16.msra.mxu0 %v514
    %1094 = vmatpush.bf16.msra.mxu0 %v510
    %1095 = vmatpush.bf16.msra.mxu0 %v506
    %1096 = vmatpush.bf16.msra.mxu0 %v502
    %1097 = vmatpush.bf16.msra.mxu0 %v498
    %1098 = vmatmul.bf16.gmra.mxu0 %v1089
    %v1099 = vpop.f32.mrf.mxu0
    %v1100 = vadd.f32 0.0, %v1099
    %v1101 = vpop.f32.mrf.mxu0
    %1102 = vdwg.mxu0
    %1103 = vmatpush.bf16.msra.mxu0 %v527
    %1104 = vmatpush.bf16.msra.mxu0 %v523
    %1105 = vmatpush.bf16.msra.mxu0 %v519
    %1106 = vmatpush.bf16.msra.mxu0 %v515
    %1107 = vmatpush.bf16.msra.mxu0 %v511
    %1108 = vmatpush.bf16.msra.mxu0 %v507
    %1109 = vmatpush.bf16.msra.mxu0 %v503
    %1110 = vmatpush.bf16.msra.mxu0 %v499
    %1111 = vmatmul.bf16.gmra.mxu0 %v1089
    %v1112 = vpop.f32.mrf.mxu0
    %v1113 = vadd.f32 0.0, %v1112
    %v1114 = vpop.f32.mrf.mxu0
    %1115 = vdwg.mxu0
    %1116 = vmatpush.bf16.msra.mxu0 %v528
    %1117 = vmatpush.bf16.msra.mxu0 %v524
    %1118 = vmatpush.bf16.msra.mxu0 %v520
    %1119 = vmatpush.bf16.msra.mxu0 %v516
    %1120 = vmatpush.bf16.msra.mxu0 %v512
    %1121 = vmatpush.bf16.msra.mxu0 %v508
    %1122 = vmatpush.bf16.msra.mxu0 %v504
    %1123 = vmatpush.bf16.msra.mxu0 %v500
    %1124 = vmatmul.bf16.gmra.mxu0 %v1089
    %v1125 = vpop.f32.mrf.mxu0
    %v1126 = vadd.f32 0.0, %v1125
    %v1127 = vpop.f32.mrf.mxu0
    %1128 = vdwg.mxu0
    %1129 = vmatpush.bf16.msra.mxu0 %v529
    %1130 = vmatpush.bf16.msra.mxu0 %v525
    %1131 = vmatpush.bf16.msra.mxu0 %v521
    %1132 = vmatpush.bf16.msra.mxu0 %v517
    %1133 = vmatpush.bf16.msra.mxu0 %v513
    %1134 = vmatpush.bf16.msra.mxu0 %v509
    %1135 = vmatpush.bf16.msra.mxu0 %v505
    %1136 = vmatpush.bf16.msra.mxu0 %v501
    %1137 = vmatmul.bf16.gmra.mxu0 %v1089
    %v1138 = vpop.f32.mrf.mxu0
    %v1139 = vadd.f32 0.0, %v1138
    %v1140 = vpop.f32.mrf.mxu0
    %1141 = vdwg.mxu0
    %v1142 = vadd.f32 %v1085, %v1100
    %v1143 = vadd.f32 %v1086, %v1113
    %v1144 = vadd.f32 %v1087, %v1126
    %v1145 = vadd.f32 %v1088, %v1139
    %v1146 = vxor.u32 %v1142, 2147483648
    %v1147 = vxor.u32 %v1143, 2147483648
    %v1148 = vxor.u32 %v1144, 2147483648
    %v1149 = vmul.f32 %v1146, 1.442695
    %v1150 = vpow.pop %v1149
    %v1151 = vmul.f32 %v1147, 1.442695
    %v1152 = vpow.pop %v1151
    %v1153 = vmul.f32 %v1148, 1.442695
    %v1154 = vpow.pop %v1153
    %v1155 = vadd.f32 %v1150, 1.0
    %v1156 = vadd.f32 %v1152, 1.0
    %v1157 = vadd.f32 %v1154, 1.0
    %v1158 = vrcp.pop %v1155
    %v1159 = vmul.f32 %v1155, %v1158
    %v1160 = vsub.f32 1.0, %v1159
    %v1161 = vmul.f32 %v1158, %v1160
    %v1162 = vadd.f32 %v1158, %v1161
    %vm1163 = vweird.f32 %v1155
    %vm1164 = vweird.f32 %v1158
    %vm1165 = vmor %vm1163, %vm1164
    %v1166 = vsel %vm1165, %v1158, %v1162
    %v1167 = vand.u32 2147483647, %v1155
    %vm1168 = vcmp.eq.f32.partialorder %v1167, 8.507059e+37
    %v1169 = vand.u32 %v1155, 2147483648
    %v1170 = vor.u32 1.1754944e-38, %v1169
    %v1171 = vsel %vm1168, %v1170, %v1166
    %v1172 = vmul.f32 1.0, %v1171
    %v1173 = vrcp.pop %v1156
    %v1174 = vmul.f32 %v1156, %v1173
    %v1175 = vsub.f32 1.0, %v1174
    %v1176 = vmul.f32 %v1173, %v1175
    %v1177 = vadd.f32 %v1173, %v1176
    %vm1178 = vweird.f32 %v1156
    %vm1179 = vweird.f32 %v1173
    %vm1180 = vmor %vm1178, %vm1179
    %v1181 = vsel %vm1180, %v1173, %v1177
    %v1182 = vand.u32 2147483647, %v1156
    %vm1183 = vcmp.eq.f32.partialorder %v1182, 8.507059e+37
    %v1184 = vand.u32 %v1156, 2147483648
    %v1185 = vor.u32 1.1754944e-38, %v1184
    %v1186 = vsel %vm1183, %v1185, %v1181
    %v1187 = vmul.f32 1.0, %v1186
    %v1188 = vrcp.pop %v1157
    %v1189 = vmul.f32 %v1157, %v1188
    %v1190 = vsub.f32 1.0, %v1189
    %v1191 = vmul.f32 %v1188, %v1190
    %v1192 = vadd.f32 %v1188, %v1191
    %vm1193 = vweird.f32 %v1157
    %vm1194 = vweird.f32 %v1188
    %vm1195 = vmor %vm1193, %vm1194
    %v1196 = vsel %vm1195, %v1188, %v1192
    %v1197 = vand.u32 2147483647, %v1157
    %vm1198 = vcmp.eq.f32.partialorder %v1197, 8.507059e+37
    %v1199 = vand.u32 %v1157, 2147483648
    %v1200 = vor.u32 1.1754944e-38, %v1199
    %v1201 = vsel %vm1198, %v1200, %v1196
    %v1202 = vmul.f32 1.0, %v1201
    %v1203 = vtanh.pop %v1145
    %v1204 = vmul.f32 %v1187, %v1074
    %v1205 = vmul.f32 %v1172, %v1203
    %v1206 = vadd.f32 %v1204, %v1205
    %v1207 = vtanh.pop %v1206
    %v1208 = vmul.f32 %v1202, %v1207
    %v1209 = vmul.f32 %v1082, %v397
    %v1210 = vsub.f32 %v1208, %v1209
    %v1211 = vsub.f32 %v1210, %v397
    %vm1212 = vcmp.gt.f32.partialorder %v1211, 0.0
    %v1213 = vsel %vm1212, 1, 0
    %v1214 = vcvt.s32.f32 %v1213
    %1215 = vst [vmem:[#allocation2 + $0x20] sm:$0xff] %v1214
    %v1216 = vadd.f32 %v1084, %v1214
    %v1217 = vld [vmem:[#allocation3 + $0xa0] sm:$0xff]
    %v1218 = vld [vmem:[#allocation3 + $0xa8] sm:$0xff]
    %v1219 = vld [vmem:[#allocation3 + $0xb0] sm:$0xff]
    %v1220 = vld [vmem:[#allocation3 + $0xb8] sm:$0xff]
    %v1221 = vpack.c.bf16 %v1210, %v1210
    %1222 = vmatpush.bf16.msra.mxu0 %v526
    %1223 = vmatpush.bf16.msra.mxu0 %v522
    %1224 = vmatpush.bf16.msra.mxu0 %v518
    %1225 = vmatpush.bf16.msra.mxu0 %v514
    %1226 = vmatpush.bf16.msra.mxu0 %v510
    %1227 = vmatpush.bf16.msra.mxu0 %v506
    %1228 = vmatpush.bf16.msra.mxu0 %v502
    %1229 = vmatpush.bf16.msra.mxu0 %v498
    %1230 = vmatmul.bf16.gmra.mxu0 %v1221
    %v1231 = vpop.f32.mrf.mxu0
    %v1232 = vadd.f32 0.0, %v1231
    %v1233 = vpop.f32.mrf.mxu0
    %1234 = vdwg.mxu0
    %1235 = vmatpush.bf16.msra.mxu0 %v527
    %1236 = vmatpush.bf16.msra.mxu0 %v523
    %1237 = vmatpush.bf16.msra.mxu0 %v519
    %1238 = vmatpush.bf16.msra.mxu0 %v515
    %1239 = vmatpush.bf16.msra.mxu0 %v511
    %1240 = vmatpush.bf16.msra.mxu0 %v507
    %1241 = vmatpush.bf16.msra.mxu0 %v503
    %1242 = vmatpush.bf16.msra.mxu0 %v499
    %1243 = vmatmul.bf16.gmra.mxu0 %v1221
    %v1244 = vpop.f32.mrf.mxu0
    %v1245 = vadd.f32 0.0, %v1244
    %v1246 = vpop.f32.mrf.mxu0
    %1247 = vdwg.mxu0
    %1248 = vmatpush.bf16.msra.mxu0 %v528
    %1249 = vmatpush.bf16.msra.mxu0 %v524
    %1250 = vmatpush.bf16.msra.mxu0 %v520
    %1251 = vmatpush.bf16.msra.mxu0 %v516
    %1252 = vmatpush.bf16.msra.mxu0 %v512
    %1253 = vmatpush.bf16.msra.mxu0 %v508
    %1254 = vmatpush.bf16.msra.mxu0 %v504
    %1255 = vmatpush.bf16.msra.mxu0 %v500
    %1256 = vmatmul.bf16.gmra.mxu0 %v1221
    %v1257 = vpop.f32.mrf.mxu0
    %v1258 = vadd.f32 0.0, %v1257
    %v1259 = vpop.f32.mrf.mxu0
    %1260 = vdwg.mxu0
    %1261 = vmatpush.bf16.msra.mxu0 %v529
    %1262 = vmatpush.bf16.msra.mxu0 %v525
    %1263 = vmatpush.bf16.msra.mxu0 %v521
    %1264 = vmatpush.bf16.msra.mxu0 %v517
    %1265 = vmatpush.bf16.msra.mxu0 %v513
    %1266 = vmatpush.bf16.msra.mxu0 %v509
    %1267 = vmatpush.bf16.msra.mxu0 %v505
    %1268 = vmatpush.bf16.msra.mxu0 %v501
    %1269 = vmatmul.bf16.gmra.mxu0 %v1221
    %v1270 = vpop.f32.mrf.mxu0
    %v1271 = vadd.f32 0.0, %v1270
    %v1272 = vpop.f32.mrf.mxu0
    %1273 = vdwg.mxu0
    %v1274 = vadd.f32 %v1217, %v1232
    %v1275 = vadd.f32 %v1218, %v1245
    %v1276 = vadd.f32 %v1219, %v1258
    %v1277 = vadd.f32 %v1220, %v1271
    %v1278 = vxor.u32 %v1274, 2147483648
    %v1279 = vxor.u32 %v1275, 2147483648
    %v1280 = vxor.u32 %v1276, 2147483648
    %v1281 = vmul.f32 %v1278, 1.442695
    %v1282 = vpow.pop %v1281
    %v1283 = vmul.f32 %v1279, 1.442695
    %v1284 = vpow.pop %v1283
    %v1285 = vmul.f32 %v1280, 1.442695
    %v1286 = vpow.pop %v1285
    %v1287 = vadd.f32 %v1282, 1.0
    %v1288 = vadd.f32 %v1284, 1.0
    %v1289 = vadd.f32 %v1286, 1.0
    %v1290 = vrcp.pop %v1287
    %v1291 = vmul.f32 %v1287, %v1290
    %v1292 = vsub.f32 1.0, %v1291
    %v1293 = vmul.f32 %v1290, %v1292
    %v1294 = vadd.f32 %v1290, %v1293
    %vm1295 = vweird.f32 %v1287
    %vm1296 = vweird.f32 %v1290
    %vm1297 = vmor %vm1295, %vm1296
    %v1298 = vsel %vm1297, %v1290, %v1294
    %v1299 = vand.u32 2147483647, %v1287
    %vm1300 = vcmp.eq.f32.partialorder %v1299, 8.507059e+37
    %v1301 = vand.u32 %v1287, 2147483648
    %v1302 = vor.u32 1.1754944e-38, %v1301
    %v1303 = vsel %vm1300, %v1302, %v1298
    %v1304 = vmul.f32 1.0, %v1303
    %v1305 = vrcp.pop %v1288
    %v1306 = vmul.f32 %v1288, %v1305
    %v1307 = vsub.f32 1.0, %v1306
    %v1308 = vmul.f32 %v1305, %v1307
    %v1309 = vadd.f32 %v1305, %v1308
    %vm1310 = vweird.f32 %v1288
    %vm1311 = vweird.f32 %v1305
    %vm1312 = vmor %vm1310, %vm1311
    %v1313 = vsel %vm1312, %v1305, %v1309
    %v1314 = vand.u32 2147483647, %v1288
    %vm1315 = vcmp.eq.f32.partialorder %v1314, 8.507059e+37
    %v1316 = vand.u32 %v1288, 2147483648
    %v1317 = vor.u32 1.1754944e-38, %v1316
    %v1318 = vsel %vm1315, %v1317, %v1313
    %v1319 = vmul.f32 1.0, %v1318
    %v1320 = vrcp.pop %v1289
    %v1321 = vmul.f32 %v1289, %v1320
    %v1322 = vsub.f32 1.0, %v1321
    %v1323 = vmul.f32 %v1320, %v1322
    %v1324 = vadd.f32 %v1320, %v1323
    %vm1325 = vweird.f32 %v1289
    %vm1326 = vweird.f32 %v1320
    %vm1327 = vmor %vm1325, %vm1326
    %v1328 = vsel %vm1327, %v1320, %v1324
    %v1329 = vand.u32 2147483647, %v1289
    %vm1330 = vcmp.eq.f32.partialorder %v1329, 8.507059e+37
    %v1331 = vand.u32 %v1289, 2147483648
    %v1332 = vor.u32 1.1754944e-38, %v1331
    %v1333 = vsel %vm1330, %v1332, %v1328
    %v1334 = vmul.f32 1.0, %v1333
    %v1335 = vtanh.pop %v1277
    %v1336 = vmul.f32 %v1319, %v1206
    %v1337 = vmul.f32 %v1304, %v1335
    %v1338 = vadd.f32 %v1336, %v1337
    %v1339 = vtanh.pop %v1338
    %v1340 = vmul.f32 %v1334, %v1339
    %v1341 = vmul.f32 %v1214, %v397
    %v1342 = vsub.f32 %v1340, %v1341
    %v1343 = vsub.f32 %v1342, %v397
    %vm1344 = vcmp.gt.f32.partialorder %v1343, 0.0
    %v1345 = vsel %vm1344, 1, 0
    %v1346 = vcvt.s32.f32 %v1345
    %1347 = vst [vmem:[#allocation2 + $0x28] sm:$0xff] %v1346
    %v1348 = vadd.f32 %v1216, %v1346
    %v1349 = vld [vmem:[#allocation3 + $0xc0] sm:$0xff]
    %v1350 = vld [vmem:[#allocation3 + $0xc8] sm:$0xff]
    %v1351 = vld [vmem:[#allocation3 + $0xd0] sm:$0xff]
    %v1352 = vld [vmem:[#allocation3 + $0xd8] sm:$0xff]
    %v1353 = vpack.c.bf16 %v1342, %v1342
    %1354 = vmatpush.bf16.msra.mxu0 %v526
    %1355 = vmatpush.bf16.msra.mxu0 %v522
    %1356 = vmatpush.bf16.msra.mxu0 %v518
    %1357 = vmatpush.bf16.msra.mxu0 %v514
    %1358 = vmatpush.bf16.msra.mxu0 %v510
    %1359 = vmatpush.bf16.msra.mxu0 %v506
    %1360 = vmatpush.bf16.msra.mxu0 %v502
    %1361 = vmatpush.bf16.msra.mxu0 %v498
    %1362 = vmatmul.bf16.gmra.mxu0 %v1353
    %v1363 = vpop.f32.mrf.mxu0
    %v1364 = vadd.f32 0.0, %v1363
    %v1365 = vpop.f32.mrf.mxu0
    %1366 = vdwg.mxu0
    %1367 = vmatpush.bf16.msra.mxu0 %v527
    %1368 = vmatpush.bf16.msra.mxu0 %v523
    %1369 = vmatpush.bf16.msra.mxu0 %v519
    %1370 = vmatpush.bf16.msra.mxu0 %v515
    %1371 = vmatpush.bf16.msra.mxu0 %v511
    %1372 = vmatpush.bf16.msra.mxu0 %v507
    %1373 = vmatpush.bf16.msra.mxu0 %v503
    %1374 = vmatpush.bf16.msra.mxu0 %v499
    %1375 = vmatmul.bf16.gmra.mxu0 %v1353
    %v1376 = vpop.f32.mrf.mxu0
    %v1377 = vadd.f32 0.0, %v1376
    %v1378 = vpop.f32.mrf.mxu0
    %1379 = vdwg.mxu0
    %1380 = vmatpush.bf16.msra.mxu0 %v528
    %1381 = vmatpush.bf16.msra.mxu0 %v524
    %1382 = vmatpush.bf16.msra.mxu0 %v520
    %1383 = vmatpush.bf16.msra.mxu0 %v516
    %1384 = vmatpush.bf16.msra.mxu0 %v512
    %1385 = vmatpush.bf16.msra.mxu0 %v508
    %1386 = vmatpush.bf16.msra.mxu0 %v504
    %1387 = vmatpush.bf16.msra.mxu0 %v500
    %1388 = vmatmul.bf16.gmra.mxu0 %v1353
    %v1389 = vpop.f32.mrf.mxu0
    %v1390 = vadd.f32 0.0, %v1389
    %v1391 = vpop.f32.mrf.mxu0
    %1392 = vdwg.mxu0
    %1393 = vmatpush.bf16.msra.mxu0 %v529
    %1394 = vmatpush.bf16.msra.mxu0 %v525
    %1395 = vmatpush.bf16.msra.mxu0 %v521
    %1396 = vmatpush.bf16.msra.mxu0 %v517
    %1397 = vmatpush.bf16.msra.mxu0 %v513
    %1398 = vmatpush.bf16.msra.mxu0 %v509
    %1399 = vmatpush.bf16.msra.mxu0 %v505
    %1400 = vmatpush.bf16.msra.mxu0 %v501
    %1401 = vmatmul.bf16.gmra.mxu0 %v1353
    %v1402 = vpop.f32.mrf.mxu0
    %v1403 = vadd.f32 0.0, %v1402
    %v1404 = vpop.f32.mrf.mxu0
    %1405 = vdwg.mxu0
    %v1406 = vadd.f32 %v1349, %v1364
    %v1407 = vadd.f32 %v1350, %v1377
    %v1408 = vadd.f32 %v1351, %v1390
    %v1409 = vadd.f32 %v1352, %v1403
    %v1410 = vxor.u32 %v1406, 2147483648
    %v1411 = vxor.u32 %v1407, 2147483648
    %v1412 = vxor.u32 %v1408, 2147483648
    %v1413 = vmul.f32 %v1410, 1.442695
    %v1414 = vpow.pop %v1413
    %v1415 = vmul.f32 %v1411, 1.442695
    %v1416 = vpow.pop %v1415
    %v1417 = vmul.f32 %v1412, 1.442695
    %v1418 = vpow.pop %v1417
    %v1419 = vadd.f32 %v1414, 1.0
    %v1420 = vadd.f32 %v1416, 1.0
    %v1421 = vadd.f32 %v1418, 1.0
    %v1422 = vrcp.pop %v1419
    %v1423 = vmul.f32 %v1419, %v1422
    %v1424 = vsub.f32 1.0, %v1423
    %v1425 = vmul.f32 %v1422, %v1424
    %v1426 = vadd.f32 %v1422, %v1425
    %vm1427 = vweird.f32 %v1419
    %vm1428 = vweird.f32 %v1422
    %vm1429 = vmor %vm1427, %vm1428
    %v1430 = vsel %vm1429, %v1422, %v1426
    %v1431 = vand.u32 2147483647, %v1419
    %vm1432 = vcmp.eq.f32.partialorder %v1431, 8.507059e+37
    %v1433 = vand.u32 %v1419, 2147483648
    %v1434 = vor.u32 1.1754944e-38, %v1433
    %v1435 = vsel %vm1432, %v1434, %v1430
    %v1436 = vmul.f32 1.0, %v1435
    %v1437 = vrcp.pop %v1420
    %v1438 = vmul.f32 %v1420, %v1437
    %v1439 = vsub.f32 1.0, %v1438
    %v1440 = vmul.f32 %v1437, %v1439
    %v1441 = vadd.f32 %v1437, %v1440
    %vm1442 = vweird.f32 %v1420
    %vm1443 = vweird.f32 %v1437
    %vm1444 = vmor %vm1442, %vm1443
    %v1445 = vsel %vm1444, %v1437, %v1441
    %v1446 = vand.u32 2147483647, %v1420
    %vm1447 = vcmp.eq.f32.partialorder %v1446, 8.507059e+37
    %v1448 = vand.u32 %v1420, 2147483648
    %v1449 = vor.u32 1.1754944e-38, %v1448
    %v1450 = vsel %vm1447, %v1449, %v1445
    %v1451 = vmul.f32 1.0, %v1450
    %v1452 = vrcp.pop %v1421
    %v1453 = vmul.f32 %v1421, %v1452
    %v1454 = vsub.f32 1.0, %v1453
    %v1455 = vmul.f32 %v1452, %v1454
    %v1456 = vadd.f32 %v1452, %v1455
    %vm1457 = vweird.f32 %v1421
    %vm1458 = vweird.f32 %v1452
    %vm1459 = vmor %vm1457, %vm1458
    %v1460 = vsel %vm1459, %v1452, %v1456
    %v1461 = vand.u32 2147483647, %v1421
    %vm1462 = vcmp.eq.f32.partialorder %v1461, 8.507059e+37
    %v1463 = vand.u32 %v1421, 2147483648
    %v1464 = vor.u32 1.1754944e-38, %v1463
    %v1465 = vsel %vm1462, %v1464, %v1460
    %v1466 = vmul.f32 1.0, %v1465
    %v1467 = vtanh.pop %v1409
    %v1468 = vmul.f32 %v1451, %v1338
    %v1469 = vmul.f32 %v1436, %v1467
    %v1470 = vadd.f32 %v1468, %v1469
    %v1471 = vtanh.pop %v1470
    %v1472 = vmul.f32 %v1466, %v1471
    %v1473 = vmul.f32 %v1346, %v397
    %v1474 = vsub.f32 %v1472, %v1473
    %v1475 = vsub.f32 %v1474, %v397
    %vm1476 = vcmp.gt.f32.partialorder %v1475, 0.0
    %v1477 = vsel %vm1476, 1, 0
    %v1478 = vcvt.s32.f32 %v1477
    %1479 = vst [vmem:[#allocation2 + $0x30] sm:$0xff] %v1478
    %v1480 = vadd.f32 %v1348, %v1478
    %v1481 = vld [vmem:[#allocation3 + $0xe0] sm:$0xff]
    %v1482 = vld [vmem:[#allocation3 + $0xe8] sm:$0xff]
    %v1483 = vld [vmem:[#allocation3 + $0xf0] sm:$0xff]
    %v1484 = vld [vmem:[#allocation3 + $0xf8] sm:$0xff]
    %v1485 = vpack.c.bf16 %v1474, %v1474
    %1486 = vmatpush.bf16.msra.mxu0 %v526
    %1487 = vmatpush.bf16.msra.mxu0 %v522
    %1488 = vmatpush.bf16.msra.mxu0 %v518
    %1489 = vmatpush.bf16.msra.mxu0 %v514
    %1490 = vmatpush.bf16.msra.mxu0 %v510
    %1491 = vmatpush.bf16.msra.mxu0 %v506
    %1492 = vmatpush.bf16.msra.mxu0 %v502
    %1493 = vmatpush.bf16.msra.mxu0 %v498
    %1494 = vmatmul.bf16.gmra.mxu0 %v1485
    %v1495 = vpop.f32.mrf.mxu0
    %v1496 = vadd.f32 0.0, %v1495
    %v1497 = vpop.f32.mrf.mxu0
    %1498 = vdwg.mxu0
    %1499 = vmatpush.bf16.msra.mxu0 %v527
    %1500 = vmatpush.bf16.msra.mxu0 %v523
    %1501 = vmatpush.bf16.msra.mxu0 %v519
    %1502 = vmatpush.bf16.msra.mxu0 %v515
    %1503 = vmatpush.bf16.msra.mxu0 %v511
    %1504 = vmatpush.bf16.msra.mxu0 %v507
    %1505 = vmatpush.bf16.msra.mxu0 %v503
    %1506 = vmatpush.bf16.msra.mxu0 %v499
    %1507 = vmatmul.bf16.gmra.mxu0 %v1485
    %v1508 = vpop.f32.mrf.mxu0
    %v1509 = vadd.f32 0.0, %v1508
    %v1510 = vpop.f32.mrf.mxu0
    %1511 = vdwg.mxu0
    %1512 = vmatpush.bf16.msra.mxu0 %v528
    %1513 = vmatpush.bf16.msra.mxu0 %v524
    %1514 = vmatpush.bf16.msra.mxu0 %v520
    %1515 = vmatpush.bf16.msra.mxu0 %v516
    %1516 = vmatpush.bf16.msra.mxu0 %v512
    %1517 = vmatpush.bf16.msra.mxu0 %v508
    %1518 = vmatpush.bf16.msra.mxu0 %v504
    %1519 = vmatpush.bf16.msra.mxu0 %v500
    %1520 = vmatmul.bf16.gmra.mxu0 %v1485
    %v1521 = vpop.f32.mrf.mxu0
    %v1522 = vadd.f32 0.0, %v1521
    %v1523 = vpop.f32.mrf.mxu0
    %1524 = vdwg.mxu0
    %1525 = vmatpush.bf16.msra.mxu0 %v529
    %1526 = vmatpush.bf16.msra.mxu0 %v525
    %1527 = vmatpush.bf16.msra.mxu0 %v521
    %1528 = vmatpush.bf16.msra.mxu0 %v517
    %1529 = vmatpush.bf16.msra.mxu0 %v513
    %1530 = vmatpush.bf16.msra.mxu0 %v509
    %1531 = vmatpush.bf16.msra.mxu0 %v505
    %1532 = vmatpush.bf16.msra.mxu0 %v501
    %1533 = vmatmul.bf16.gmra.mxu0 %v1485
    %v1534 = vpop.f32.mrf.mxu0
    %v1535 = vadd.f32 0.0, %v1534
    %v1536 = vpop.f32.mrf.mxu0
    %1537 = vdwg.mxu0
    %v1538 = vadd.f32 %v1481, %v1496
    %v1539 = vadd.f32 %v1482, %v1509
    %v1540 = vadd.f32 %v1483, %v1522
    %v1541 = vadd.f32 %v1484, %v1535
    %v1542 = vxor.u32 %v1538, 2147483648
    %v1543 = vxor.u32 %v1539, 2147483648
    %v1544 = vxor.u32 %v1540, 2147483648
    %v1545 = vmul.f32 %v1542, 1.442695
    %v1546 = vpow.pop %v1545
    %v1547 = vmul.f32 %v1543, 1.442695
    %v1548 = vpow.pop %v1547
    %v1549 = vmul.f32 %v1544, 1.442695
    %v1550 = vpow.pop %v1549
    %v1551 = vadd.f32 %v1546, 1.0
    %v1552 = vadd.f32 %v1548, 1.0
    %v1553 = vadd.f32 %v1550, 1.0
    %v1554 = vrcp.pop %v1551
    %v1555 = vmul.f32 %v1551, %v1554
    %v1556 = vsub.f32 1.0, %v1555
    %v1557 = vmul.f32 %v1554, %v1556
    %v1558 = vadd.f32 %v1554, %v1557
    %vm1559 = vweird.f32 %v1551
    %vm1560 = vweird.f32 %v1554
    %vm1561 = vmor %vm1559, %vm1560
    %v1562 = vsel %vm1561, %v1554, %v1558
    %v1563 = vand.u32 2147483647, %v1551
    %vm1564 = vcmp.eq.f32.partialorder %v1563, 8.507059e+37
    %v1565 = vand.u32 %v1551, 2147483648
    %v1566 = vor.u32 1.1754944e-38, %v1565
    %v1567 = vsel %vm1564, %v1566, %v1562
    %v1568 = vmul.f32 1.0, %v1567
    %v1569 = vrcp.pop %v1552
    %v1570 = vmul.f32 %v1552, %v1569
    %v1571 = vsub.f32 1.0, %v1570
    %v1572 = vmul.f32 %v1569, %v1571
    %v1573 = vadd.f32 %v1569, %v1572
    %vm1574 = vweird.f32 %v1552
    %vm1575 = vweird.f32 %v1569
    %vm1576 = vmor %vm1574, %vm1575
    %v1577 = vsel %vm1576, %v1569, %v1573
    %v1578 = vand.u32 2147483647, %v1552
    %vm1579 = vcmp.eq.f32.partialorder %v1578, 8.507059e+37
    %v1580 = vand.u32 %v1552, 2147483648
    %v1581 = vor.u32 1.1754944e-38, %v1580
    %v1582 = vsel %vm1579, %v1581, %v1577
    %v1583 = vmul.f32 1.0, %v1582
    %v1584 = vrcp.pop %v1553
    %v1585 = vmul.f32 %v1553, %v1584
    %v1586 = vsub.f32 1.0, %v1585
    %v1587 = vmul.f32 %v1584, %v1586
    %v1588 = vadd.f32 %v1584, %v1587
    %vm1589 = vweird.f32 %v1553
    %vm1590 = vweird.f32 %v1584
    %vm1591 = vmor %vm1589, %vm1590
    %v1592 = vsel %vm1591, %v1584, %v1588
    %v1593 = vand.u32 2147483647, %v1553
    %vm1594 = vcmp.eq.f32.partialorder %v1593, 8.507059e+37
    %v1595 = vand.u32 %v1553, 2147483648
    %v1596 = vor.u32 1.1754944e-38, %v1595
    %v1597 = vsel %vm1594, %v1596, %v1592
    %v1598 = vmul.f32 1.0, %v1597
    %v1599 = vtanh.pop %v1541
    %v1600 = vmul.f32 %v1583, %v1470
    %v1601 = vmul.f32 %v1568, %v1599
    %v1602 = vadd.f32 %v1600, %v1601
    %v1603 = vtanh.pop %v1602
    %v1604 = vmul.f32 %v1598, %v1603
    %v1605 = vmul.f32 %v1478, %v397
    %v1606 = vsub.f32 %v1604, %v1605
    %v1607 = vsub.f32 %v1606, %v397
    %vm1608 = vcmp.gt.f32.partialorder %v1607, 0.0
    %v1609 = vsel %vm1608, 1, 0
    %v1610 = vcvt.s32.f32 %v1609
    %1611 = vst [vmem:[#allocation2 + $0x38] sm:$0xff] %v1610
    %v1612 = vadd.f32 %v1480, %v1610
    %v1613 = vlaneseq
    %v1614 = vshrl.u32 %v1613, 7
    %vm1615 = vcmp.lt.s32.totalorder %v1614, 2
    %v1616 = vsel %vm1615, 1, 0
    %v1617 = vcvt.s32.f32 %v1616
    %v1618 = vmul.f32 %v1612, %v1617
    %v1619 = vrot.slane %v1618, 4
    %v1620 = vadd.f32 %v1618, %v1619
    %v1621 = vrot.slane %v1620, 2
    %v1622 = vadd.f32 %v1620, %v1621
    %v1623 = vrot.slane %v1622, 1
    %v1624 = vadd.f32 %v1622, %v1623
    %v1625 = vmul.f32 %v1624, 0.0625
    %v1626 = vmul.f32 %v1625, %v1625
    %v1627 = vsub.f32 %v1625, %v1626
    %v1628 = vld [vmem:[%s9] sm:$0x1]
    %v1629 = vadd.f32 %v1627, 1e-05
    %v1630 = vrsqrt.pop %v1629
    %v1631 = vmul.f32 %v1630, %v1629
    %v1632 = vmul.f32 %v1631, %v1630
    %v1633 = vmul.f32 0.5, %v1632
    %v1634 = vsub.f32 1.5, %v1633
    %v1635 = vmul.f32 %v1630, %v1634
    %vm1636 = vweird.f32 %v1629
    %vm1637 = vweird.f32 %v1630
    %vm1638 = vmor %vm1636, %vm1637
    %v1639 = vsel %vm1638, %v1630, %v1635
    %v1640 = vmul.f32 %v1628, %v1639
    %v1641 = vld [vmem:[%s10] sm:$0x1]
    %v1642 = vmul.f32 %v1625, %v1640
    %v1643 = vsub.f32 %v1641, %v1642
    %v1644 = vld [vmem:[#allocation10] sm:$0xff]
    %v1645 = vld [vmem:[#allocation10 + $0x8] sm:$0xff]
    %v1646 = vld [vmem:[#allocation10 + $0x10] sm:$0xff]
    %v1647 = vld [vmem:[#allocation10 + $0x18] sm:$0xff]
    %v1648 = vld [vmem:[#allocation10 + $0x20] sm:$0xff]
    %v1649 = vld [vmem:[#allocation10 + $0x28] sm:$0xff]
    %v1650 = vld [vmem:[#allocation10 + $0x30] sm:$0xff]
    %v1651 = vld [vmem:[#allocation10 + $0x38] sm:$0xff]
    %v1652 = vld [vmem:[#allocation10 + $0x40] sm:$0xff]
    %v1653 = vld [vmem:[#allocation10 + $0x48] sm:$0xff]
    %v1654 = vld [vmem:[#allocation10 + $0x50] sm:$0xff]
    %v1655 = vld [vmem:[#allocation10 + $0x58] sm:$0xff]
    %v1656 = vld [vmem:[#allocation10 + $0x60] sm:$0xff]
    %v1657 = vld [vmem:[#allocation10 + $0x68] sm:$0xff]
    %v1658 = vld [vmem:[#allocation10 + $0x70] sm:$0xff]
    %v1659 = vld [vmem:[#allocation10 + $0x78] sm:$0xff]
    %v1660 = vld [vmem:[#allocation10 + $0x80] sm:$0xff]
    %v1661 = vld [vmem:[#allocation10 + $0x88] sm:$0xff]
    %v1662 = vld [vmem:[#allocation10 + $0x90] sm:$0xff]
    %v1663 = vld [vmem:[#allocation10 + $0x98] sm:$0xff]
    %v1664 = vld [vmem:[#allocation10 + $0xa0] sm:$0xff]
    %v1665 = vld [vmem:[#allocation10 + $0xa8] sm:$0xff]
    %v1666 = vld [vmem:[#allocation10 + $0xb0] sm:$0xff]
    %v1667 = vld [vmem:[#allocation10 + $0xb8] sm:$0xff]
    %v1668 = vld [vmem:[#allocation10 + $0xc0] sm:$0xff]
    %v1669 = vld [vmem:[#allocation10 + $0xc8] sm:$0xff]
    %v1670 = vld [vmem:[#allocation10 + $0xd0] sm:$0xff]
    %v1671 = vld [vmem:[#allocation10 + $0xd8] sm:$0xff]
    %v1672 = vld [vmem:[#allocation10 + $0xe0] sm:$0xff]
    %v1673 = vld [vmem:[#allocation10 + $0xe8] sm:$0xff]
    %v1674 = vld [vmem:[#allocation10 + $0xf0] sm:$0xff]
    %v1675 = vld [vmem:[#allocation10 + $0xf8] sm:$0xff]
    %v1676 = vld [vmem:[#allocation10 + $0x100] sm:$0xff]
    %v1677 = vld [vmem:[#allocation10 + $0x108] sm:$0xff]
    %v1678 = vld [vmem:[#allocation10 + $0x110] sm:$0xff]
    %v1679 = vld [vmem:[#allocation10 + $0x118] sm:$0xff]
    %v1680 = vld [vmem:[#allocation10 + $0x120] sm:$0xff]
    %v1681 = vld [vmem:[#allocation10 + $0x128] sm:$0xff]
    %v1682 = vld [vmem:[#allocation10 + $0x130] sm:$0xff]
    %v1683 = vld [vmem:[#allocation10 + $0x138] sm:$0xff]
    %v1684 = vld [vmem:[#allocation10 + $0x140] sm:$0xff]
    %v1685 = vld [vmem:[#allocation10 + $0x148] sm:$0xff]
    %v1686 = vld [vmem:[#allocation10 + $0x150] sm:$0xff]
    %v1687 = vld [vmem:[#allocation10 + $0x158] sm:$0xff]
    %v1688 = vld [vmem:[#allocation10 + $0x160] sm:$0xff]
    %v1689 = vld [vmem:[#allocation10 + $0x168] sm:$0xff]
    %v1690 = vld [vmem:[#allocation10 + $0x170] sm:$0xff]
    %v1691 = vld [vmem:[#allocation10 + $0x178] sm:$0xff]
    %v1692 = vld [vmem:[#allocation10 + $0x180] sm:$0xff]
    %v1693 = vld [vmem:[#allocation10 + $0x188] sm:$0xff]
    %v1694 = vld [vmem:[#allocation10 + $0x190] sm:$0xff]
    %v1695 = vld [vmem:[#allocation10 + $0x198] sm:$0xff]
    %v1696 = vld [vmem:[#allocation10 + $0x1a0] sm:$0xff]
    %v1697 = vld [vmem:[#allocation10 + $0x1a8] sm:$0xff]
    %v1698 = vld [vmem:[#allocation10 + $0x1b0] sm:$0xff]
    %v1699 = vld [vmem:[#allocation10 + $0x1b8] sm:$0xff]
    %v1700 = vld [vmem:[#allocation10 + $0x1c0] sm:$0xff]
    %v1701 = vld [vmem:[#allocation10 + $0x1c8] sm:$0xff]
    %v1702 = vld [vmem:[#allocation10 + $0x1d0] sm:$0xff]
    %v1703 = vld [vmem:[#allocation10 + $0x1d8] sm:$0xff]
    %v1704 = vld [vmem:[#allocation10 + $0x1e0] sm:$0xff]
    %v1705 = vld [vmem:[#allocation10 + $0x1e8] sm:$0xff]
    %v1706 = vld [vmem:[#allocation10 + $0x1f0] sm:$0xff]
    %v1707 = vld [vmem:[#allocation10 + $0x1f8] sm:$0xff]
    %v1709 = vperm.slane %v1640, 0
    %v1711 = vmul.f32 %v1644, %v1709
    %v1712 = vmul.f32 %v1645, %v1709
    %v1713 = vmul.f32 %v1646, %v1709
    %v1714 = vmul.f32 %v1647, %v1709
    %v1715 = vmul.f32 %v1648, %v1709
    %v1716 = vmul.f32 %v1649, %v1709
    %v1717 = vmul.f32 %v1650, %v1709
    %v1718 = vmul.f32 %v1651, %v1709
    %v1719 = vmul.f32 %v1652, %v1709
    %v1720 = vmul.f32 %v1653, %v1709
    %v1721 = vmul.f32 %v1654, %v1709
    %v1722 = vmul.f32 %v1655, %v1709
    %v1723 = vmul.f32 %v1656, %v1709
    %v1724 = vmul.f32 %v1657, %v1709
    %v1725 = vmul.f32 %v1658, %v1709
    %v1726 = vmul.f32 %v1659, %v1709
    %v1727 = vmul.f32 %v1660, %v1709
    %v1728 = vmul.f32 %v1661, %v1709
    %v1729 = vmul.f32 %v1662, %v1709
    %v1730 = vmul.f32 %v1663, %v1709
    %v1731 = vmul.f32 %v1664, %v1709
    %v1732 = vmul.f32 %v1665, %v1709
    %v1733 = vmul.f32 %v1666, %v1709
    %v1734 = vmul.f32 %v1667, %v1709
    %v1735 = vmul.f32 %v1668, %v1709
    %v1736 = vmul.f32 %v1669, %v1709
    %v1737 = vmul.f32 %v1670, %v1709
    %v1738 = vmul.f32 %v1671, %v1709
    %v1739 = vmul.f32 %v1672, %v1709
    %v1740 = vmul.f32 %v1673, %v1709
    %v1741 = vmul.f32 %v1674, %v1709
    %v1742 = vmul.f32 %v1675, %v1709
    %v1743 = vmul.f32 %v1676, %v1709
    %v1744 = vmul.f32 %v1677, %v1709
    %v1745 = vmul.f32 %v1678, %v1709
    %v1746 = vmul.f32 %v1679, %v1709
    %v1747 = vmul.f32 %v1680, %v1709
    %v1748 = vmul.f32 %v1681, %v1709
    %v1749 = vmul.f32 %v1682, %v1709
    %v1750 = vmul.f32 %v1683, %v1709
    %v1751 = vmul.f32 %v1684, %v1709
    %v1752 = vmul.f32 %v1685, %v1709
    %v1753 = vmul.f32 %v1686, %v1709
    %v1754 = vmul.f32 %v1687, %v1709
    %v1755 = vmul.f32 %v1688, %v1709
    %v1756 = vmul.f32 %v1689, %v1709
    %v1757 = vmul.f32 %v1690, %v1709
    %v1758 = vmul.f32 %v1691, %v1709
    %v1759 = vmul.f32 %v1692, %v1709
    %v1760 = vmul.f32 %v1693, %v1709
    %v1761 = vmul.f32 %v1694, %v1709
    %v1762 = vmul.f32 %v1695, %v1709
    %v1763 = vmul.f32 %v1696, %v1709
    %v1764 = vmul.f32 %v1697, %v1709
    %v1765 = vmul.f32 %v1698, %v1709
    %v1766 = vmul.f32 %v1699, %v1709
    %v1767 = vmul.f32 %v1700, %v1709
    %v1768 = vmul.f32 %v1701, %v1709
    %v1769 = vmul.f32 %v1702, %v1709
    %v1770 = vmul.f32 %v1703, %v1709
    %v1771 = vmul.f32 %v1704, %v1709
    %v1772 = vmul.f32 %v1705, %v1709
    %v1773 = vmul.f32 %v1706, %v1709
    %v1774 = vmul.f32 %v1707, %v1709
    %v1775 = vld [vmem:[%s7] sm:$0xf]
    %v1777 = vperm.slane %v1775, 0
    %v1778 = vperm.slane %v1775, 1
    %v1779 = vperm.slane %v1775, 2
    %v1780 = vperm.slane %v1775, 3
    %1785 = vmatpush.xpose.msra.mxu0 %v1659
    %1786 = vmatpush.xpose.msra.mxu0 %v1658
    %1787 = vmatpush.xpose.msra.mxu0 %v1657
    %1788 = vmatpush.xpose.msra.mxu0 %v1656
    %1789 = vmatpush.xpose.msra.mxu0 %v1655
    %1790 = vmatpush.xpose.msra.mxu0 %v1654
    %1791 = vmatpush.xpose.msra.mxu0 %v1653
    %1792 = vmatpush.xpose.msra.mxu0 %v1652
    %1793 = vmatpush.xpose.msra.mxu0 %v1651
    %1794 = vmatpush.xpose.msra.mxu0 %v1650
    %1795 = vmatpush.xpose.msra.mxu0 %v1649
    %1796 = vmatpush.xpose.msra.mxu0 %v1648
    %1797 = vmatpush.xpose.msra.mxu0 %v1647
    %1798 = vmatpush.xpose.msra.mxu0 %v1646
    %1799 = vmatpush.xpose.msra.mxu0 %v1645
    %1800 = vmatpush.xpose.msra.mxu0 %v1644
    %1801 = vmatmul.f32.gmra.mxu0 %v1643
    %v1802 = vpop.f32.mrf.mxu0
    %v1803 = vadd.f32 %v1777, %v1802
    %1804 = vdwg.mxu0
    %1805 = vmatpush.xpose.msra.mxu0 %v1675
    %1806 = vmatpush.xpose.msra.mxu0 %v1674
    %1807 = vmatpush.xpose.msra.mxu0 %v1673
    %1808 = vmatpush.xpose.msra.mxu0 %v1672
    %1809 = vmatpush.xpose.msra.mxu0 %v1671
    %1810 = vmatpush.xpose.msra.mxu0 %v1670
    %1811 = vmatpush.xpose.msra.mxu0 %v1669
    %1812 = vmatpush.xpose.msra.mxu0 %v1668
    %1813 = vmatpush.xpose.msra.mxu0 %v1667
    %1814 = vmatpush.xpose.msra.mxu0 %v1666
    %1815 = vmatpush.xpose.msra.mxu0 %v1665
    %1816 = vmatpush.xpose.msra.mxu0 %v1664
    %1817 = vmatpush.xpose.msra.mxu0 %v1663
    %1818 = vmatpush.xpose.msra.mxu0 %v1662
    %1819 = vmatpush.xpose.msra.mxu0 %v1661
    %1820 = vmatpush.xpose.msra.mxu0 %v1660
    %1821 = vmatmul.f32.gmra.mxu0 %v1643
    %v1822 = vpop.f32.mrf.mxu0
    %v1823 = vadd.f32 %v1778, %v1822
    %1824 = vdwg.mxu0
    %1825 = vmatpush.xpose.msra.mxu0 %v1691
    %1826 = vmatpush.xpose.msra.mxu0 %v1690
    %1827 = vmatpush.xpose.msra.mxu0 %v1689
    %1828 = vmatpush.xpose.msra.mxu0 %v1688
    %1829 = vmatpush.xpose.msra.mxu0 %v1687
    %1830 = vmatpush.xpose.msra.mxu0 %v1686
    %1831 = vmatpush.xpose.msra.mxu0 %v1685
    %1832 = vmatpush.xpose.msra.mxu0 %v1684
    %1833 = vmatpush.xpose.msra.mxu0 %v1683
    %1834 = vmatpush.xpose.msra.mxu0 %v1682
    %1835 = vmatpush.xpose.msra.mxu0 %v1681
    %1836 = vmatpush.xpose.msra.mxu0 %v1680
    %1837 = vmatpush.xpose.msra.mxu0 %v1679
    %1838 = vmatpush.xpose.msra.mxu0 %v1678
    %1839 = vmatpush.xpose.msra.mxu0 %v1677
    %1840 = vmatpush.xpose.msra.mxu0 %v1676
    %1841 = vmatmul.f32.gmra.mxu0 %v1643
    %v1842 = vpop.f32.mrf.mxu0
    %v1843 = vadd.f32 %v1779, %v1842
    %1844 = vdwg.mxu0
    %1845 = vmatpush.xpose.msra.mxu0 %v1707
    %1846 = vmatpush.xpose.msra.mxu0 %v1706
    %1847 = vmatpush.xpose.msra.mxu0 %v1705
    %1848 = vmatpush.xpose.msra.mxu0 %v1704
    %1849 = vmatpush.xpose.msra.mxu0 %v1703
    %1850 = vmatpush.xpose.msra.mxu0 %v1702
    %1851 = vmatpush.xpose.msra.mxu0 %v1701
    %1852 = vmatpush.xpose.msra.mxu0 %v1700
    %1853 = vmatpush.xpose.msra.mxu0 %v1699
    %1854 = vmatpush.xpose.msra.mxu0 %v1698
    %1855 = vmatpush.xpose.msra.mxu0 %v1697
    %1856 = vmatpush.xpose.msra.mxu0 %v1696
    %1857 = vmatpush.xpose.msra.mxu0 %v1695
    %1858 = vmatpush.xpose.msra.mxu0 %v1694
    %1859 = vmatpush.xpose.msra.mxu0 %v1693
    %1860 = vmatpush.xpose.msra.mxu0 %v1692
    %1861 = vmatmul.f32.gmra.mxu0 %v1643
    %v1862 = vpop.f32.mrf.mxu0
    %v1863 = vadd.f32 %v1780, %v1862
    %1864 = vdwg.mxu0
    %v1865 = vld [vmem:[#allocation2] sm:$0xff]
    %v1866 = vld [vmem:[#allocation2 + $0x8] sm:$0xff]
    %v1867 = vld [vmem:[#allocation2 + $0x10] sm:$0xff]
    %v1868 = vld [vmem:[#allocation2 + $0x18] sm:$0xff]
    %v1869 = vld [vmem:[#allocation2 + $0x20] sm:$0xff]
    %v1870 = vld [vmem:[#allocation2 + $0x28] sm:$0xff]
    %v1871 = vld [vmem:[#allocation2 + $0x30] sm:$0xff]
    %v1872 = vld [vmem:[#allocation2 + $0x38] sm:$0xff]
    %v1873 = vperm.slane %v1803, 0
    %v1874 = vperm.slane %v1823, 0
    %v1875 = vperm.slane %v1843, 0
    %v1876 = vperm.slane %v1863, 0
    %1877 = vmatpush.xpose.msra.mxu0 %v1726
    %1878 = vmatpush.xpose.msra.mxu0 %v1725
    %1879 = vmatpush.xpose.msra.mxu0 %v1724
    %1880 = vmatpush.xpose.msra.mxu0 %v1723
    %1881 = vmatpush.xpose.msra.mxu0 %v1722
    %1882 = vmatpush.xpose.msra.mxu0 %v1721
    %1883 = vmatpush.xpose.msra.mxu0 %v1720
    %1884 = vmatpush.xpose.msra.mxu0 %v1719
    %1885 = vmatpush.xpose.msra.mxu0 %v1718
    %1886 = vmatpush.xpose.msra.mxu0 %v1717
    %1887 = vmatpush.xpose.msra.mxu0 %v1716
    %1888 = vmatpush.xpose.msra.mxu0 %v1715
    %1889 = vmatpush.xpose.msra.mxu0 %v1714
    %1890 = vmatpush.xpose.msra.mxu0 %v1713
    %1891 = vmatpush.xpose.msra.mxu0 %v1712
    %1892 = vmatpush.xpose.msra.mxu0 %v1711
    %1893 = vmatmul.f32.gmra.mxu0 %v1865
    %v1894 = vpop.f32.mrf.mxu0
    %v1895 = vadd.f32 %v1873, %v1894
    %1896 = vmatmul.f32.gmra.mxu0 %v1866
    %v1897 = vpop.f32.mrf.mxu0
    %v1898 = vadd.f32 %v1873, %v1897
    %1899 = vmatmul.f32.gmra.mxu0 %v1867
    %v1900 = vpop.f32.mrf.mxu0
    %v1901 = vadd.f32 %v1873, %v1900
    %1902 = vmatmul.f32.gmra.mxu0 %v1868
    %v1903 = vpop.f32.mrf.mxu0
    %v1904 = vadd.f32 %v1873, %v1903
    %1905 = vmatmul.f32.gmra.mxu0 %v1869
    %v1906 = vpop.f32.mrf.mxu0
    %v1907 = vadd.f32 %v1873, %v1906
    %1908 = vmatmul.f32.gmra.mxu0 %v1870
    %v1909 = vpop.f32.mrf.mxu0
    %v1910 = vadd.f32 %v1873, %v1909
    %1911 = vmatmul.f32.gmra.mxu0 %v1871
    %v1912 = vpop.f32.mrf.mxu0
    %v1913 = vadd.f32 %v1873, %v1912
    %1914 = vmatmul.f32.gmra.mxu0 %v1872
    %v1915 = vpop.f32.mrf.mxu0
    %v1916 = vadd.f32 %v1873, %v1915
    %1917 = vdwg.mxu0
    %1918 = vmatpush.xpose.msra.mxu0 %v1742
    %1919 = vmatpush.xpose.msra.mxu0 %v1741
    %1920 = vmatpush.xpose.msra.mxu0 %v1740
    %1921 = vmatpush.xpose.msra.mxu0 %v1739
    %1922 = vmatpush.xpose.msra.mxu0 %v1738
    %1923 = vmatpush.xpose.msra.mxu0 %v1737
    %1924 = vmatpush.xpose.msra.mxu0 %v1736
    %1925 = vmatpush.xpose.msra.mxu0 %v1735
    %1926 = vmatpush.xpose.msra.mxu0 %v1734
    %1927 = vmatpush.xpose.msra.mxu0 %v1733
    %1928 = vmatpush.xpose.msra.mxu0 %v1732
    %1929 = vmatpush.xpose.msra.mxu0 %v1731
    %1930 = vmatpush.xpose.msra.mxu0 %v1730
    %1931 = vmatpush.xpose.msra.mxu0 %v1729
    %1932 = vmatpush.xpose.msra.mxu0 %v1728
    %1933 = vmatpush.xpose.msra.mxu0 %v1727
    %1934 = vmatmul.f32.gmra.mxu0 %v1865
    %v1935 = vpop.f32.mrf.mxu0
    %v1936 = vadd.f32 %v1874, %v1935
    %1937 = vmatmul.f32.gmra.mxu0 %v1866
    %v1938 = vpop.f32.mrf.mxu0
    %v1939 = vadd.f32 %v1874, %v1938
    %1940 = vmatmul.f32.gmra.mxu0 %v1867
    %v1941 = vpop.f32.mrf.mxu0
    %v1942 = vadd.f32 %v1874, %v1941
    %1943 = vmatmul.f32.gmra.mxu0 %v1868
    %v1944 = vpop.f32.mrf.mxu0
    %v1945 = vadd.f32 %v1874, %v1944
    %1946 = vmatmul.f32.gmra.mxu0 %v1869
    %v1947 = vpop.f32.mrf.mxu0
    %v1948 = vadd.f32 %v1874, %v1947
    %1949 = vmatmul.f32.gmra.mxu0 %v1870
    %v1950 = vpop.f32.mrf.mxu0
    %v1951 = vadd.f32 %v1874, %v1950
    %1952 = vmatmul.f32.gmra.mxu0 %v1871
    %v1953 = vpop.f32.mrf.mxu0
    %v1954 = vadd.f32 %v1874, %v1953
    %1955 = vmatmul.f32.gmra.mxu0 %v1872
    %v1956 = vpop.f32.mrf.mxu0
    %v1957 = vadd.f32 %v1874, %v1956
    %1958 = vdwg.mxu0
    %1959 = vmatpush.xpose.msra.mxu0 %v1758
    %1960 = vmatpush.xpose.msra.mxu0 %v1757
    %1961 = vmatpush.xpose.msra.mxu0 %v1756
    %1962 = vmatpush.xpose.msra.mxu0 %v1755
    %1963 = vmatpush.xpose.msra.mxu0 %v1754
    %1964 = vmatpush.xpose.msra.mxu0 %v1753
    %1965 = vmatpush.xpose.msra.mxu0 %v1752
    %1966 = vmatpush.xpose.msra.mxu0 %v1751
    %1967 = vmatpush.xpose.msra.mxu0 %v1750
    %1968 = vmatpush.xpose.msra.mxu0 %v1749
    %1969 = vmatpush.xpose.msra.mxu0 %v1748
    %1970 = vmatpush.xpose.msra.mxu0 %v1747
    %1971 = vmatpush.xpose.msra.mxu0 %v1746
    %1972 = vmatpush.xpose.msra.mxu0 %v1745
    %1973 = vmatpush.xpose.msra.mxu0 %v1744
    %1974 = vmatpush.xpose.msra.mxu0 %v1743
    %1975 = vmatmul.f32.gmra.mxu0 %v1865
    %v1976 = vpop.f32.mrf.mxu0
    %v1977 = vadd.f32 %v1875, %v1976
    %1978 = vmatmul.f32.gmra.mxu0 %v1866
    %v1979 = vpop.f32.mrf.mxu0
    %v1980 = vadd.f32 %v1875, %v1979
    %1981 = vmatmul.f32.gmra.mxu0 %v1867
    %v1982 = vpop.f32.mrf.mxu0
    %v1983 = vadd.f32 %v1875, %v1982
    %1984 = vmatmul.f32.gmra.mxu0 %v1868
    %v1985 = vpop.f32.mrf.mxu0
    %v1986 = vadd.f32 %v1875, %v1985
    %1987 = vmatmul.f32.gmra.mxu0 %v1869
    %v1988 = vpop.f32.mrf.mxu0
    %v1989 = vadd.f32 %v1875, %v1988
    %1990 = vmatmul.f32.gmra.mxu0 %v1870
    %v1991 = vpop.f32.mrf.mxu0
    %v1992 = vadd.f32 %v1875, %v1991
    %1993 = vmatmul.f32.gmra.mxu0 %v1871
    %v1994 = vpop.f32.mrf.mxu0
    %v1995 = vadd.f32 %v1875, %v1994
    %1996 = vmatmul.f32.gmra.mxu0 %v1872
    %v1997 = vpop.f32.mrf.mxu0
    %v1998 = vadd.f32 %v1875, %v1997
    %1999 = vdwg.mxu0
    %2000 = vmatpush.xpose.msra.mxu0 %v1774
    %2001 = vmatpush.xpose.msra.mxu0 %v1773
    %2002 = vmatpush.xpose.msra.mxu0 %v1772
    %2003 = vmatpush.xpose.msra.mxu0 %v1771
    %2004 = vmatpush.xpose.msra.mxu0 %v1770
    %2005 = vmatpush.xpose.msra.mxu0 %v1769
    %2006 = vmatpush.xpose.msra.mxu0 %v1768
    %2007 = vmatpush.xpose.msra.mxu0 %v1767
    %2008 = vmatpush.xpose.msra.mxu0 %v1766
    %2009 = vmatpush.xpose.msra.mxu0 %v1765
    %2010 = vmatpush.xpose.msra.mxu0 %v1764
    %2011 = vmatpush.xpose.msra.mxu0 %v1763
    %2012 = vmatpush.xpose.msra.mxu0 %v1762
    %2013 = vmatpush.xpose.msra.mxu0 %v1761
    %2014 = vmatpush.xpose.msra.mxu0 %v1760
    %2015 = vmatpush.xpose.msra.mxu0 %v1759
    %2016 = vmatmul.f32.gmra.mxu0 %v1865
    %v2017 = vpop.f32.mrf.mxu0
    %v2018 = vadd.f32 %v1876, %v2017
    %2019 = vmatmul.f32.gmra.mxu0 %v1866
    %v2020 = vpop.f32.mrf.mxu0
    %v2021 = vadd.f32 %v1876, %v2020
    %2022 = vmatmul.f32.gmra.mxu0 %v1867
    %v2023 = vpop.f32.mrf.mxu0
    %v2024 = vadd.f32 %v1876, %v2023
    %2025 = vmatmul.f32.gmra.mxu0 %v1868
    %v2026 = vpop.f32.mrf.mxu0
    %v2027 = vadd.f32 %v1876, %v2026
    %2028 = vmatmul.f32.gmra.mxu0 %v1869
    %v2029 = vpop.f32.mrf.mxu0
    %v2030 = vadd.f32 %v1876, %v2029
    %2031 = vmatmul.f32.gmra.mxu0 %v1870
    %v2032 = vpop.f32.mrf.mxu0
    %v2033 = vadd.f32 %v1876, %v2032
    %2034 = vmatmul.f32.gmra.mxu0 %v1871
    %v2035 = vpop.f32.mrf.mxu0
    %v2036 = vadd.f32 %v1876, %v2035
    %2037 = vmatmul.f32.gmra.mxu0 %v1872
    %v2038 = vpop.f32.mrf.mxu0
    %v2039 = vadd.f32 %v1876, %v2038
    %2040 = vdwg.mxu0
    %2041 = vst [vmem:[#allocation4] sm:$0xff] %v1895
    %2042 = vst [vmem:[#allocation4 + $0x8] sm:$0xff] %v1936
    %2043 = vst [vmem:[#allocation4 + $0x10] sm:$0xff] %v1977
    %2044 = vst [vmem:[#allocation4 + $0x18] sm:$0xff] %v2018
    %2045 = vst [vmem:[#allocation4 + $0x20] sm:$0xff] %v1898
    %2046 = vst [vmem:[#allocation4 + $0x28] sm:$0xff] %v1939
    %2047 = vst [vmem:[#allocation4 + $0x30] sm:$0xff] %v1980
    %2048 = vst [vmem:[#allocation4 + $0x38] sm:$0xff] %v2021
    %2049 = vst [vmem:[#allocation4 + $0x40] sm:$0xff] %v1901
    %2050 = vst [vmem:[#allocation4 + $0x48] sm:$0xff] %v1942
    %2051 = vst [vmem:[#allocation4 + $0x50] sm:$0xff] %v1983
    %2052 = vst [vmem:[#allocation4 + $0x58] sm:$0xff] %v2024
    %2053 = vst [vmem:[#allocation4 + $0x60] sm:$0xff] %v1904
    %2054 = vst [vmem:[#allocation4 + $0x68] sm:$0xff] %v1945
    %2055 = vst [vmem:[#allocation4 + $0x70] sm:$0xff] %v1986
    %2056 = vst [vmem:[#allocation4 + $0x78] sm:$0xff] %v2027
    %2057 = vst [vmem:[#allocation4 + $0x80] sm:$0xff] %v1907
    %2058 = vst [vmem:[#allocation4 + $0x88] sm:$0xff] %v1948
    %2059 = vst [vmem:[#allocation4 + $0x90] sm:$0xff] %v1989
    %2060 = vst [vmem:[#allocation4 + $0x98] sm:$0xff] %v2030
    %2061 = vst [vmem:[#allocation4 + $0xa0] sm:$0xff] %v1910
    %2062 = vst [vmem:[#allocation4 + $0xa8] sm:$0xff] %v1951
    %2063 = vst [vmem:[#allocation4 + $0xb0] sm:$0xff] %v1992
    %2064 = vst [vmem:[#allocation4 + $0xb8] sm:$0xff] %v2033
    %2065 = vst [vmem:[#allocation4 + $0xc0] sm:$0xff] %v1913
    %2066 = vst [vmem:[#allocation4 + $0xc8] sm:$0xff] %v1954
    %2067 = vst [vmem:[#allocation4 + $0xd0] sm:$0xff] %v1995
    %2068 = vst [vmem:[#allocation4 + $0xd8] sm:$0xff] %v2036
    %2069 = vst [vmem:[#allocation4 + $0xe0] sm:$0xff] %v1916
    %2070 = vst [vmem:[#allocation4 + $0xe8] sm:$0xff] %v1957
    %2071 = vst [vmem:[#allocation4 + $0xf0] sm:$0xff] %v1998
    %2072 = vst [vmem:[#allocation4 + $0xf8] sm:$0xff] %v2039
    %v2073 = vld [vmem:[#allocation4] sm:$0xff]
    %v2074 = vld [vmem:[#allocation4 + $0x8] sm:$0xff]
    %v2075 = vld [vmem:[#allocation4 + $0x10] sm:$0xff]
    %v2076 = vld [vmem:[#allocation4 + $0x18] sm:$0xff]
    %v2077 = vstv %s96
    %v2078 = vsub.f32 0.0, %v2077
    %vm2079 = vcmp.gt.f32.partialorder %v2078, 0.0
    %v2080 = vsel %vm2079, 1, 0
    %v2081 = vcvt.s32.f32 %v2080
    %v2114 = vunpack.c.l.b16 %v129
    %v2115 = vunpack.c.h.b16 %v129
    %v2116 = vunpack.c.l.b16 %v130
    %v2117 = vunpack.c.h.b16 %v130
    %v2118 = vunpack.c.l.b16 %v131
    %v2119 = vunpack.c.h.b16 %v131
    %v2120 = vunpack.c.l.b16 %v132
    %v2121 = vunpack.c.h.b16 %v132
    %v2122 = vunpack.c.l.b16 %v133
    %v2123 = vunpack.c.h.b16 %v133
    %v2124 = vunpack.c.l.b16 %v134
    %v2125 = vunpack.c.h.b16 %v134
    %v2126 = vunpack.c.l.b16 %v135
    %v2127 = vunpack.c.h.b16 %v135
    %v2128 = vunpack.c.l.b16 %v136
    %v2129 = vunpack.c.h.b16 %v136
    %v2130 = vunpack.c.l.b16 %v137
    %v2131 = vunpack.c.h.b16 %v137
    %v2132 = vunpack.c.l.b16 %v138
    %v2133 = vunpack.c.h.b16 %v138
    %v2134 = vunpack.c.l.b16 %v139
    %v2135 = vunpack.c.h.b16 %v139
    %v2136 = vunpack.c.l.b16 %v140
    %v2137 = vunpack.c.h.b16 %v140
    %v2138 = vunpack.c.l.b16 %v141
    %v2139 = vunpack.c.h.b16 %v141
    %v2140 = vunpack.c.l.b16 %v142
    %v2141 = vunpack.c.h.b16 %v142
    %v2142 = vunpack.c.l.b16 %v143
    %v2143 = vunpack.c.h.b16 %v143
    %v2144 = vunpack.c.l.b16 %v144
    %v2145 = vunpack.c.h.b16 %v144
    %v2146 = vunpack.c.l.b16 %v145
    %v2147 = vunpack.c.h.b16 %v145
    %v2148 = vunpack.c.l.b16 %v146
    %v2149 = vunpack.c.h.b16 %v146
    %v2150 = vunpack.c.l.b16 %v147
    %v2151 = vunpack.c.h.b16 %v147
    %v2152 = vunpack.c.l.b16 %v148
    %v2153 = vunpack.c.h.b16 %v148
    %v2154 = vunpack.c.l.b16 %v149
    %v2155 = vunpack.c.h.b16 %v149
    %v2156 = vunpack.c.l.b16 %v150
    %v2157 = vunpack.c.h.b16 %v150
    %v2158 = vunpack.c.l.b16 %v151
    %v2159 = vunpack.c.h.b16 %v151
    %v2160 = vunpack.c.l.b16 %v152
    %v2161 = vunpack.c.h.b16 %v152
    %v2162 = vunpack.c.l.b16 %v153
    %v2163 = vunpack.c.h.b16 %v153
    %v2164 = vunpack.c.l.b16 %v154
    %v2165 = vunpack.c.h.b16 %v154
    %v2166 = vunpack.c.l.b16 %v155
    %v2167 = vunpack.c.h.b16 %v155
    %v2168 = vunpack.c.l.b16 %v156
    %v2169 = vunpack.c.h.b16 %v156
    %v2170 = vunpack.c.l.b16 %v157
    %v2171 = vunpack.c.h.b16 %v157
    %v2172 = vunpack.c.l.b16 %v158
    %v2173 = vunpack.c.h.b16 %v158
    %v2174 = vunpack.c.l.b16 %v159
    %v2175 = vunpack.c.h.b16 %v159
    %v2176 = vunpack.c.l.b16 %v160
    %v2177 = vunpack.c.h.b16 %v160
    %v2178 = vpack.c.b16 %v2118, %v2114
    %v2179 = vpack.c.b16 %v2119, %v2115
    %v2180 = vpack.c.b16 %v2120, %v2116
    %v2181 = vpack.c.b16 %v2121, %v2117
    %v2182 = vpack.c.b16 %v2126, %v2122
    %v2183 = vpack.c.b16 %v2127, %v2123
    %v2184 = vpack.c.b16 %v2128, %v2124
    %v2185 = vpack.c.b16 %v2129, %v2125
    %v2186 = vpack.c.b16 %v2134, %v2130
    %v2187 = vpack.c.b16 %v2135, %v2131
    %v2188 = vpack.c.b16 %v2136, %v2132
    %v2189 = vpack.c.b16 %v2137, %v2133
    %v2190 = vpack.c.b16 %v2142, %v2138
    %v2191 = vpack.c.b16 %v2143, %v2139
    %v2192 = vpack.c.b16 %v2144, %v2140
    %v2193 = vpack.c.b16 %v2145, %v2141
    %v2194 = vpack.c.b16 %v2150, %v2146
    %v2195 = vpack.c.b16 %v2151, %v2147
    %v2196 = vpack.c.b16 %v2152, %v2148
    %v2197 = vpack.c.b16 %v2153, %v2149
    %v2198 = vpack.c.b16 %v2158, %v2154
    %v2199 = vpack.c.b16 %v2159, %v2155
    %v2200 = vpack.c.b16 %v2160, %v2156
    %v2201 = vpack.c.b16 %v2161, %v2157
    %v2202 = vpack.c.b16 %v2166, %v2162
    %v2203 = vpack.c.b16 %v2167, %v2163
    %v2204 = vpack.c.b16 %v2168, %v2164
    %v2205 = vpack.c.b16 %v2169, %v2165
    %v2206 = vpack.c.b16 %v2174, %v2170
    %v2207 = vpack.c.b16 %v2175, %v2171
    %v2208 = vpack.c.b16 %v2176, %v2172
    %v2209 = vpack.c.b16 %v2177, %v2173
    %2242 = vmatpush.bf16.msra.mxu0 %v2206
    %2243 = vmatpush.bf16.msra.mxu0 %v2202
    %2244 = vmatpush.bf16.msra.mxu0 %v2198
    %2245 = vmatpush.bf16.msra.mxu0 %v2194
    %2246 = vmatpush.bf16.msra.mxu0 %v2190
    %2247 = vmatpush.bf16.msra.mxu0 %v2186
    %2248 = vmatpush.bf16.msra.mxu0 %v2182
    %2249 = vmatpush.bf16.msra.mxu0 %v2178
    %2250 = vmatmul.bf16.gmra.mxu0 0
    %v2251 = vpop.f32.mrf.mxu0
    %v2252 = vadd.f32 0.0, %v2251
    %v2253 = vpop.f32.mrf.mxu0
    %2254 = vdwg.mxu0
    %2255 = vmatpush.bf16.msra.mxu0 %v2207
    %2256 = vmatpush.bf16.msra.mxu0 %v2203
    %2257 = vmatpush.bf16.msra.mxu0 %v2199
    %2258 = vmatpush.bf16.msra.mxu0 %v2195
    %2259 = vmatpush.bf16.msra.mxu0 %v2191
    %2260 = vmatpush.bf16.msra.mxu0 %v2187
    %2261 = vmatpush.bf16.msra.mxu0 %v2183
    %2262 = vmatpush.bf16.msra.mxu0 %v2179
    %2263 = vmatmul.bf16.gmra.mxu0 0
    %v2264 = vpop.f32.mrf.mxu0
    %v2265 = vadd.f32 0.0, %v2264
    %v2266 = vpop.f32.mrf.mxu0
    %2267 = vdwg.mxu0
    %2268 = vmatpush.bf16.msra.mxu0 %v2208
    %2269 = vmatpush.bf16.msra.mxu0 %v2204
    %2270 = vmatpush.bf16.msra.mxu0 %v2200
    %2271 = vmatpush.bf16.msra.mxu0 %v2196
    %2272 = vmatpush.bf16.msra.mxu0 %v2192
    %2273 = vmatpush.bf16.msra.mxu0 %v2188
    %2274 = vmatpush.bf16.msra.mxu0 %v2184
    %2275 = vmatpush.bf16.msra.mxu0 %v2180
    %2276 = vmatmul.bf16.gmra.mxu0 0
    %v2277 = vpop.f32.mrf.mxu0
    %v2278 = vadd.f32 0.0, %v2277
    %v2279 = vpop.f32.mrf.mxu0
    %2280 = vdwg.mxu0
    %2281 = vmatpush.bf16.msra.mxu0 %v2209
    %2282 = vmatpush.bf16.msra.mxu0 %v2205
    %2283 = vmatpush.bf16.msra.mxu0 %v2201
    %2284 = vmatpush.bf16.msra.mxu0 %v2197
    %2285 = vmatpush.bf16.msra.mxu0 %v2193
    %2286 = vmatpush.bf16.msra.mxu0 %v2189
    %2287 = vmatpush.bf16.msra.mxu0 %v2185
    %2288 = vmatpush.bf16.msra.mxu0 %v2181
    %2289 = vmatmul.bf16.gmra.mxu0 0
    %v2290 = vpop.f32.mrf.mxu0
    %v2291 = vadd.f32 0.0, %v2290
    %v2292 = vpop.f32.mrf.mxu0
    %2293 = vdwg.mxu0
    %v2294 = vadd.f32 %v2073, %v2252
    %v2295 = vadd.f32 %v2074, %v2265
    %v2296 = vadd.f32 %v2075, %v2278
    %v2297 = vadd.f32 %v2076, %v2291
    %v2298 = vxor.u32 %v2294, 2147483648
    %v2299 = vxor.u32 %v2295, 2147483648
    %v2300 = vxor.u32 %v2296, 2147483648
    %v2301 = vmul.f32 %v2298, 1.442695
    %v2302 = vpow.pop %v2301
    %v2303 = vmul.f32 %v2299, 1.442695
    %v2304 = vpow.pop %v2303
    %v2305 = vmul.f32 %v2300, 1.442695
    %v2306 = vpow.pop %v2305
    %v2307 = vadd.f32 %v2302, 1.0
    %v2308 = vadd.f32 %v2304, 1.0
    %v2309 = vadd.f32 %v2306, 1.0
    %v2310 = vrcp.pop %v2307
    %v2311 = vmul.f32 %v2307, %v2310
    %v2312 = vsub.f32 1.0, %v2311
    %v2313 = vmul.f32 %v2310, %v2312
    %v2314 = vadd.f32 %v2310, %v2313
    %vm2315 = vweird.f32 %v2307
    %vm2316 = vweird.f32 %v2310
    %vm2317 = vmor %vm2315, %vm2316
    %v2318 = vsel %vm2317, %v2310, %v2314
    %v2319 = vand.u32 2147483647, %v2307
    %vm2320 = vcmp.eq.f32.partialorder %v2319, 8.507059e+37
    %v2321 = vand.u32 %v2307, 2147483648
    %v2322 = vor.u32 1.1754944e-38, %v2321
    %v2323 = vsel %vm2320, %v2322, %v2318
    %v2324 = vmul.f32 1.0, %v2323
    %v2325 = vrcp.pop %v2308
    %v2326 = vmul.f32 %v2308, %v2325
    %v2327 = vsub.f32 1.0, %v2326
    %v2328 = vmul.f32 %v2325, %v2327
    %v2329 = vadd.f32 %v2325, %v2328
    %vm2330 = vweird.f32 %v2308
    %vm2331 = vweird.f32 %v2325
    %vm2332 = vmor %vm2330, %vm2331
    %v2333 = vsel %vm2332, %v2325, %v2329
    %v2334 = vand.u32 2147483647, %v2308
    %vm2335 = vcmp.eq.f32.partialorder %v2334, 8.507059e+37
    %v2336 = vand.u32 %v2308, 2147483648
    %v2337 = vor.u32 1.1754944e-38, %v2336
    %v2338 = vsel %vm2335, %v2337, %v2333
    %v2339 = vmul.f32 1.0, %v2338
    %v2340 = vrcp.pop %v2309
    %v2341 = vmul.f32 %v2309, %v2340
    %v2342 = vsub.f32 1.0, %v2341
    %v2343 = vmul.f32 %v2340, %v2342
    %v2344 = vadd.f32 %v2340, %v2343
    %vm2345 = vweird.f32 %v2309
    %vm2346 = vweird.f32 %v2340
    %vm2347 = vmor %vm2345, %vm2346
    %v2348 = vsel %vm2347, %v2340, %v2344
    %v2349 = vand.u32 2147483647, %v2309
    %vm2350 = vcmp.eq.f32.partialorder %v2349, 8.507059e+37
    %v2351 = vand.u32 %v2309, 2147483648
    %v2352 = vor.u32 1.1754944e-38, %v2351
    %v2353 = vsel %vm2350, %v2352, %v2348
    %v2354 = vmul.f32 1.0, %v2353
    %v2355 = vtanh.pop %v2297
    %v2356 = vmul.f32 %v2339, 0.0
    %v2357 = vmul.f32 %v2324, %v2355
    %v2358 = vadd.f32 %v2356, %v2357
    %v2359 = vtanh.pop %v2358
    %v2360 = vmul.f32 %v2354, %v2359
    %v2361 = vmul.f32 %v2081, %v2077
    %v2362 = vsub.f32 %v2360, %v2361
    %v2363 = vadd.f32 %v2362, 0.0
    %v2364 = vld [vmem:[#allocation4 + $0x20] sm:$0xff]
    %v2365 = vld [vmem:[#allocation4 + $0x28] sm:$0xff]
    %v2366 = vld [vmem:[#allocation4 + $0x30] sm:$0xff]
    %v2367 = vld [vmem:[#allocation4 + $0x38] sm:$0xff]
    %v2368 = vsub.f32 %v2362, %v2077
    %vm2369 = vcmp.gt.f32.partialorder %v2368, 0.0
    %v2370 = vsel %vm2369, 1, 0
    %v2371 = vcvt.s32.f32 %v2370
    %v2372 = vpack.c.bf16 %v2362, %v2362
    %2373 = vmatpush.bf16.msra.mxu0 %v2206
    %2374 = vmatpush.bf16.msra.mxu0 %v2202
    %2375 = vmatpush.bf16.msra.mxu0 %v2198
    %2376 = vmatpush.bf16.msra.mxu0 %v2194
    %2377 = vmatpush.bf16.msra.mxu0 %v2190
    %2378 = vmatpush.bf16.msra.mxu0 %v2186
    %2379 = vmatpush.bf16.msra.mxu0 %v2182
    %2380 = vmatpush.bf16.msra.mxu0 %v2178
    %2381 = vmatmul.bf16.gmra.mxu0 %v2372
    %v2382 = vpop.f32.mrf.mxu0
    %v2383 = vadd.f32 0.0, %v2382
    %v2384 = vpop.f32.mrf.mxu0
    %2385 = vdwg.mxu0
    %2386 = vmatpush.bf16.msra.mxu0 %v2207
    %2387 = vmatpush.bf16.msra.mxu0 %v2203
    %2388 = vmatpush.bf16.msra.mxu0 %v2199
    %2389 = vmatpush.bf16.msra.mxu0 %v2195
    %2390 = vmatpush.bf16.msra.mxu0 %v2191
    %2391 = vmatpush.bf16.msra.mxu0 %v2187
    %2392 = vmatpush.bf16.msra.mxu0 %v2183
    %2393 = vmatpush.bf16.msra.mxu0 %v2179
    %2394 = vmatmul.bf16.gmra.mxu0 %v2372
    %v2395 = vpop.f32.mrf.mxu0
    %v2396 = vadd.f32 0.0, %v2395
    %v2397 = vpop.f32.mrf.mxu0
    %2398 = vdwg.mxu0
    %2399 = vmatpush.bf16.msra.mxu0 %v2208
    %2400 = vmatpush.bf16.msra.mxu0 %v2204
    %2401 = vmatpush.bf16.msra.mxu0 %v2200
    %2402 = vmatpush.bf16.msra.mxu0 %v2196
    %2403 = vmatpush.bf16.msra.mxu0 %v2192
    %2404 = vmatpush.bf16.msra.mxu0 %v2188
    %2405 = vmatpush.bf16.msra.mxu0 %v2184
    %2406 = vmatpush.bf16.msra.mxu0 %v2180
    %2407 = vmatmul.bf16.gmra.mxu0 %v2372
    %v2408 = vpop.f32.mrf.mxu0
    %v2409 = vadd.f32 0.0, %v2408
    %v2410 = vpop.f32.mrf.mxu0
    %2411 = vdwg.mxu0
    %2412 = vmatpush.bf16.msra.mxu0 %v2209
    %2413 = vmatpush.bf16.msra.mxu0 %v2205
    %2414 = vmatpush.bf16.msra.mxu0 %v2201
    %2415 = vmatpush.bf16.msra.mxu0 %v2197
    %2416 = vmatpush.bf16.msra.mxu0 %v2193
    %2417 = vmatpush.bf16.msra.mxu0 %v2189
    %2418 = vmatpush.bf16.msra.mxu0 %v2185
    %2419 = vmatpush.bf16.msra.mxu0 %v2181
    %2420 = vmatmul.bf16.gmra.mxu0 %v2372
    %v2421 = vpop.f32.mrf.mxu0
    %v2422 = vadd.f32 0.0, %v2421
    %v2423 = vpop.f32.mrf.mxu0
    %2424 = vdwg.mxu0
    %v2425 = vadd.f32 %v2364, %v2383
    %v2426 = vadd.f32 %v2365, %v2396
    %v2427 = vadd.f32 %v2366, %v2409
    %v2428 = vadd.f32 %v2367, %v2422
    %v2429 = vxor.u32 %v2425, 2147483648
    %v2430 = vxor.u32 %v2426, 2147483648
    %v2431 = vxor.u32 %v2427, 2147483648
    %v2432 = vmul.f32 %v2429, 1.442695
    %v2433 = vpow.pop %v2432
    %v2434 = vmul.f32 %v2430, 1.442695
    %v2435 = vpow.pop %v2434
    %v2436 = vmul.f32 %v2431, 1.442695
    %v2437 = vpow.pop %v2436
    %v2438 = vadd.f32 %v2433, 1.0
    %v2439 = vadd.f32 %v2435, 1.0
    %v2440 = vadd.f32 %v2437, 1.0
    %v2441 = vrcp.pop %v2438
    %v2442 = vmul.f32 %v2438, %v2441
    %v2443 = vsub.f32 1.0, %v2442
    %v2444 = vmul.f32 %v2441, %v2443
    %v2445 = vadd.f32 %v2441, %v2444
    %vm2446 = vweird.f32 %v2438
    %vm2447 = vweird.f32 %v2441
    %vm2448 = vmor %vm2446, %vm2447
    %v2449 = vsel %vm2448, %v2441, %v2445
    %v2450 = vand.u32 2147483647, %v2438
    %vm2451 = vcmp.eq.f32.partialorder %v2450, 8.507059e+37
    %v2452 = vand.u32 %v2438, 2147483648
    %v2453 = vor.u32 1.1754944e-38, %v2452
    %v2454 = vsel %vm2451, %v2453, %v2449
    %v2455 = vmul.f32 1.0, %v2454
    %v2456 = vrcp.pop %v2439
    %v2457 = vmul.f32 %v2439, %v2456
    %v2458 = vsub.f32 1.0, %v2457
    %v2459 = vmul.f32 %v2456, %v2458
    %v2460 = vadd.f32 %v2456, %v2459
    %vm2461 = vweird.f32 %v2439
    %vm2462 = vweird.f32 %v2456
    %vm2463 = vmor %vm2461, %vm2462
    %v2464 = vsel %vm2463, %v2456, %v2460
    %v2465 = vand.u32 2147483647, %v2439
    %vm2466 = vcmp.eq.f32.partialorder %v2465, 8.507059e+37
    %v2467 = vand.u32 %v2439, 2147483648
    %v2468 = vor.u32 1.1754944e-38, %v2467
    %v2469 = vsel %vm2466, %v2468, %v2464
    %v2470 = vmul.f32 1.0, %v2469
    %v2471 = vrcp.pop %v2440
    %v2472 = vmul.f32 %v2440, %v2471
    %v2473 = vsub.f32 1.0, %v2472
    %v2474 = vmul.f32 %v2471, %v2473
    %v2475 = vadd.f32 %v2471, %v2474
    %vm2476 = vweird.f32 %v2440
    %vm2477 = vweird.f32 %v2471
    %vm2478 = vmor %vm2476, %vm2477
    %v2479 = vsel %vm2478, %v2471, %v2475
    %v2480 = vand.u32 2147483647, %v2440
    %vm2481 = vcmp.eq.f32.partialorder %v2480, 8.507059e+37
    %v2482 = vand.u32 %v2440, 2147483648
    %v2483 = vor.u32 1.1754944e-38, %v2482
    %v2484 = vsel %vm2481, %v2483, %v2479
    %v2485 = vmul.f32 1.0, %v2484
    %v2486 = vtanh.pop %v2428
    %v2487 = vmul.f32 %v2470, %v2358
    %v2488 = vmul.f32 %v2455, %v2486
    %v2489 = vadd.f32 %v2487, %v2488
    %v2490 = vtanh.pop %v2489
    %v2491 = vmul.f32 %v2485, %v2490
    %v2492 = vmul.f32 %v2371, %v2077
    %v2493 = vsub.f32 %v2491, %v2492
    %v2494 = vadd.f32 %v2363, %v2493
    %v2495 = vld [vmem:[#allocation4 + $0x40] sm:$0xff]
    %v2496 = vld [vmem:[#allocation4 + $0x48] sm:$0xff]
    %v2497 = vld [vmem:[#allocation4 + $0x50] sm:$0xff]
    %v2498 = vld [vmem:[#allocation4 + $0x58] sm:$0xff]
    %v2499 = vsub.f32 %v2493, %v2077
    %vm2500 = vcmp.gt.f32.partialorder %v2499, 0.0
    %v2501 = vsel %vm2500, 1, 0
    %v2502 = vcvt.s32.f32 %v2501
    %v2503 = vpack.c.bf16 %v2493, %v2493
    %2504 = vmatpush.bf16.msra.mxu0 %v2206
    %2505 = vmatpush.bf16.msra.mxu0 %v2202
    %2506 = vmatpush.bf16.msra.mxu0 %v2198
    %2507 = vmatpush.bf16.msra.mxu0 %v2194
    %2508 = vmatpush.bf16.msra.mxu0 %v2190
    %2509 = vmatpush.bf16.msra.mxu0 %v2186
    %2510 = vmatpush.bf16.msra.mxu0 %v2182
    %2511 = vmatpush.bf16.msra.mxu0 %v2178
    %2512 = vmatmul.bf16.gmra.mxu0 %v2503
    %v2513 = vpop.f32.mrf.mxu0
    %v2514 = vadd.f32 0.0, %v2513
    %v2515 = vpop.f32.mrf.mxu0
    %2516 = vdwg.mxu0
    %2517 = vmatpush.bf16.msra.mxu0 %v2207
    %2518 = vmatpush.bf16.msra.mxu0 %v2203
    %2519 = vmatpush.bf16.msra.mxu0 %v2199
    %2520 = vmatpush.bf16.msra.mxu0 %v2195
    %2521 = vmatpush.bf16.msra.mxu0 %v2191
    %2522 = vmatpush.bf16.msra.mxu0 %v2187
    %2523 = vmatpush.bf16.msra.mxu0 %v2183
    %2524 = vmatpush.bf16.msra.mxu0 %v2179
    %2525 = vmatmul.bf16.gmra.mxu0 %v2503
    %v2526 = vpop.f32.mrf.mxu0
    %v2527 = vadd.f32 0.0, %v2526
    %v2528 = vpop.f32.mrf.mxu0
    %2529 = vdwg.mxu0
    %2530 = vmatpush.bf16.msra.mxu0 %v2208
    %2531 = vmatpush.bf16.msra.mxu0 %v2204
    %2532 = vmatpush.bf16.msra.mxu0 %v2200
    %2533 = vmatpush.bf16.msra.mxu0 %v2196
    %2534 = vmatpush.bf16.msra.mxu0 %v2192
    %2535 = vmatpush.bf16.msra.mxu0 %v2188
    %2536 = vmatpush.bf16.msra.mxu0 %v2184
    %2537 = vmatpush.bf16.msra.mxu0 %v2180
    %2538 = vmatmul.bf16.gmra.mxu0 %v2503
    %v2539 = vpop.f32.mrf.mxu0
    %v2540 = vadd.f32 0.0, %v2539
    %v2541 = vpop.f32.mrf.mxu0
    %2542 = vdwg.mxu0
    %2543 = vmatpush.bf16.msra.mxu0 %v2209
    %2544 = vmatpush.bf16.msra.mxu0 %v2205
    %2545 = vmatpush.bf16.msra.mxu0 %v2201
    %2546 = vmatpush.bf16.msra.mxu0 %v2197
    %2547 = vmatpush.bf16.msra.mxu0 %v2193
    %2548 = vmatpush.bf16.msra.mxu0 %v2189
    %2549 = vmatpush.bf16.msra.mxu0 %v2185
    %2550 = vmatpush.bf16.msra.mxu0 %v2181
    %2551 = vmatmul.bf16.gmra.mxu0 %v2503
    %v2552 = vpop.f32.mrf.mxu0
    %v2553 = vadd.f32 0.0, %v2552
    %v2554 = vpop.f32.mrf.mxu0
    %2555 = vdwg.mxu0
    %v2556 = vadd.f32 %v2495, %v2514
    %v2557 = vadd.f32 %v2496, %v2527
    %v2558 = vadd.f32 %v2497, %v2540
    %v2559 = vadd.f32 %v2498, %v2553
    %v2560 = vxor.u32 %v2556, 2147483648
    %v2561 = vxor.u32 %v2557, 2147483648
    %v2562 = vxor.u32 %v2558, 2147483648
    %v2563 = vmul.f32 %v2560, 1.442695
    %v2564 = vpow.pop %v2563
    %v2565 = vmul.f32 %v2561, 1.442695
    %v2566 = vpow.pop %v2565
    %v2567 = vmul.f32 %v2562, 1.442695
    %v2568 = vpow.pop %v2567
    %v2569 = vadd.f32 %v2564, 1.0
    %v2570 = vadd.f32 %v2566, 1.0
    %v2571 = vadd.f32 %v2568, 1.0
    %v2572 = vrcp.pop %v2569
    %v2573 = vmul.f32 %v2569, %v2572
    %v2574 = vsub.f32 1.0, %v2573
    %v2575 = vmul.f32 %v2572, %v2574
    %v2576 = vadd.f32 %v2572, %v2575
    %vm2577 = vweird.f32 %v2569
    %vm2578 = vweird.f32 %v2572
    %vm2579 = vmor %vm2577, %vm2578
    %v2580 = vsel %vm2579, %v2572, %v2576
    %v2581 = vand.u32 2147483647, %v2569
    %vm2582 = vcmp.eq.f32.partialorder %v2581, 8.507059e+37
    %v2583 = vand.u32 %v2569, 2147483648
    %v2584 = vor.u32 1.1754944e-38, %v2583
    %v2585 = vsel %vm2582, %v2584, %v2580
    %v2586 = vmul.f32 1.0, %v2585
    %v2587 = vrcp.pop %v2570
    %v2588 = vmul.f32 %v2570, %v2587
    %v2589 = vsub.f32 1.0, %v2588
    %v2590 = vmul.f32 %v2587, %v2589
    %v2591 = vadd.f32 %v2587, %v2590
    %vm2592 = vweird.f32 %v2570
    %vm2593 = vweird.f32 %v2587
    %vm2594 = vmor %vm2592, %vm2593
    %v2595 = vsel %vm2594, %v2587, %v2591
    %v2596 = vand.u32 2147483647, %v2570
    %vm2597 = vcmp.eq.f32.partialorder %v2596, 8.507059e+37
    %v2598 = vand.u32 %v2570, 2147483648
    %v2599 = vor.u32 1.1754944e-38, %v2598
    %v2600 = vsel %vm2597, %v2599, %v2595
    %v2601 = vmul.f32 1.0, %v2600
    %v2602 = vrcp.pop %v2571
    %v2603 = vmul.f32 %v2571, %v2602
    %v2604 = vsub.f32 1.0, %v2603
    %v2605 = vmul.f32 %v2602, %v2604
    %v2606 = vadd.f32 %v2602, %v2605
    %vm2607 = vweird.f32 %v2571
    %vm2608 = vweird.f32 %v2602
    %vm2609 = vmor %vm2607, %vm2608
    %v2610 = vsel %vm2609, %v2602, %v2606
    %v2611 = vand.u32 2147483647, %v2571
    %vm2612 = vcmp.eq.f32.partialorder %v2611, 8.507059e+37
    %v2613 = vand.u32 %v2571, 2147483648
    %v2614 = vor.u32 1.1754944e-38, %v2613
    %v2615 = vsel %vm2612, %v2614, %v2610
    %v2616 = vmul.f32 1.0, %v2615
    %v2617 = vtanh.pop %v2559
    %v2618 = vmul.f32 %v2601, %v2489
    %v2619 = vmul.f32 %v2586, %v2617
    %v2620 = vadd.f32 %v2618, %v2619
    %v2621 = vtanh.pop %v2620
    %v2622 = vmul.f32 %v2616, %v2621
    %v2623 = vmul.f32 %v2502, %v2077
    %v2624 = vsub.f32 %v2622, %v2623
    %v2625 = vadd.f32 %v2494, %v2624
    %v2626 = vld [vmem:[#allocation4 + $0x60] sm:$0xff]
    %v2627 = vld [vmem:[#allocation4 + $0x68] sm:$0xff]
    %v2628 = vld [vmem:[#allocation4 + $0x70] sm:$0xff]
    %v2629 = vld [vmem:[#allocation4 + $0x78] sm:$0xff]
    %v2630 = vsub.f32 %v2624, %v2077
    %vm2631 = vcmp.gt.f32.partialorder %v2630, 0.0
    %v2632 = vsel %vm2631, 1, 0
    %v2633 = vcvt.s32.f32 %v2632
    %v2634 = vpack.c.bf16 %v2624, %v2624
    %2635 = vmatpush.bf16.msra.mxu0 %v2206
    %2636 = vmatpush.bf16.msra.mxu0 %v2202
    %2637 = vmatpush.bf16.msra.mxu0 %v2198
    %2638 = vmatpush.bf16.msra.mxu0 %v2194
    %2639 = vmatpush.bf16.msra.mxu0 %v2190
    %2640 = vmatpush.bf16.msra.mxu0 %v2186
    %2641 = vmatpush.bf16.msra.mxu0 %v2182
    %2642 = vmatpush.bf16.msra.mxu0 %v2178
    %2643 = vmatmul.bf16.gmra.mxu0 %v2634
    %v2644 = vpop.f32.mrf.mxu0
    %v2645 = vadd.f32 0.0, %v2644
    %v2646 = vpop.f32.mrf.mxu0
    %2647 = vdwg.mxu0
    %2648 = vmatpush.bf16.msra.mxu0 %v2207
    %2649 = vmatpush.bf16.msra.mxu0 %v2203
    %2650 = vmatpush.bf16.msra.mxu0 %v2199
    %2651 = vmatpush.bf16.msra.mxu0 %v2195
    %2652 = vmatpush.bf16.msra.mxu0 %v2191
    %2653 = vmatpush.bf16.msra.mxu0 %v2187
    %2654 = vmatpush.bf16.msra.mxu0 %v2183
    %2655 = vmatpush.bf16.msra.mxu0 %v2179
    %2656 = vmatmul.bf16.gmra.mxu0 %v2634
    %v2657 = vpop.f32.mrf.mxu0
    %v2658 = vadd.f32 0.0, %v2657
    %v2659 = vpop.f32.mrf.mxu0
    %2660 = vdwg.mxu0
    %2661 = vmatpush.bf16.msra.mxu0 %v2208
    %2662 = vmatpush.bf16.msra.mxu0 %v2204
    %2663 = vmatpush.bf16.msra.mxu0 %v2200
    %2664 = vmatpush.bf16.msra.mxu0 %v2196
    %2665 = vmatpush.bf16.msra.mxu0 %v2192
    %2666 = vmatpush.bf16.msra.mxu0 %v2188
    %2667 = vmatpush.bf16.msra.mxu0 %v2184
    %2668 = vmatpush.bf16.msra.mxu0 %v2180
    %2669 = vmatmul.bf16.gmra.mxu0 %v2634
    %v2670 = vpop.f32.mrf.mxu0
    %v2671 = vadd.f32 0.0, %v2670
    %v2672 = vpop.f32.mrf.mxu0
    %2673 = vdwg.mxu0
    %2674 = vmatpush.bf16.msra.mxu0 %v2209
    %2675 = vmatpush.bf16.msra.mxu0 %v2205
    %2676 = vmatpush.bf16.msra.mxu0 %v2201
    %2677 = vmatpush.bf16.msra.mxu0 %v2197
    %2678 = vmatpush.bf16.msra.mxu0 %v2193
    %2679 = vmatpush.bf16.msra.mxu0 %v2189
    %2680 = vmatpush.bf16.msra.mxu0 %v2185
    %2681 = vmatpush.bf16.msra.mxu0 %v2181
    %2682 = vmatmul.bf16.gmra.mxu0 %v2634
    %v2683 = vpop.f32.mrf.mxu0
    %v2684 = vadd.f32 0.0, %v2683
    %v2685 = vpop.f32.mrf.mxu0
    %2686 = vdwg.mxu0
    %v2687 = vadd.f32 %v2626, %v2645
    %v2688 = vadd.f32 %v2627, %v2658
    %v2689 = vadd.f32 %v2628, %v2671
    %v2690 = vadd.f32 %v2629, %v2684
    %v2691 = vxor.u32 %v2687, 2147483648
    %v2692 = vxor.u32 %v2688, 2147483648
    %v2693 = vxor.u32 %v2689, 2147483648
    %v2694 = vmul.f32 %v2691, 1.442695
    %v2695 = vpow.pop %v2694
    %v2696 = vmul.f32 %v2692, 1.442695
    %v2697 = vpow.pop %v2696
    %v2698 = vmul.f32 %v2693, 1.442695
    %v2699 = vpow.pop %v2698
    %v2700 = vadd.f32 %v2695, 1.0
    %v2701 = vadd.f32 %v2697, 1.0
    %v2702 = vadd.f32 %v2699, 1.0
    %v2703 = vrcp.pop %v2700
    %v2704 = vmul.f32 %v2700, %v2703
    %v2705 = vsub.f32 1.0, %v2704
    %v2706 = vmul.f32 %v2703, %v2705
    %v2707 = vadd.f32 %v2703, %v2706
    %vm2708 = vweird.f32 %v2700
    %vm2709 = vweird.f32 %v2703
    %vm2710 = vmor %vm2708, %vm2709
    %v2711 = vsel %vm2710, %v2703, %v2707
    %v2712 = vand.u32 2147483647, %v2700
    %vm2713 = vcmp.eq.f32.partialorder %v2712, 8.507059e+37
    %v2714 = vand.u32 %v2700, 2147483648
    %v2715 = vor.u32 1.1754944e-38, %v2714
    %v2716 = vsel %vm2713, %v2715, %v2711
    %v2717 = vmul.f32 1.0, %v2716
    %v2718 = vrcp.pop %v2701
    %v2719 = vmul.f32 %v2701, %v2718
    %v2720 = vsub.f32 1.0, %v2719
    %v2721 = vmul.f32 %v2718, %v2720
    %v2722 = vadd.f32 %v2718, %v2721
    %vm2723 = vweird.f32 %v2701
    %vm2724 = vweird.f32 %v2718
    %vm2725 = vmor %vm2723, %vm2724
    %v2726 = vsel %vm2725, %v2718, %v2722
    %v2727 = vand.u32 2147483647, %v2701
    %vm2728 = vcmp.eq.f32.partialorder %v2727, 8.507059e+37
    %v2729 = vand.u32 %v2701, 2147483648
    %v2730 = vor.u32 1.1754944e-38, %v2729
    %v2731 = vsel %vm2728, %v2730, %v2726
    %v2732 = vmul.f32 1.0, %v2731
    %v2733 = vrcp.pop %v2702
    %v2734 = vmul.f32 %v2702, %v2733
    %v2735 = vsub.f32 1.0, %v2734
    %v2736 = vmul.f32 %v2733, %v2735
    %v2737 = vadd.f32 %v2733, %v2736
    %vm2738 = vweird.f32 %v2702
    %vm2739 = vweird.f32 %v2733
    %vm2740 = vmor %vm2738, %vm2739
    %v2741 = vsel %vm2740, %v2733, %v2737
    %v2742 = vand.u32 2147483647, %v2702
    %vm2743 = vcmp.eq.f32.partialorder %v2742, 8.507059e+37
    %v2744 = vand.u32 %v2702, 2147483648
    %v2745 = vor.u32 1.1754944e-38, %v2744
    %v2746 = vsel %vm2743, %v2745, %v2741
    %v2747 = vmul.f32 1.0, %v2746
    %v2748 = vtanh.pop %v2690
    %v2749 = vmul.f32 %v2732, %v2620
    %v2750 = vmul.f32 %v2717, %v2748
    %v2751 = vadd.f32 %v2749, %v2750
    %v2752 = vtanh.pop %v2751
    %v2753 = vmul.f32 %v2747, %v2752
    %v2754 = vmul.f32 %v2633, %v2077
    %v2755 = vsub.f32 %v2753, %v2754
    %v2756 = vadd.f32 %v2625, %v2755
    %v2757 = vld [vmem:[#allocation4 + $0x80] sm:$0xff]
    %v2758 = vld [vmem:[#allocation4 + $0x88] sm:$0xff]
    %v2759 = vld [vmem:[#allocation4 + $0x90] sm:$0xff]
    %v2760 = vld [vmem:[#allocation4 + $0x98] sm:$0xff]
    %v2761 = vsub.f32 %v2755, %v2077
    %vm2762 = vcmp.gt.f32.partialorder %v2761, 0.0
    %v2763 = vsel %vm2762, 1, 0
    %v2764 = vcvt.s32.f32 %v2763
    %v2765 = vpack.c.bf16 %v2755, %v2755
    %2766 = vmatpush.bf16.msra.mxu0 %v2206
    %2767 = vmatpush.bf16.msra.mxu0 %v2202
    %2768 = vmatpush.bf16.msra.mxu0 %v2198
    %2769 = vmatpush.bf16.msra.mxu0 %v2194
    %2770 = vmatpush.bf16.msra.mxu0 %v2190
    %2771 = vmatpush.bf16.msra.mxu0 %v2186
    %2772 = vmatpush.bf16.msra.mxu0 %v2182
    %2773 = vmatpush.bf16.msra.mxu0 %v2178
    %2774 = vmatmul.bf16.gmra.mxu0 %v2765
    %v2775 = vpop.f32.mrf.mxu0
    %v2776 = vadd.f32 0.0, %v2775
    %v2777 = vpop.f32.mrf.mxu0
    %2778 = vdwg.mxu0
    %2779 = vmatpush.bf16.msra.mxu0 %v2207
    %2780 = vmatpush.bf16.msra.mxu0 %v2203
    %2781 = vmatpush.bf16.msra.mxu0 %v2199
    %2782 = vmatpush.bf16.msra.mxu0 %v2195
    %2783 = vmatpush.bf16.msra.mxu0 %v2191
    %2784 = vmatpush.bf16.msra.mxu0 %v2187
    %2785 = vmatpush.bf16.msra.mxu0 %v2183
    %2786 = vmatpush.bf16.msra.mxu0 %v2179
    %2787 = vmatmul.bf16.gmra.mxu0 %v2765
    %v2788 = vpop.f32.mrf.mxu0
    %v2789 = vadd.f32 0.0, %v2788
    %v2790 = vpop.f32.mrf.mxu0
    %2791 = vdwg.mxu0
    %2792 = vmatpush.bf16.msra.mxu0 %v2208
    %2793 = vmatpush.bf16.msra.mxu0 %v2204
    %2794 = vmatpush.bf16.msra.mxu0 %v2200
    %2795 = vmatpush.bf16.msra.mxu0 %v2196
    %2796 = vmatpush.bf16.msra.mxu0 %v2192
    %2797 = vmatpush.bf16.msra.mxu0 %v2188
    %2798 = vmatpush.bf16.msra.mxu0 %v2184
    %2799 = vmatpush.bf16.msra.mxu0 %v2180
    %2800 = vmatmul.bf16.gmra.mxu0 %v2765
    %v2801 = vpop.f32.mrf.mxu0
    %v2802 = vadd.f32 0.0, %v2801
    %v2803 = vpop.f32.mrf.mxu0
    %2804 = vdwg.mxu0
    %2805 = vmatpush.bf16.msra.mxu0 %v2209
    %2806 = vmatpush.bf16.msra.mxu0 %v2205
    %2807 = vmatpush.bf16.msra.mxu0 %v2201
    %2808 = vmatpush.bf16.msra.mxu0 %v2197
    %2809 = vmatpush.bf16.msra.mxu0 %v2193
    %2810 = vmatpush.bf16.msra.mxu0 %v2189
    %2811 = vmatpush.bf16.msra.mxu0 %v2185
    %2812 = vmatpush.bf16.msra.mxu0 %v2181
    %2813 = vmatmul.bf16.gmra.mxu0 %v2765
    %v2814 = vpop.f32.mrf.mxu0
    %v2815 = vadd.f32 0.0, %v2814
    %v2816 = vpop.f32.mrf.mxu0
    %2817 = vdwg.mxu0
    %v2818 = vadd.f32 %v2757, %v2776
    %v2819 = vadd.f32 %v2758, %v2789
    %v2820 = vadd.f32 %v2759, %v2802
    %v2821 = vadd.f32 %v2760, %v2815
    %v2822 = vxor.u32 %v2818, 2147483648
    %v2823 = vxor.u32 %v2819, 2147483648
    %v2824 = vxor.u32 %v2820, 2147483648
    %v2825 = vmul.f32 %v2822, 1.442695
    %v2826 = vpow.pop %v2825
    %v2827 = vmul.f32 %v2823, 1.442695
    %v2828 = vpow.pop %v2827
    %v2829 = vmul.f32 %v2824, 1.442695
    %v2830 = vpow.pop %v2829
    %v2831 = vadd.f32 %v2826, 1.0
    %v2832 = vadd.f32 %v2828, 1.0
    %v2833 = vadd.f32 %v2830, 1.0
    %v2834 = vrcp.pop %v2831
    %v2835 = vmul.f32 %v2831, %v2834
    %v2836 = vsub.f32 1.0, %v2835
    %v2837 = vmul.f32 %v2834, %v2836
    %v2838 = vadd.f32 %v2834, %v2837
    %vm2839 = vweird.f32 %v2831
    %vm2840 = vweird.f32 %v2834
    %vm2841 = vmor %vm2839, %vm2840
    %v2842 = vsel %vm2841, %v2834, %v2838
    %v2843 = vand.u32 2147483647, %v2831
    %vm2844 = vcmp.eq.f32.partialorder %v2843, 8.507059e+37
    %v2845 = vand.u32 %v2831, 2147483648
    %v2846 = vor.u32 1.1754944e-38, %v2845
    %v2847 = vsel %vm2844, %v2846, %v2842
    %v2848 = vmul.f32 1.0, %v2847
    %v2849 = vrcp.pop %v2832
    %v2850 = vmul.f32 %v2832, %v2849
    %v2851 = vsub.f32 1.0, %v2850
    %v2852 = vmul.f32 %v2849, %v2851
    %v2853 = vadd.f32 %v2849, %v2852
    %vm2854 = vweird.f32 %v2832
    %vm2855 = vweird.f32 %v2849
    %vm2856 = vmor %vm2854, %vm2855
    %v2857 = vsel %vm2856, %v2849, %v2853
    %v2858 = vand.u32 2147483647, %v2832
    %vm2859 = vcmp.eq.f32.partialorder %v2858, 8.507059e+37
    %v2860 = vand.u32 %v2832, 2147483648
    %v2861 = vor.u32 1.1754944e-38, %v2860
    %v2862 = vsel %vm2859, %v2861, %v2857
    %v2863 = vmul.f32 1.0, %v2862
    %v2864 = vrcp.pop %v2833
    %v2865 = vmul.f32 %v2833, %v2864
    %v2866 = vsub.f32 1.0, %v2865
    %v2867 = vmul.f32 %v2864, %v2866
    %v2868 = vadd.f32 %v2864, %v2867
    %vm2869 = vweird.f32 %v2833
    %vm2870 = vweird.f32 %v2864
    %vm2871 = vmor %vm2869, %vm2870
    %v2872 = vsel %vm2871, %v2864, %v2868
    %v2873 = vand.u32 2147483647, %v2833
    %vm2874 = vcmp.eq.f32.partialorder %v2873, 8.507059e+37
    %v2875 = vand.u32 %v2833, 2147483648
    %v2876 = vor.u32 1.1754944e-38, %v2875
    %v2877 = vsel %vm2874, %v2876, %v2872
    %v2878 = vmul.f32 1.0, %v2877
    %v2879 = vtanh.pop %v2821
    %v2880 = vmul.f32 %v2863, %v2751
    %v2881 = vmul.f32 %v2848, %v2879
    %v2882 = vadd.f32 %v2880, %v2881
    %v2883 = vtanh.pop %v2882
    %v2884 = vmul.f32 %v2878, %v2883
    %v2885 = vmul.f32 %v2764, %v2077
    %v2886 = vsub.f32 %v2884, %v2885
    %v2887 = vadd.f32 %v2756, %v2886
    %v2888 = vld [vmem:[#allocation4 + $0xa0] sm:$0xff]
    %v2889 = vld [vmem:[#allocation4 + $0xa8] sm:$0xff]
    %v2890 = vld [vmem:[#allocation4 + $0xb0] sm:$0xff]
    %v2891 = vld [vmem:[#allocation4 + $0xb8] sm:$0xff]
    %v2892 = vsub.f32 %v2886, %v2077
    %vm2893 = vcmp.gt.f32.partialorder %v2892, 0.0
    %v2894 = vsel %vm2893, 1, 0
    %v2895 = vcvt.s32.f32 %v2894
    %v2896 = vpack.c.bf16 %v2886, %v2886
    %2897 = vmatpush.bf16.msra.mxu0 %v2206
    %2898 = vmatpush.bf16.msra.mxu0 %v2202
    %2899 = vmatpush.bf16.msra.mxu0 %v2198
    %2900 = vmatpush.bf16.msra.mxu0 %v2194
    %2901 = vmatpush.bf16.msra.mxu0 %v2190
    %2902 = vmatpush.bf16.msra.mxu0 %v2186
    %2903 = vmatpush.bf16.msra.mxu0 %v2182
    %2904 = vmatpush.bf16.msra.mxu0 %v2178
    %2905 = vmatmul.bf16.gmra.mxu0 %v2896
    %v2906 = vpop.f32.mrf.mxu0
    %v2907 = vadd.f32 0.0, %v2906
    %v2908 = vpop.f32.mrf.mxu0
    %2909 = vdwg.mxu0
    %2910 = vmatpush.bf16.msra.mxu0 %v2207
    %2911 = vmatpush.bf16.msra.mxu0 %v2203
    %2912 = vmatpush.bf16.msra.mxu0 %v2199
    %2913 = vmatpush.bf16.msra.mxu0 %v2195
    %2914 = vmatpush.bf16.msra.mxu0 %v2191
    %2915 = vmatpush.bf16.msra.mxu0 %v2187
    %2916 = vmatpush.bf16.msra.mxu0 %v2183
    %2917 = vmatpush.bf16.msra.mxu0 %v2179
    %2918 = vmatmul.bf16.gmra.mxu0 %v2896
    %v2919 = vpop.f32.mrf.mxu0
    %v2920 = vadd.f32 0.0, %v2919
    %v2921 = vpop.f32.mrf.mxu0
    %2922 = vdwg.mxu0
    %2923 = vmatpush.bf16.msra.mxu0 %v2208
    %2924 = vmatpush.bf16.msra.mxu0 %v2204
    %2925 = vmatpush.bf16.msra.mxu0 %v2200
    %2926 = vmatpush.bf16.msra.mxu0 %v2196
    %2927 = vmatpush.bf16.msra.mxu0 %v2192
    %2928 = vmatpush.bf16.msra.mxu0 %v2188
    %2929 = vmatpush.bf16.msra.mxu0 %v2184
    %2930 = vmatpush.bf16.msra.mxu0 %v2180
    %2931 = vmatmul.bf16.gmra.mxu0 %v2896
    %v2932 = vpop.f32.mrf.mxu0
    %v2933 = vadd.f32 0.0, %v2932
    %v2934 = vpop.f32.mrf.mxu0
    %2935 = vdwg.mxu0
    %2936 = vmatpush.bf16.msra.mxu0 %v2209
    %2937 = vmatpush.bf16.msra.mxu0 %v2205
    %2938 = vmatpush.bf16.msra.mxu0 %v2201
    %2939 = vmatpush.bf16.msra.mxu0 %v2197
    %2940 = vmatpush.bf16.msra.mxu0 %v2193
    %2941 = vmatpush.bf16.msra.mxu0 %v2189
    %2942 = vmatpush.bf16.msra.mxu0 %v2185
    %2943 = vmatpush.bf16.msra.mxu0 %v2181
    %2944 = vmatmul.bf16.gmra.mxu0 %v2896
    %v2945 = vpop.f32.mrf.mxu0
    %v2946 = vadd.f32 0.0, %v2945
    %v2947 = vpop.f32.mrf.mxu0
    %2948 = vdwg.mxu0
    %v2949 = vadd.f32 %v2888, %v2907
    %v2950 = vadd.f32 %v2889, %v2920
    %v2951 = vadd.f32 %v2890, %v2933
    %v2952 = vadd.f32 %v2891, %v2946
    %v2953 = vxor.u32 %v2949, 2147483648
    %v2954 = vxor.u32 %v2950, 2147483648
    %v2955 = vxor.u32 %v2951, 2147483648
    %v2956 = vmul.f32 %v2953, 1.442695
    %v2957 = vpow.pop %v2956
    %v2958 = vmul.f32 %v2954, 1.442695
    %v2959 = vpow.pop %v2958
    %v2960 = vmul.f32 %v2955, 1.442695
    %v2961 = vpow.pop %v2960
    %v2962 = vadd.f32 %v2957, 1.0
    %v2963 = vadd.f32 %v2959, 1.0
    %v2964 = vadd.f32 %v2961, 1.0
    %v2965 = vrcp.pop %v2962
    %v2966 = vmul.f32 %v2962, %v2965
    %v2967 = vsub.f32 1.0, %v2966
    %v2968 = vmul.f32 %v2965, %v2967
    %v2969 = vadd.f32 %v2965, %v2968
    %vm2970 = vweird.f32 %v2962
    %vm2971 = vweird.f32 %v2965
    %vm2972 = vmor %vm2970, %vm2971
    %v2973 = vsel %vm2972, %v2965, %v2969
    %v2974 = vand.u32 2147483647, %v2962
    %vm2975 = vcmp.eq.f32.partialorder %v2974, 8.507059e+37
    %v2976 = vand.u32 %v2962, 2147483648
    %v2977 = vor.u32 1.1754944e-38, %v2976
    %v2978 = vsel %vm2975, %v2977, %v2973
    %v2979 = vmul.f32 1.0, %v2978
    %v2980 = vrcp.pop %v2963
    %v2981 = vmul.f32 %v2963, %v2980
    %v2982 = vsub.f32 1.0, %v2981
    %v2983 = vmul.f32 %v2980, %v2982
    %v2984 = vadd.f32 %v2980, %v2983
    %vm2985 = vweird.f32 %v2963
    %vm2986 = vweird.f32 %v2980
    %vm2987 = vmor %vm2985, %vm2986
    %v2988 = vsel %vm2987, %v2980, %v2984
    %v2989 = vand.u32 2147483647, %v2963
    %vm2990 = vcmp.eq.f32.partialorder %v2989, 8.507059e+37
    %v2991 = vand.u32 %v2963, 2147483648
    %v2992 = vor.u32 1.1754944e-38, %v2991
    %v2993 = vsel %vm2990, %v2992, %v2988
    %v2994 = vmul.f32 1.0, %v2993
    %v2995 = vrcp.pop %v2964
    %v2996 = vmul.f32 %v2964, %v2995
    %v2997 = vsub.f32 1.0, %v2996
    %v2998 = vmul.f32 %v2995, %v2997
    %v2999 = vadd.f32 %v2995, %v2998
    %vm3000 = vweird.f32 %v2964
    %vm3001 = vweird.f32 %v2995
    %vm3002 = vmor %vm3000, %vm3001
    %v3003 = vsel %vm3002, %v2995, %v2999
    %v3004 = vand.u32 2147483647, %v2964
    %vm3005 = vcmp.eq.f32.partialorder %v3004, 8.507059e+37
    %v3006 = vand.u32 %v2964, 2147483648
    %v3007 = vor.u32 1.1754944e-38, %v3006
    %v3008 = vsel %vm3005, %v3007, %v3003
    %v3009 = vmul.f32 1.0, %v3008
    %v3010 = vtanh.pop %v2952
    %v3011 = vmul.f32 %v2994, %v2882
    %v3012 = vmul.f32 %v2979, %v3010
    %v3013 = vadd.f32 %v3011, %v3012
    %v3014 = vtanh.pop %v3013
    %v3015 = vmul.f32 %v3009, %v3014
    %v3016 = vmul.f32 %v2895, %v2077
    %v3017 = vsub.f32 %v3015, %v3016
    %v3018 = vadd.f32 %v2887, %v3017
    %v3019 = vld [vmem:[#allocation4 + $0xc0] sm:$0xff]
    %v3020 = vld [vmem:[#allocation4 + $0xc8] sm:$0xff]
    %v3021 = vld [vmem:[#allocation4 + $0xd0] sm:$0xff]
    %v3022 = vld [vmem:[#allocation4 + $0xd8] sm:$0xff]
    %v3023 = vsub.f32 %v3017, %v2077
    %vm3024 = vcmp.gt.f32.partialorder %v3023, 0.0
    %v3025 = vsel %vm3024, 1, 0
    %v3026 = vcvt.s32.f32 %v3025
    %v3027 = vpack.c.bf16 %v3017, %v3017
    %3028 = vmatpush.bf16.msra.mxu0 %v2206
    %3029 = vmatpush.bf16.msra.mxu0 %v2202
    %3030 = vmatpush.bf16.msra.mxu0 %v2198
    %3031 = vmatpush.bf16.msra.mxu0 %v2194
    %3032 = vmatpush.bf16.msra.mxu0 %v2190
    %3033 = vmatpush.bf16.msra.mxu0 %v2186
    %3034 = vmatpush.bf16.msra.mxu0 %v2182
    %3035 = vmatpush.bf16.msra.mxu0 %v2178
    %3036 = vmatmul.bf16.gmra.mxu0 %v3027
    %v3037 = vpop.f32.mrf.mxu0
    %v3038 = vadd.f32 0.0, %v3037
    %v3039 = vpop.f32.mrf.mxu0
    %3040 = vdwg.mxu0
    %3041 = vmatpush.bf16.msra.mxu0 %v2207
    %3042 = vmatpush.bf16.msra.mxu0 %v2203
    %3043 = vmatpush.bf16.msra.mxu0 %v2199
    %3044 = vmatpush.bf16.msra.mxu0 %v2195
    %3045 = vmatpush.bf16.msra.mxu0 %v2191
    %3046 = vmatpush.bf16.msra.mxu0 %v2187
    %3047 = vmatpush.bf16.msra.mxu0 %v2183
    %3048 = vmatpush.bf16.msra.mxu0 %v2179
    %3049 = vmatmul.bf16.gmra.mxu0 %v3027
    %v3050 = vpop.f32.mrf.mxu0
    %v3051 = vadd.f32 0.0, %v3050
    %v3052 = vpop.f32.mrf.mxu0
    %3053 = vdwg.mxu0
    %3054 = vmatpush.bf16.msra.mxu0 %v2208
    %3055 = vmatpush.bf16.msra.mxu0 %v2204
    %3056 = vmatpush.bf16.msra.mxu0 %v2200
    %3057 = vmatpush.bf16.msra.mxu0 %v2196
    %3058 = vmatpush.bf16.msra.mxu0 %v2192
    %3059 = vmatpush.bf16.msra.mxu0 %v2188
    %3060 = vmatpush.bf16.msra.mxu0 %v2184
    %3061 = vmatpush.bf16.msra.mxu0 %v2180
    %3062 = vmatmul.bf16.gmra.mxu0 %v3027
    %v3063 = vpop.f32.mrf.mxu0
    %v3064 = vadd.f32 0.0, %v3063
    %v3065 = vpop.f32.mrf.mxu0
    %3066 = vdwg.mxu0
    %3067 = vmatpush.bf16.msra.mxu0 %v2209
    %3068 = vmatpush.bf16.msra.mxu0 %v2205
    %3069 = vmatpush.bf16.msra.mxu0 %v2201
    %3070 = vmatpush.bf16.msra.mxu0 %v2197
    %3071 = vmatpush.bf16.msra.mxu0 %v2193
    %3072 = vmatpush.bf16.msra.mxu0 %v2189
    %3073 = vmatpush.bf16.msra.mxu0 %v2185
    %3074 = vmatpush.bf16.msra.mxu0 %v2181
    %3075 = vmatmul.bf16.gmra.mxu0 %v3027
    %v3076 = vpop.f32.mrf.mxu0
    %v3077 = vadd.f32 0.0, %v3076
    %v3078 = vpop.f32.mrf.mxu0
    %3079 = vdwg.mxu0
    %v3080 = vadd.f32 %v3019, %v3038
    %v3081 = vadd.f32 %v3020, %v3051
    %v3082 = vadd.f32 %v3021, %v3064
    %v3083 = vadd.f32 %v3022, %v3077
    %v3084 = vxor.u32 %v3080, 2147483648
    %v3085 = vxor.u32 %v3081, 2147483648
    %v3086 = vxor.u32 %v3082, 2147483648
    %v3087 = vmul.f32 %v3084, 1.442695
    %v3088 = vpow.pop %v3087
    %v3089 = vmul.f32 %v3085, 1.442695
    %v3090 = vpow.pop %v3089
    %v3091 = vmul.f32 %v3086, 1.442695
    %v3092 = vpow.pop %v3091
    %v3093 = vadd.f32 %v3088, 1.0
    %v3094 = vadd.f32 %v3090, 1.0
    %v3095 = vadd.f32 %v3092, 1.0
    %v3096 = vrcp.pop %v3093
    %v3097 = vmul.f32 %v3093, %v3096
    %v3098 = vsub.f32 1.0, %v3097
    %v3099 = vmul.f32 %v3096, %v3098
    %v3100 = vadd.f32 %v3096, %v3099
    %vm3101 = vweird.f32 %v3093
    %vm3102 = vweird.f32 %v3096
    %vm3103 = vmor %vm3101, %vm3102
    %v3104 = vsel %vm3103, %v3096, %v3100
    %v3105 = vand.u32 2147483647, %v3093
    %vm3106 = vcmp.eq.f32.partialorder %v3105, 8.507059e+37
    %v3107 = vand.u32 %v3093, 2147483648
    %v3108 = vor.u32 1.1754944e-38, %v3107
    %v3109 = vsel %vm3106, %v3108, %v3104
    %v3110 = vmul.f32 1.0, %v3109
    %v3111 = vrcp.pop %v3094
    %v3112 = vmul.f32 %v3094, %v3111
    %v3113 = vsub.f32 1.0, %v3112
    %v3114 = vmul.f32 %v3111, %v3113
    %v3115 = vadd.f32 %v3111, %v3114
    %vm3116 = vweird.f32 %v3094
    %vm3117 = vweird.f32 %v3111
    %vm3118 = vmor %vm3116, %vm3117
    %v3119 = vsel %vm3118, %v3111, %v3115
    %v3120 = vand.u32 2147483647, %v3094
    %vm3121 = vcmp.eq.f32.partialorder %v3120, 8.507059e+37
    %v3122 = vand.u32 %v3094, 2147483648
    %v3123 = vor.u32 1.1754944e-38, %v3122
    %v3124 = vsel %vm3121, %v3123, %v3119
    %v3125 = vmul.f32 1.0, %v3124
    %v3126 = vrcp.pop %v3095
    %v3127 = vmul.f32 %v3095, %v3126
    %v3128 = vsub.f32 1.0, %v3127
    %v3129 = vmul.f32 %v3126, %v3128
    %v3130 = vadd.f32 %v3126, %v3129
    %vm3131 = vweird.f32 %v3095
    %vm3132 = vweird.f32 %v3126
    %vm3133 = vmor %vm3131, %vm3132
    %v3134 = vsel %vm3133, %v3126, %v3130
    %v3135 = vand.u32 2147483647, %v3095
    %vm3136 = vcmp.eq.f32.partialorder %v3135, 8.507059e+37
    %v3137 = vand.u32 %v3095, 2147483648
    %v3138 = vor.u32 1.1754944e-38, %v3137
    %v3139 = vsel %vm3136, %v3138, %v3134
    %v3140 = vmul.f32 1.0, %v3139
    %v3141 = vtanh.pop %v3083
    %v3142 = vmul.f32 %v3125, %v3013
    %v3143 = vmul.f32 %v3110, %v3141
    %v3144 = vadd.f32 %v3142, %v3143
    %v3145 = vtanh.pop %v3144
    %v3146 = vmul.f32 %v3140, %v3145
    %v3147 = vmul.f32 %v3026, %v2077
    %v3148 = vsub.f32 %v3146, %v3147
    %v3149 = vadd.f32 %v3018, %v3148
    %v3150 = vld [vmem:[#allocation4 + $0xe0] sm:$0xff]
    %v3151 = vld [vmem:[#allocation4 + $0xe8] sm:$0xff]
    %v3152 = vld [vmem:[#allocation4 + $0xf0] sm:$0xff]
    %v3153 = vld [vmem:[#allocation4 + $0xf8] sm:$0xff]
    %v3154 = vsub.f32 %v3148, %v2077
    %vm3155 = vcmp.gt.f32.partialorder %v3154, 0.0
    %v3156 = vsel %vm3155, 1, 0
    %v3157 = vcvt.s32.f32 %v3156
    %v3158 = vpack.c.bf16 %v3148, %v3148
    %3159 = vmatpush.bf16.msra.mxu0 %v2206
    %3160 = vmatpush.bf16.msra.mxu0 %v2202
    %3161 = vmatpush.bf16.msra.mxu0 %v2198
    %3162 = vmatpush.bf16.msra.mxu0 %v2194
    %3163 = vmatpush.bf16.msra.mxu0 %v2190
    %3164 = vmatpush.bf16.msra.mxu0 %v2186
    %3165 = vmatpush.bf16.msra.mxu0 %v2182
    %3166 = vmatpush.bf16.msra.mxu0 %v2178
    %3167 = vmatmul.bf16.gmra.mxu0 %v3158
    %v3168 = vpop.f32.mrf.mxu0
    %v3169 = vadd.f32 0.0, %v3168
    %v3170 = vpop.f32.mrf.mxu0
    %3171 = vdwg.mxu0
    %3172 = vmatpush.bf16.msra.mxu0 %v2207
    %3173 = vmatpush.bf16.msra.mxu0 %v2203
    %3174 = vmatpush.bf16.msra.mxu0 %v2199
    %3175 = vmatpush.bf16.msra.mxu0 %v2195
    %3176 = vmatpush.bf16.msra.mxu0 %v2191
    %3177 = vmatpush.bf16.msra.mxu0 %v2187
    %3178 = vmatpush.bf16.msra.mxu0 %v2183
    %3179 = vmatpush.bf16.msra.mxu0 %v2179
    %3180 = vmatmul.bf16.gmra.mxu0 %v3158
    %v3181 = vpop.f32.mrf.mxu0
    %v3182 = vadd.f32 0.0, %v3181
    %v3183 = vpop.f32.mrf.mxu0
    %3184 = vdwg.mxu0
    %3185 = vmatpush.bf16.msra.mxu0 %v2208
    %3186 = vmatpush.bf16.msra.mxu0 %v2204
    %3187 = vmatpush.bf16.msra.mxu0 %v2200
    %3188 = vmatpush.bf16.msra.mxu0 %v2196
    %3189 = vmatpush.bf16.msra.mxu0 %v2192
    %3190 = vmatpush.bf16.msra.mxu0 %v2188
    %3191 = vmatpush.bf16.msra.mxu0 %v2184
    %3192 = vmatpush.bf16.msra.mxu0 %v2180
    %3193 = vmatmul.bf16.gmra.mxu0 %v3158
    %v3194 = vpop.f32.mrf.mxu0
    %v3195 = vadd.f32 0.0, %v3194
    %v3196 = vpop.f32.mrf.mxu0
    %3197 = vdwg.mxu0
    %3198 = vmatpush.bf16.msra.mxu0 %v2209
    %3199 = vmatpush.bf16.msra.mxu0 %v2205
    %3200 = vmatpush.bf16.msra.mxu0 %v2201
    %3201 = vmatpush.bf16.msra.mxu0 %v2197
    %3202 = vmatpush.bf16.msra.mxu0 %v2193
    %3203 = vmatpush.bf16.msra.mxu0 %v2189
    %3204 = vmatpush.bf16.msra.mxu0 %v2185
    %3205 = vmatpush.bf16.msra.mxu0 %v2181
    %3206 = vmatmul.bf16.gmra.mxu0 %v3158
    %v3207 = vpop.f32.mrf.mxu0
    %v3208 = vadd.f32 0.0, %v3207
    %v3209 = vpop.f32.mrf.mxu0
    %3210 = vdwg.mxu0
    %v3211 = vadd.f32 %v3150, %v3169
    %v3212 = vadd.f32 %v3151, %v3182
    %v3213 = vadd.f32 %v3152, %v3195
    %v3214 = vadd.f32 %v3153, %v3208
    %v3215 = vxor.u32 %v3211, 2147483648
    %v3216 = vxor.u32 %v3212, 2147483648
    %v3217 = vxor.u32 %v3213, 2147483648
    %v3218 = vmul.f32 %v3215, 1.442695
    %v3219 = vpow.pop %v3218
    %v3220 = vmul.f32 %v3216, 1.442695
    %v3221 = vpow.pop %v3220
    %v3222 = vmul.f32 %v3217, 1.442695
    %v3223 = vpow.pop %v3222
    %v3224 = vadd.f32 %v3219, 1.0
    %v3225 = vadd.f32 %v3221, 1.0
    %v3226 = vadd.f32 %v3223, 1.0
    %v3227 = vrcp.pop %v3224
    %v3228 = vmul.f32 %v3224, %v3227
    %v3229 = vsub.f32 1.0, %v3228
    %v3230 = vmul.f32 %v3227, %v3229
    %v3231 = vadd.f32 %v3227, %v3230
    %vm3232 = vweird.f32 %v3224
    %vm3233 = vweird.f32 %v3227
    %vm3234 = vmor %vm3232, %vm3233
    %v3235 = vsel %vm3234, %v3227, %v3231
    %v3236 = vand.u32 2147483647, %v3224
    %vm3237 = vcmp.eq.f32.partialorder %v3236, 8.507059e+37
    %v3238 = vand.u32 %v3224, 2147483648
    %v3239 = vor.u32 1.1754944e-38, %v3238
    %v3240 = vsel %vm3237, %v3239, %v3235
    %v3241 = vmul.f32 1.0, %v3240
    %v3242 = vrcp.pop %v3225
    %v3243 = vmul.f32 %v3225, %v3242
    %v3244 = vsub.f32 1.0, %v3243
    %v3245 = vmul.f32 %v3242, %v3244
    %v3246 = vadd.f32 %v3242, %v3245
    %vm3247 = vweird.f32 %v3225
    %vm3248 = vweird.f32 %v3242
    %vm3249 = vmor %vm3247, %vm3248
    %v3250 = vsel %vm3249, %v3242, %v3246
    %v3251 = vand.u32 2147483647, %v3225
    %vm3252 = vcmp.eq.f32.partialorder %v3251, 8.507059e+37
    %v3253 = vand.u32 %v3225, 2147483648
    %v3254 = vor.u32 1.1754944e-38, %v3253
    %v3255 = vsel %vm3252, %v3254, %v3250
    %v3256 = vmul.f32 1.0, %v3255
    %v3257 = vrcp.pop %v3226
    %v3258 = vmul.f32 %v3226, %v3257
    %v3259 = vsub.f32 1.0, %v3258
    %v3260 = vmul.f32 %v3257, %v3259
    %v3261 = vadd.f32 %v3257, %v3260
    %vm3262 = vweird.f32 %v3226
    %vm3263 = vweird.f32 %v3257
    %vm3264 = vmor %vm3262, %vm3263
    %v3265 = vsel %vm3264, %v3257, %v3261
    %v3266 = vand.u32 2147483647, %v3226
    %vm3267 = vcmp.eq.f32.partialorder %v3266, 8.507059e+37
    %v3268 = vand.u32 %v3226, 2147483648
    %v3269 = vor.u32 1.1754944e-38, %v3268
    %v3270 = vsel %vm3267, %v3269, %v3265
    %v3271 = vmul.f32 1.0, %v3270
    %v3272 = vtanh.pop %v3214
    %v3273 = vmul.f32 %v3256, %v3144
    %v3274 = vmul.f32 %v3241, %v3272
    %v3275 = vadd.f32 %v3273, %v3274
    %v3276 = vtanh.pop %v3275
    %v3277 = vmul.f32 %v3271, %v3276
    %v3278 = vmul.f32 %v3157, %v2077
    %v3279 = vsub.f32 %v3277, %v3278
    %v3280 = vadd.f32 %v3149, %v3279
    %v3281 = vmul.f32 %v3280, 0.125
    %v3282 = vld [vmem:[%s11] sm:$0xff]
    %v3283 = vld [vmem:[%s11 + $0x8] sm:$0xff]
    %v3284 = vld [vmem:[%s11 + $0x10] sm:$0xff]
    %v3285 = vld [vmem:[%s11 + $0x18] sm:$0xff]
    %v3286 = vld [vmem:[%s11 + $0x20] sm:$0xff]
    %v3287 = vld [vmem:[%s11 + $0x28] sm:$0xff]
    %v3288 = vld [vmem:[%s11 + $0x30] sm:$0xff]
    %v3289 = vld [vmem:[%s11 + $0x38] sm:$0xff]
    %v3290 = vld [vmem:[%s11 + $0x40] sm:$0xff]
    %v3291 = vld [vmem:[%s11 + $0x48] sm:$0xff]
    %v3292 = vld [vmem:[%s11 + $0x50] sm:$0xff]
    %v3293 = vld [vmem:[%s11 + $0x58] sm:$0xff]
    %v3294 = vld [vmem:[%s11 + $0x60] sm:$0xff]
    %v3295 = vld [vmem:[%s11 + $0x68] sm:$0xff]
    %v3296 = vld [vmem:[%s11 + $0x70] sm:$0xff]
    %v3297 = vld [vmem:[%s11 + $0x78] sm:$0xff]
    %v3298 = vld [vmem:[%s12] sm:$0x1]
    %v3300 = vperm.slane %v3298, 0
    %3302 = vmatpush.msra.mxu0 %v3297
    %3303 = vmatpush.msra.mxu0 %v3296
    %3304 = vmatpush.msra.mxu0 %v3295
    %3305 = vmatpush.msra.mxu0 %v3294
    %3306 = vmatpush.msra.mxu0 %v3293
    %3307 = vmatpush.msra.mxu0 %v3292
    %3308 = vmatpush.msra.mxu0 %v3291
    %3309 = vmatpush.msra.mxu0 %v3290
    %3310 = vmatpush.msra.mxu0 %v3289
    %3311 = vmatpush.msra.mxu0 %v3288
    %3312 = vmatpush.msra.mxu0 %v3287
    %3313 = vmatpush.msra.mxu0 %v3286
    %3314 = vmatpush.msra.mxu0 %v3285
    %3315 = vmatpush.msra.mxu0 %v3284
    %3316 = vmatpush.msra.mxu0 %v3283
    %3317 = vmatpush.msra.mxu0 %v3282
    %3318 = vmatmul.f32.gmra.mxu0 %v3281
    %v3319 = vpop.f32.mrf.mxu0
    %v3320 = vadd.f32 %v3300, %v3319
    %3321 = vdwg.mxu0
    %vm3322 = vcmask 64512
    %3323 = vst.msk [vmem:[#allocation13] sm:$0xff] %vm3322, %v3320
    // Predicated region
    $region66: #{tpu_custom_call.1} parent=1 // pred_check
      _
    $region67: #{tpu_custom_call.1} parent=1 // pred_check_branch
      %3325 = sbr.rel (0) target = $region69
    $region68: #{tpu_custom_call.1} parent=1 // pred_region
      %3327 = vsyncadd [#allocation9], 0
      %s3329 = sshll.u32 [#allocation13], 4
      %s3330 = int_to_ptr.vmem [resolvable:$true] %s3329
      %s3331 = sshll.u32 %s13, 4
      %s3332 = int_to_ptr.hbm [resolvable:$true] %s3331
      %3334 = dma.vmem_to_hbm [thread:$0]  %s3330, 128, %s3332, [#allocation9]
    $region69: #{tpu_custom_call.1} parent=1 // pred_fallthru
      _
    // Predicated region
    $region70: #{tpu_custom_call.1} parent=1 // pred_check
      _
    $region71: #{tpu_custom_call.1} parent=1 // pred_check_branch
      %3336 = sbr.rel (0) target = $region73
    $region72: #{tpu_custom_call.1} parent=1 // pred_region
      %3338 = dma.done [#allocation9], 128
    $region73: #{tpu_custom_call.1} parent=1 // pred_fallthru
      _
    %3339 = vsyncpa [#allocation8], 1
    %3340 = vsyncpa [#allocation11], 1
    %3341 = vsyncpa [#allocation9], 1

</llo_original>
